<compile_context>
chip_gen: v7x
topology: tpu7x:2x2x1
jax: 0.10.0
libtpu: 0.0.40
codegen_flags: <defaults>
</compile_context>

<pallas_src>
import functools
import math

import jax
import jax.numpy as jnp
from jax.experimental import pallas as pl
from jax.experimental.pallas import tpu as pltpu


def _round_up(x, m):
    return ((x + m - 1) // m) * m


# ---------------------------------------------------------------------------
# Fused SPP kernel (per batch element)
# ---------------------------------------------------------------------------
def _make_spp_kernel(H, W, Cin, Cmid_p, Cout_p, k):
    p = k // 2
    Hp = H + 2 * p                    # padded height
    Wp = _round_up(W + 2 * p, 8)      # padded width, sublane-aligned (extra cols stay -inf)

    def silu(y):
        # y * sigmoid(y); reciprocal on the EUP (approx) frees the VALU slot.
        return y * pl.reciprocal(1.0 + jnp.exp(-y), approx=True)

    def pool(pad_ref):
        # Separable k x k max, stride 1, on the -inf padded VMEM buffer.
        # Vertical pass: leading-axis slices (alignment-free).
        vm = pad_ref[0:H, :, :]
        for dy in range(1, k):
            vm = jnp.maximum(vm, pad_ref[dy:dy + H, :, :])
        # Horizontal pass: small sublane shifts on the reduced buffer.
        out = vm[:, 0:W, :]
        for dx in range(1, k):
            out = jnp.maximum(out, vm[:, dx:dx + W, :])
        return out                                        # (H, W, Cmid_p)

    def kernel(x_ref, w1_ref, b1_ref, w2_ref, b2_ref, o_ref, pad_ref, acc_ref):
        # ---- conv1 (1x1, BN folded) + SiLU:  (H*W, Cin) @ (Cin, Cmid_p)
        xm = x_ref[0]                                     # (H*W, Cin)
        y = jnp.dot(xm, w1_ref[...], preferred_element_type=jnp.float32)
        t = silu(y + b1_ref[...])                         # (H*W, Cmid_p)

        # ---- conv2 partial matmul #0 (the "x" chunk) into the VMEM accumulator
        acc_ref[...] = jnp.dot(t, w2_ref[0], preferred_element_type=jnp.float32)

        # ---- in-kernel -inf padding; borders written once, center per stage
        pad_ref[...] = jnp.full((Hp, Wp, Cmid_p), -jnp.inf, jnp.float32)
        pad_ref[p:p + H, p:p + W, :] = t.reshape(H, W, Cmid_p)

        # ---- three chained pools, each feeding one more partial conv2 matmul
        for j in range(1, 4):
            yj = pool(pad_ref)                            # (H, W, Cmid_p)
            if j < 3:
                pad_ref[p:p + H, p:p + W, :] = yj         # input of next pool
            acc_ref[...] += jnp.dot(yj.reshape(H * W, Cmid_p), w2_ref[j],
                                    preferred_element_type=jnp.float32)

        # ---- conv2 bias + SiLU, lane-dense (multiple-of-128) store
        z = acc_ref[...] + b2_ref[...]
        o_ref[0] = silu(z)                                # (H*W, Cout_p)

    return kernel, Hp, Wp


# ---------------------------------------------------------------------------
# Wrapper (layout glue + channel padding to 128 lanes)
# ---------------------------------------------------------------------------
def qbwspp_forward(x_nchw, params, k=5):
    N, Cin, H, W = x_nchw.shape
    w1, b1 = params["conv1"]          # (Cin, mid), (1, mid)
    w2, b2 = params["conv2"]          # (4*mid, out_ch), (1, out_ch)
    mid = w1.shape[1]
    out_ch = w2.shape[1]
    Cmid_p = _round_up(mid, 128)
    Cout_p = _round_up(out_ch, 128)

    # Zero-pad channel dims to 128-lane multiples (exact: padded lanes stay 0).
    w1p = jnp.zeros((Cin, Cmid_p), jnp.float32).at[:, :mid].set(w1)
    b1p = jnp.zeros((1, Cmid_p), jnp.float32).at[:, :mid].set(b1)
    w2c = w2.reshape(4, mid, out_ch)                      # concat order: x,y1,y2,y3
    w2p = jnp.zeros((4, Cmid_p, Cout_p), jnp.float32).at[:, :mid, :out_ch].set(w2c)
    b2p = jnp.zeros((1, Cout_p), jnp.float32).at[:, :out_ch].set(b2)

    # NCHW -> NHWC -> (N, H*W, Cin): channels ride the lanes, rows the sublanes.
    x_rows = jnp.transpose(x_nchw, (0, 2, 3, 1)).reshape(N, H * W, Cin)

    kernel, Hp, Wp = _make_spp_kernel(H, W, Cin, Cmid_p, Cout_p, k)

    out_flat = pl.pallas_call(
        kernel,
        out_shape=jax.ShapeDtypeStruct((N, H * W, Cout_p), jnp.float32),
        grid=(N,),
        in_specs=[
            pl.BlockSpec((1, H * W, Cin), lambda n: (n, 0, 0)),        # x (per image)
            pl.BlockSpec((Cin, Cmid_p), lambda n: (0, 0)),             # w1 (resident)
            pl.BlockSpec((1, Cmid_p), lambda n: (0, 0)),               # b1
            pl.BlockSpec((4, Cmid_p, Cout_p), lambda n: (0, 0, 0)),    # w2 chunks
            pl.BlockSpec((1, Cout_p), lambda n: (0, 0)),               # b2
        ],
        out_specs=pl.BlockSpec((1, H * W, Cout_p), lambda n: (n, 0, 0)),
        scratch_shapes=[
            pltpu.VMEM((Hp, Wp, Cmid_p), jnp.float32),   # -inf padded pool buffer
            pltpu.VMEM((H * W, Cout_p), jnp.float32),    # conv2 accumulator
        ],
        compiler_params=pltpu.CompilerParams(
            dimension_semantics=("parallel",),           # v7x: 2 TCs split batch
            vmem_limit_bytes=32 * 1024 * 1024),
    )(x_rows, w1p, b1p, w2p, b2p)

    out = out_flat[:, :, :out_ch].reshape(N, H, W, out_ch)
    return jnp.transpose(out, (0, 3, 1, 2))              # NHWC -> NCHW


# ---------------------------------------------------------------------------
# Parameter init (deterministic, BN folded into 1x1 conv weight + bias)
# ---------------------------------------------------------------------------
def init_qbwconv_params(key, in_ch, out_ch, eps=1e-5):
    k1, k2, k3, k4, k5 = jax.random.split(key, 5)
    w = jax.random.normal(k1, (out_ch, in_ch, 1, 1), jnp.float32) / math.sqrt(in_ch)
    gamma = 1.0 + 0.1 * jax.random.normal(k2, (out_ch,), jnp.float32)
    beta = 0.1 * jax.random.normal(k3, (out_ch,), jnp.float32)
    mean = 0.1 * jax.random.normal(k4, (out_ch,), jnp.float32)
    var = jnp.abs(jax.random.normal(k5, (out_ch,), jnp.float32)) + 0.5
    scale = gamma / jnp.sqrt(var + eps)
    w_eff = (w.reshape(out_ch, in_ch) * scale[:, None]).T      # (in_ch, out_ch)
    b_eff = (beta - mean * scale).reshape(1, out_ch)
    return w_eff.astype(jnp.float32), b_eff.astype(jnp.float32)


def init_qbwspp_params(key, in_ch, out_ch):
    k1, k2 = jax.random.split(key)
    mid = in_ch // 2
    return {
        "conv1": init_qbwconv_params(k1, in_ch, mid),
        "conv2": init_qbwconv_params(k2, mid * 4, out_ch),
    }


# ---------------------------------------------------------------------------
# Pure-JAX reference (mirrors torch forward) for a sanity check
# ---------------------------------------------------------------------------
def qbwspp_reference(x_nchw, params, k=5):
    w1, b1 = params["conv1"]
    w2, b2 = params["conv2"]
    x = jnp.transpose(x_nchw, (0, 2, 3, 1))

    def cbs(v, w, b):
        y = jnp.einsum("nhwc,cd->nhwd", v, w,
                       precision=jax.lax.Precision.HIGHEST) + b
        return y * jax.nn.sigmoid(y)

    def pool(v):
        pd = k // 2
        return jax.lax.reduce_window(
            v, -jnp.inf, jax.lax.max, (1, k, k, 1), (1, 1, 1, 1),
            [(0, 0), (pd, pd), (pd, pd), (0, 0)])

    t = cbs(x, w1, b1)
    y1 = pool(t)
    y2 = pool(y1)
    y3 = pool(y2)
    out = cbs(jnp.concatenate([t, y1, y2, y3], axis=-1), w2, b2)
    return jnp.transpose(out, (0, 3, 1, 2))


if __name__ == "__main__":
    in_ch, out_ch, k = 4, 8, 5
    N, H, W = 2, 16, 16

    key = jax.random.PRNGKey(0)
    kx, kp = jax.random.split(key)
    x = jax.random.normal(kx, (N, in_ch, H, W), jnp.float32)
    params = init_qbwspp_params(kp, in_ch, out_ch)

    fwd = jax.jit(functools.partial(qbwspp_forward, k=k))
    out = jax.block_until_ready(fwd(x, params))

    assert out.shape == (N, out_ch, H, W), out.shape
    assert bool(jnp.all(jnp.isfinite(out)))

    # Loose tolerance absorbs the EUP approx-reciprocal used in SiLU.
    ref = qbwspp_reference(x, params, k=k)
    assert jnp.allclose(out, ref, atol=5e-2, rtol=5e-2), \
        float(jnp.max(jnp.abs(out - ref)))

    print("KERNEL_OK")
</pallas_src>

<mosaic_0001>
module attributes {stable_mosaic.version = 11 : i64} {
  func.func @kernel(%arg0: i32, %arg1: memref<1x256x4xf32, #tpu.memory_space<vmem>>, %arg2: memref<4x128xf32, #tpu.memory_space<vmem>>, %arg3: memref<1x128xf32, #tpu.memory_space<vmem>>, %arg4: memref<4x128x128xf32, #tpu.memory_space<vmem>>, %arg5: memref<1x128xf32, #tpu.memory_space<vmem>>, %arg6: memref<1x256x128xf32, #tpu.memory_space<vmem>>, %arg7: memref<20x24x128xf32, #tpu.memory_space<vmem>>, %arg8: memref<256x128xf32, #tpu.memory_space<vmem>>) attributes {dimension_semantics = [#tpu.dimension_semantics<parallel>], iteration_bounds = array<i64: 2>, scalar_prefetch = 0 : i64, scratch_operands = 2 : i64, tpu.core_type = #tpu.core_type<tc>, window_params = [{transform_indices = @transform_0, window_bounds = array<i64: 1, 256, 4>}, {pipeline_mode = #tpu.pipeline_mode<synchronous>, transform_indices = @transform_1, window_bounds = array<i64: 4, 128>}, {pipeline_mode = #tpu.pipeline_mode<synchronous>, transform_indices = @transform_2, window_bounds = array<i64: 1, 128>}, {pipeline_mode = #tpu.pipeline_mode<synchronous>, transform_indices = @transform_3, window_bounds = array<i64: 4, 128, 128>}, {pipeline_mode = #tpu.pipeline_mode<synchronous>, transform_indices = @transform_4, window_bounds = array<i64: 1, 128>}, {transform_indices = @transform_5, window_bounds = array<i64: 1, 256, 128>}]} {
    %c0 = arith.constant 0 : index
    %c0_0 = arith.constant 0 : index
    %c0_1 = arith.constant 0 : index
    %0 = vector.load %arg1[%c0, %c0_0, %c0_1] : memref<1x256x4xf32, #tpu.memory_space<vmem>>, vector<1x256x4xf32>
    %1 = vector.shape_cast %0 : vector<1x256x4xf32> to vector<256x4xf32>
    %c0_2 = arith.constant 0 : index
    %c0_3 = arith.constant 0 : index
    %2 = vector.load %arg2[%c0_2, %c0_3] : memref<4x128xf32, #tpu.memory_space<vmem>>, vector<4x128xf32>
    %cst = arith.constant dense<0.000000e+00> : vector<256x128xf32>
    %3 = tpu.matmul %1, %2, %cst {dimension_numbers = #tpu.dot_dimension_numbers<[1], [0], [0], [1], [0, 0, 1, 1], [], []>} : vector<256x4xf32>, vector<4x128xf32>, vector<256x128xf32> -> vector<256x128xf32>
    %c0_4 = arith.constant 0 : index
    %c0_5 = arith.constant 0 : index
    %4 = vector.load %arg3[%c0_4, %c0_5] : memref<1x128xf32, #tpu.memory_space<vmem>>, vector<1x128xf32>
    %5 = vector.broadcast %4 : vector<1x128xf32> to vector<256x128xf32>
    %6 = arith.addf %3, %5 : vector<256x128xf32>
    %cst_6 = arith.constant 0.000000e+00 : f32
    %7 = vector.broadcast %cst_6 : f32 to vector<256x128xf32>
    %8 = arith.subf %7, %6 : vector<256x128xf32>
    %9 = math.exp %8 : vector<256x128xf32>
    %cst_7 = arith.constant 1.000000e+00 : f32
    %10 = vector.broadcast %cst_7 : f32 to vector<256x128xf32>
    %11 = arith.addf %10, %9 : vector<256x128xf32>
    %12 = tpu.reciprocal %11 {approx = true} : vector<256x128xf32> -> vector<256x128xf32>
    %13 = arith.mulf %6, %12 : vector<256x128xf32>
    %c0_8 = arith.constant 0 : index
    %c0_9 = arith.constant 0 : index
    %c0_10 = arith.constant 0 : index
    %14 = vector.load %arg4[%c0_8, %c0_9, %c0_10] : memref<4x128x128xf32, #tpu.memory_space<vmem>>, vector<1x128x128xf32>
    %15 = vector.shape_cast %14 : vector<1x128x128xf32> to vector<128x128xf32>
    %cst_11 = arith.constant dense<0.000000e+00> : vector<256x128xf32>
    %16 = tpu.matmul %13, %15, %cst_11 {dimension_numbers = #tpu.dot_dimension_numbers<[1], [0], [0], [1], [0, 0, 1, 1], [], []>} : vector<256x128xf32>, vector<128x128xf32>, vector<256x128xf32> -> vector<256x128xf32>
    %c0_12 = arith.constant 0 : index
    %c0_13 = arith.constant 0 : index
    %17 = vector.load %arg8[%c0_12, %c0_13] : memref<256x128xf32, #tpu.memory_space<vmem>>, vector<256x128xf32>
    tpu.vector_store %arg8[%c0_12, %c0_13], %16 {strides = array<i32>} : memref<256x128xf32, #tpu.memory_space<vmem>>, vector<256x128xf32>,
    %cst_14 = arith.constant 0xFF800000 : f32
    %18 = vector.broadcast %cst_14 : f32 to vector<20x24x128xf32>
    %c0_15 = arith.constant 0 : index
    %c0_16 = arith.constant 0 : index
    %c0_17 = arith.constant 0 : index
    %19 = vector.load %arg7[%c0_15, %c0_16, %c0_17] : memref<20x24x128xf32, #tpu.memory_space<vmem>>, vector<20x24x128xf32>
    tpu.vector_store %arg7[%c0_15, %c0_16, %c0_17], %18 {strides = array<i32>} : memref<20x24x128xf32, #tpu.memory_space<vmem>>, vector<20x24x128xf32>,
    %20 = vector.shape_cast %13 : vector<256x128xf32> to vector<16x16x128xf32>
    %c2 = arith.constant 2 : index
    %c2_18 = arith.constant 2 : index
    %c0_19 = arith.constant 0 : index
    %21 = vector.load %arg7[%c2, %c2_18, %c0_19] : memref<20x24x128xf32, #tpu.memory_space<vmem>>, vector<16x16x128xf32>
    tpu.vector_store %arg7[%c2, %c2_18, %c0_19], %20 {strides = array<i32>} : memref<20x24x128xf32, #tpu.memory_space<vmem>>, vector<16x16x128xf32>,
    %c0_20 = arith.constant 0 : index
    %c0_21 = arith.constant 0 : index
    %c0_22 = arith.constant 0 : index
    %22 = vector.load %arg7[%c0_20, %c0_21, %c0_22] : memref<20x24x128xf32, #tpu.memory_space<vmem>>, vector<16x24x128xf32>
    %c1 = arith.constant 1 : index
    %c0_23 = arith.constant 0 : index
    %c0_24 = arith.constant 0 : index
    %23 = vector.load %arg7[%c1, %c0_23, %c0_24] : memref<20x24x128xf32, #tpu.memory_space<vmem>>, vector<16x24x128xf32>
    %24 = arith.maximumf %22, %23 : vector<16x24x128xf32>
    %c2_25 = arith.constant 2 : index
    %c0_26 = arith.constant 0 : index
    %c0_27 = arith.constant 0 : index
    %25 = vector.load %arg7[%c2_25, %c0_26, %c0_27] : memref<20x24x128xf32, #tpu.memory_space<vmem>>, vector<16x24x128xf32>
    %26 = arith.maximumf %24, %25 : vector<16x24x128xf32>
    %c3 = arith.constant 3 : index
    %c0_28 = arith.constant 0 : index
    %c0_29 = arith.constant 0 : index
    %27 = vector.load %arg7[%c3, %c0_28, %c0_29] : memref<20x24x128xf32, #tpu.memory_space<vmem>>, vector<16x24x128xf32>
    %28 = arith.maximumf %26, %27 : vector<16x24x128xf32>
    %c4 = arith.constant 4 : index
    %c0_30 = arith.constant 0 : index
    %c0_31 = arith.constant 0 : index
    %29 = vector.load %arg7[%c4, %c0_30, %c0_31] : memref<20x24x128xf32, #tpu.memory_space<vmem>>, vector<16x24x128xf32>
    %30 = arith.maximumf %28, %29 : vector<16x24x128xf32>
    %31 = vector.extract_strided_slice %30 {offsets = [0, 0, 0], sizes = [16, 16, 128], strides = [1, 1, 1]} : vector<16x24x128xf32> to vector<16x16x128xf32>
    %32 = vector.extract_strided_slice %30 {offsets = [0, 1, 0], sizes = [16, 16, 128], strides = [1, 1, 1]} : vector<16x24x128xf32> to vector<16x16x128xf32>
    %33 = arith.maximumf %31, %32 : vector<16x16x128xf32>
    %34 = vector.extract_strided_slice %30 {offsets = [0, 2, 0], sizes = [16, 16, 128], strides = [1, 1, 1]} : vector<16x24x128xf32> to vector<16x16x128xf32>
    %35 = arith.maximumf %33, %34 : vector<16x16x128xf32>
    %36 = vector.extract_strided_slice %30 {offsets = [0, 3, 0], sizes = [16, 16, 128], strides = [1, 1, 1]} : vector<16x24x128xf32> to vector<16x16x128xf32>
    %37 = arith.maximumf %35, %36 : vector<16x16x128xf32>
    %38 = vector.extract_strided_slice %30 {offsets = [0, 4, 0], sizes = [16, 16, 128], strides = [1, 1, 1]} : vector<16x24x128xf32> to vector<16x16x128xf32>
    %39 = arith.maximumf %37, %38 : vector<16x16x128xf32>
    %c2_32 = arith.constant 2 : index
    %c2_33 = arith.constant 2 : index
    %c0_34 = arith.constant 0 : index
    %40 = vector.load %arg7[%c2_32, %c2_33, %c0_34] : memref<20x24x128xf32, #tpu.memory_space<vmem>>, vector<16x16x128xf32>
    tpu.vector_store %arg7[%c2_32, %c2_33, %c0_34], %39 {strides = array<i32>} : memref<20x24x128xf32, #tpu.memory_space<vmem>>, vector<16x16x128xf32>,
    %c0_35 = arith.constant 0 : index
    %c0_36 = arith.constant 0 : index
    %41 = vector.load %arg8[%c0_35, %c0_36] : memref<256x128xf32, #tpu.memory_space<vmem>>, vector<256x128xf32>
    %42 = vector.shape_cast %39 : vector<16x16x128xf32> to vector<256x128xf32>
    %c1_37 = arith.constant 1 : index
    %c0_38 = arith.constant 0 : index
    %c0_39 = arith.constant 0 : index
    %43 = vector.load %arg4[%c1_37, %c0_38, %c0_39] : memref<4x128x128xf32, #tpu.memory_space<vmem>>, vector<1x128x128xf32>
    %44 = vector.shape_cast %43 : vector<1x128x128xf32> to vector<128x128xf32>
    %cst_40 = arith.constant dense<0.000000e+00> : vector<256x128xf32>
    %45 = tpu.matmul %42, %44, %cst_40 {dimension_numbers = #tpu.dot_dimension_numbers<[1], [0], [0], [1], [0, 0, 1, 1], [], []>} : vector<256x128xf32>, vector<128x128xf32>, vector<256x128xf32> -> vector<256x128xf32>
    %46 = arith.addf %41, %45 : vector<256x128xf32>
    %c0_41 = arith.constant 0 : index
    %c0_42 = arith.constant 0 : index
    %47 = vector.load %arg8[%c0_41, %c0_42] : memref<256x128xf32, #tpu.memory_space<vmem>>, vector<256x128xf32>
    tpu.vector_store %arg8[%c0_41, %c0_42], %46 {strides = array<i32>} : memref<256x128xf32, #tpu.memory_space<vmem>>, vector<256x128xf32>,
    %c0_43 = arith.constant 0 : index
    %c0_44 = arith.constant 0 : index
    %c0_45 = arith.constant 0 : index
    %48 = vector.load %arg7[%c0_43, %c0_44, %c0_45] : memref<20x24x128xf32, #tpu.memory_space<vmem>>, vector<16x24x128xf32>
    %c1_46 = arith.constant 1 : index
    %c0_47 = arith.constant 0 : index
    %c0_48 = arith.constant 0 : index
    %49 = vector.load %arg7[%c1_46, %c0_47, %c0_48] : memref<20x24x128xf32, #tpu.memory_space<vmem>>, vector<16x24x128xf32>
    %50 = arith.maximumf %48, %49 : vector<16x24x128xf32>
    %c2_49 = arith.constant 2 : index
    %c0_50 = arith.constant 0 : index
    %c0_51 = arith.constant 0 : index
    %51 = vector.load %arg7[%c2_49, %c0_50, %c0_51] : memref<20x24x128xf32, #tpu.memory_space<vmem>>, vector<16x24x128xf32>
    %52 = arith.maximumf %50, %51 : vector<16x24x128xf32>
    %c3_52 = arith.constant 3 : index
    %c0_53 = arith.constant 0 : index
    %c0_54 = arith.constant 0 : index
    %53 = vector.load %arg7[%c3_52, %c0_53, %c0_54] : memref<20x24x128xf32, #tpu.memory_space<vmem>>, vector<16x24x128xf32>
    %54 = arith.maximumf %52, %53 : vector<16x24x128xf32>
    %c4_55 = arith.constant 4 : index
    %c0_56 = arith.constant 0 : index
    %c0_57 = arith.constant 0 : index
    %55 = vector.load %arg7[%c4_55, %c0_56, %c0_57] : memref<20x24x128xf32, #tpu.memory_space<vmem>>, vector<16x24x128xf32>
    %56 = arith.maximumf %54, %55 : vector<16x24x128xf32>
    %57 = vector.extract_strided_slice %56 {offsets = [0, 0, 0], sizes = [16, 16, 128], strides = [1, 1, 1]} : vector<16x24x128xf32> to vector<16x16x128xf32>
    %58 = vector.extract_strided_slice %56 {offsets = [0, 1, 0], sizes = [16, 16, 128], strides = [1, 1, 1]} : vector<16x24x128xf32> to vector<16x16x128xf32>
    %59 = arith.maximumf %57, %58 : vector<16x16x128xf32>
    %60 = vector.extract_strided_slice %56 {offsets = [0, 2, 0], sizes = [16, 16, 128], strides = [1, 1, 1]} : vector<16x24x128xf32> to vector<16x16x128xf32>
    %61 = arith.maximumf %59, %60 : vector<16x16x128xf32>
    %62 = vector.extract_strided_slice %56 {offsets = [0, 3, 0], sizes = [16, 16, 128], strides = [1, 1, 1]} : vector<16x24x128xf32> to vector<16x16x128xf32>
    %63 = arith.maximumf %61, %62 : vector<16x16x128xf32>
    %64 = vector.extract_strided_slice %56 {offsets = [0, 4, 0], sizes = [16, 16, 128], strides = [1, 1, 1]} : vector<16x24x128xf32> to vector<16x16x128xf32>
    %65 = arith.maximumf %63, %64 : vector<16x16x128xf32>
    %c2_58 = arith.constant 2 : index
    %c2_59 = arith.constant 2 : index
    %c0_60 = arith.constant 0 : index
    %66 = vector.load %arg7[%c2_58, %c2_59, %c0_60] : memref<20x24x128xf32, #tpu.memory_space<vmem>>, vector<16x16x128xf32>
    tpu.vector_store %arg7[%c2_58, %c2_59, %c0_60], %65 {strides = array<i32>} : memref<20x24x128xf32, #tpu.memory_space<vmem>>, vector<16x16x128xf32>,
    %c0_61 = arith.constant 0 : index
    %c0_62 = arith.constant 0 : index
    %67 = vector.load %arg8[%c0_61, %c0_62] : memref<256x128xf32, #tpu.memory_space<vmem>>, vector<256x128xf32>
    %68 = vector.shape_cast %65 : vector<16x16x128xf32> to vector<256x128xf32>
    %c2_63 = arith.constant 2 : index
    %c0_64 = arith.constant 0 : index
    %c0_65 = arith.constant 0 : index
    %69 = vector.load %arg4[%c2_63, %c0_64, %c0_65] : memref<4x128x128xf32, #tpu.memory_space<vmem>>, vector<1x128x128xf32>
    %70 = vector.shape_cast %69 : vector<1x128x128xf32> to vector<128x128xf32>
    %cst_66 = arith.constant dense<0.000000e+00> : vector<256x128xf32>
    %71 = tpu.matmul %68, %70, %cst_66 {dimension_numbers = #tpu.dot_dimension_numbers<[1], [0], [0], [1], [0, 0, 1, 1], [], []>} : vector<256x128xf32>, vector<128x128xf32>, vector<256x128xf32> -> vector<256x128xf32>
    %72 = arith.addf %67, %71 : vector<256x128xf32>
    %c0_67 = arith.constant 0 : index
    %c0_68 = arith.constant 0 : index
    %73 = vector.load %arg8[%c0_67, %c0_68] : memref<256x128xf32, #tpu.memory_space<vmem>>, vector<256x128xf32>
    tpu.vector_store %arg8[%c0_67, %c0_68], %72 {strides = array<i32>} : memref<256x128xf32, #tpu.memory_space<vmem>>, vector<256x128xf32>,
    %c0_69 = arith.constant 0 : index
    %c0_70 = arith.constant 0 : index
    %c0_71 = arith.constant 0 : index
    %74 = vector.load %arg7[%c0_69, %c0_70, %c0_71] : memref<20x24x128xf32, #tpu.memory_space<vmem>>, vector<16x24x128xf32>
    %c1_72 = arith.constant 1 : index
    %c0_73 = arith.constant 0 : index
    %c0_74 = arith.constant 0 : index
    %75 = vector.load %arg7[%c1_72, %c0_73, %c0_74] : memref<20x24x128xf32, #tpu.memory_space<vmem>>, vector<16x24x128xf32>
    %76 = arith.maximumf %74, %75 : vector<16x24x128xf32>
    %c2_75 = arith.constant 2 : index
    %c0_76 = arith.constant 0 : index
    %c0_77 = arith.constant 0 : index
    %77 = vector.load %arg7[%c2_75, %c0_76, %c0_77] : memref<20x24x128xf32, #tpu.memory_space<vmem>>, vector<16x24x128xf32>
    %78 = arith.maximumf %76, %77 : vector<16x24x128xf32>
    %c3_78 = arith.constant 3 : index
    %c0_79 = arith.constant 0 : index
    %c0_80 = arith.constant 0 : index
    %79 = vector.load %arg7[%c3_78, %c0_79, %c0_80] : memref<20x24x128xf32, #tpu.memory_space<vmem>>, vector<16x24x128xf32>
    %80 = arith.maximumf %78, %79 : vector<16x24x128xf32>
    %c4_81 = arith.constant 4 : index
    %c0_82 = arith.constant 0 : index
    %c0_83 = arith.constant 0 : index
    %81 = vector.load %arg7[%c4_81, %c0_82, %c0_83] : memref<20x24x128xf32, #tpu.memory_space<vmem>>, vector<16x24x128xf32>
    %82 = arith.maximumf %80, %81 : vector<16x24x128xf32>
    %83 = vector.extract_strided_slice %82 {offsets = [0, 0, 0], sizes = [16, 16, 128], strides = [1, 1, 1]} : vector<16x24x128xf32> to vector<16x16x128xf32>
    %84 = vector.extract_strided_slice %82 {offsets = [0, 1, 0], sizes = [16, 16, 128], strides = [1, 1, 1]} : vector<16x24x128xf32> to vector<16x16x128xf32>
    %85 = arith.maximumf %83, %84 : vector<16x16x128xf32>
    %86 = vector.extract_strided_slice %82 {offsets = [0, 2, 0], sizes = [16, 16, 128], strides = [1, 1, 1]} : vector<16x24x128xf32> to vector<16x16x128xf32>
    %87 = arith.maximumf %85, %86 : vector<16x16x128xf32>
    %88 = vector.extract_strided_slice %82 {offsets = [0, 3, 0], sizes = [16, 16, 128], strides = [1, 1, 1]} : vector<16x24x128xf32> to vector<16x16x128xf32>
    %89 = arith.maximumf %87, %88 : vector<16x16x128xf32>
    %90 = vector.extract_strided_slice %82 {offsets = [0, 4, 0], sizes = [16, 16, 128], strides = [1, 1, 1]} : vector<16x24x128xf32> to vector<16x16x128xf32>
    %91 = arith.maximumf %89, %90 : vector<16x16x128xf32>
    %c0_84 = arith.constant 0 : index
    %c0_85 = arith.constant 0 : index
    %92 = vector.load %arg8[%c0_84, %c0_85] : memref<256x128xf32, #tpu.memory_space<vmem>>, vector<256x128xf32>
    %93 = vector.shape_cast %91 : vector<16x16x128xf32> to vector<256x128xf32>
    %c3_86 = arith.constant 3 : index
    %c0_87 = arith.constant 0 : index
    %c0_88 = arith.constant 0 : index
    %94 = vector.load %arg4[%c3_86, %c0_87, %c0_88] : memref<4x128x128xf32, #tpu.memory_space<vmem>>, vector<1x128x128xf32>
    %95 = vector.shape_cast %94 : vector<1x128x128xf32> to vector<128x128xf32>
    %cst_89 = arith.constant dense<0.000000e+00> : vector<256x128xf32>
    %96 = tpu.matmul %93, %95, %cst_89 {dimension_numbers = #tpu.dot_dimension_numbers<[1], [0], [0], [1], [0, 0, 1, 1], [], []>} : vector<256x128xf32>, vector<128x128xf32>, vector<256x128xf32> -> vector<256x128xf32>
    %97 = arith.addf %92, %96 : vector<256x128xf32>
    %c0_90 = arith.constant 0 : index
    %c0_91 = arith.constant 0 : index
    %98 = vector.load %arg8[%c0_90, %c0_91] : memref<256x128xf32, #tpu.memory_space<vmem>>, vector<256x128xf32>
    tpu.vector_store %arg8[%c0_90, %c0_91], %97 {strides = array<i32>} : memref<256x128xf32, #tpu.memory_space<vmem>>, vector<256x128xf32>,
    %c0_92 = arith.constant 0 : index
    %c0_93 = arith.constant 0 : index
    %99 = vector.load %arg8[%c0_92, %c0_93] : memref<256x128xf32, #tpu.memory_space<vmem>>, vector<256x128xf32>
    %c0_94 = arith.constant 0 : index
    %c0_95 = arith.constant 0 : index
    %100 = vector.load %arg5[%c0_94, %c0_95] : memref<1x128xf32, #tpu.memory_space<vmem>>, vector<1x128xf32>
    %101 = vector.broadcast %100 : vector<1x128xf32> to vector<256x128xf32>
    %102 = arith.addf %99, %101 : vector<256x128xf32>
    %cst_96 = arith.constant 0.000000e+00 : f32
    %103 = vector.broadcast %cst_96 : f32 to vector<256x128xf32>
    %104 = arith.subf %103, %102 : vector<256x128xf32>
    %105 = math.exp %104 : vector<256x128xf32>
    %cst_97 = arith.constant 1.000000e+00 : f32
    %106 = vector.broadcast %cst_97 : f32 to vector<256x128xf32>
    %107 = arith.addf %106, %105 : vector<256x128xf32>
    %108 = tpu.reciprocal %107 {approx = true} : vector<256x128xf32> -> vector<256x128xf32>
    %109 = arith.mulf %102, %108 : vector<256x128xf32>
    %c0_98 = arith.constant 0 : index
    %c0_99 = arith.constant 0 : index
    %c0_100 = arith.constant 0 : index
    %110 = vector.load %arg6[%c0_98, %c0_99, %c0_100] : memref<1x256x128xf32, #tpu.memory_space<vmem>>, vector<1x256x128xf32>
    %111 = vector.shape_cast %110 : vector<1x256x128xf32> to vector<256x128xf32>
    %112 = vector.shape_cast %109 : vector<256x128xf32> to vector<1x256x128xf32>
    tpu.vector_store %arg6[%c0_98, %c0_99, %c0_100], %112 {strides = array<i32>} : memref<1x256x128xf32, #tpu.memory_space<vmem>>, vector<1x256x128xf32>,
    return
  }
  func.func @transform_0(%arg0: i32) -> (i32, i32, i32) {
    %c0_i32 = arith.constant 0 : i32
    %c0_i32_0 = arith.constant 0 : i32
    %c0_i32_1 = arith.constant 0 : i32
    return %arg0, %c0_i32, %c0_i32_0 : i32, i32, i32
  }
  func.func @transform_1(%arg0: i32) -> (i32, i32) {
    %c0_i32 = arith.constant 0 : i32
    %c0_i32_0 = arith.constant 0 : i32
    %c0_i32_1 = arith.constant 0 : i32
    return %c0_i32, %c0_i32_0 : i32, i32
  }
  func.func @transform_2(%arg0: i32) -> (i32, i32) {
    %c0_i32 = arith.constant 0 : i32
    %c0_i32_0 = arith.constant 0 : i32
    %c0_i32_1 = arith.constant 0 : i32
    return %c0_i32, %c0_i32_0 : i32, i32
  }
  func.func @transform_3(%arg0: i32) -> (i32, i32, i32) {
    %c0_i32 = arith.constant 0 : i32
    %c0_i32_0 = arith.constant 0 : i32
    %c0_i32_1 = arith.constant 0 : i32
    %c0_i32_2 = arith.constant 0 : i32
    return %c0_i32, %c0_i32_0, %c0_i32_1 : i32, i32, i32
  }
  func.func @transform_4(%arg0: i32) -> (i32, i32) {
    %c0_i32 = arith.constant 0 : i32
    %c0_i32_0 = arith.constant 0 : i32
    %c0_i32_1 = arith.constant 0 : i32
    return %c0_i32, %c0_i32_0 : i32, i32
  }
  func.func @transform_5(%arg0: i32) -> (i32, i32, i32) {
    %c0_i32 = arith.constant 0 : i32
    %c0_i32_0 = arith.constant 0 : i32
    %c0_i32_1 = arith.constant 0 : i32
    return %arg0, %c0_i32, %c0_i32_0 : i32, i32, i32
  }
}

</mosaic_0001>

<llo_original>
// kernel: qbwspp_forward.1
$region0: #{qbwspp_forward.1}
  #allocation0 [shape = 'u32[]', space=smem, size = 0x4, offset = 0x4, fixed_abs, tag = 'smem constant byte address 0x4 - core index']
  #allocation1 [shape = 'u32[144,128]{1,0:T(1,128)}', space=vmem, size = 0x12000, scoped, tag = 'internal scratch']
  #allocation2 [shape = 'f32[20,24,128]{2,1,0:T(8,128)}', space=vmem, size = 0x3c000, scoped, tag = 'scratch operand']
  #allocation3 [shape = 'f32[256,128]{1,0:T(8,128)}', space=vmem, size = 0x20000, scoped, tag = 'scratch operand']
  %s0 = inlined_call_operand.vmem [shape: f32[2,256,4], index: 0, kind: input, shape index: {}]
  %s1 = inlined_call_operand.vmem [shape: f32[4,128], index: 1, kind: input, shape index: {}]
  %s2 = inlined_call_operand.vmem [shape: f32[1,128], index: 2, kind: input, shape index: {}]
  %s3 = inlined_call_operand.vmem [shape: f32[4,128,128], index: 3, kind: input, shape index: {}]
  %s4 = inlined_call_operand.vmem [shape: f32[1,128], index: 4, kind: input, shape index: {}]
  %s5 = inlined_call_operand.vmem [shape: f32[2,256,128], index: 5, kind: output, shape index: {}]
  %s6 = sld [smem:[#allocation0]]
  $region53: #{qbwspp_forward.1} parent=0
    _
  %s8 = ssub.s32 1, %s6
  %s9 = scalar_select 0, %s8, %s6
  loop: start=0, step=1, limit=4
  $region2: #{qbwspp_forward.1} parent=0 // loop_pre_header
    _
  $region3: #{qbwspp_forward.1} parent=0 // loop_header
    %s11 = sphi 0, %s15
    %p12 = scmp.ge.s32.totalorder %s11, 4
    %s21 = sphi 0, %s23
    %s24 = sphi 0, %s21
    %s25 = sphi 0, %s24
    %s41 = sphi 0, %s25
    %s45 = sphi 0, %s45
    %s47 = sphi 0, %s45
    %s48 = sphi 0, %s47
    %s62 = sphi 0, %s48
    %s66 = sphi 0, %s66
    %s68 = sphi 0, %s66
    %s69 = sphi 0, %s68
    %s83 = sphi 0, %s69
    %s87 = sphi 0, %s87
    %s89 = sphi 0, %s87
    %s90 = sphi 0, %s89
    %s104 = sphi 0, %s90
    %s108 = sphi 0, %s108
    %s110 = sphi 0, %s108
    %s111 = sphi 0, %s110
    %s125 = sphi 0, %s111
    %s131 = sphi 0, %s133
    %s134 = sphi 0, %s131
    %s135 = sphi 0, %s134
    %s151 = sphi 0, %s135
  $region4: #{qbwspp_forward.1} parent=0 // loop_header_branch
    %14 = sbr.rel (%p12) target = $region8
  $region5: #{qbwspp_forward.1} parent=0 // loop_body
    %s16 = ssub.s32 %s11, 1
    %s17 = ssub.s32 %s11, 2
    %s18 = sadd.s32 %s11, 1
    %s19 = ssub.s32 %s11, %s18
    %p20 = scmp.eq.s32.totalorder %s19, 0
    %s22 = sadd.s32 %s21, 1
    %s23 = scalar_select %p20, %s21, %s22
    %p26 = pneg %p20
    %p27 = scmp.eq.s32.totalorder %s11, 1
    %p28 = por %p26, %p27
    %p29 = scmp.ne.s32.totalorder %s21, %s24
    %p30 = scmp.eq.s32.totalorder %s11, 0
    %p31 = por %p29, %p30
    %p32 = scmp.ne.s32.totalorder %s21, %s24
    %p33 = scmp.eq.s32.totalorder %s16, 1
    %p34 = por %p32, %p33
    %p35 = scmp.ne.s32.totalorder %s24, %s25
    %p36 = scmp.eq.s32.totalorder %s16, 0
    %p37 = por %p35, %p36
    %p38 = scmp.ne.s32.totalorder %s24, %s25
    %p39 = scmp.eq.s32.totalorder %s17, 1
    %p40 = por %p38, %p39
    %p42 = scmp.ne.s32.totalorder %s25, %s41
    %p43 = scmp.eq.s32.totalorder %s17, 0
    %p44 = por %p42, %p43
    %s46 = sadd.s32 %s45, 1
    %p49 = scmp.eq.s32.totalorder %s11, 1
    %p50 = scmp.ne.s32.totalorder %s45, %s47
    %p51 = scmp.eq.s32.totalorder %s11, 0
    %p52 = por %p50, %p51
    %p53 = scmp.ne.s32.totalorder %s45, %s47
    %p54 = scmp.eq.s32.totalorder %s16, 1
    %p55 = por %p53, %p54
    %p56 = scmp.ne.s32.totalorder %s47, %s48
    %p57 = scmp.eq.s32.totalorder %s16, 0
    %p58 = por %p56, %p57
    %p59 = scmp.ne.s32.totalorder %s47, %s48
    %p60 = scmp.eq.s32.totalorder %s17, 1
    %p61 = por %p59, %p60
    %p63 = scmp.ne.s32.totalorder %s48, %s62
    %p64 = scmp.eq.s32.totalorder %s17, 0
    %p65 = por %p63, %p64
    %s67 = sadd.s32 %s66, 1
    %p70 = scmp.eq.s32.totalorder %s11, 1
    %p71 = scmp.ne.s32.totalorder %s66, %s68
    %p72 = scmp.eq.s32.totalorder %s11, 0
    %p73 = por %p71, %p72
    %p74 = scmp.ne.s32.totalorder %s66, %s68
    %p75 = scmp.eq.s32.totalorder %s16, 1
    %p76 = por %p74, %p75
    %p77 = scmp.ne.s32.totalorder %s68, %s69
    %p78 = scmp.eq.s32.totalorder %s16, 0
    %p79 = por %p77, %p78
    %p80 = scmp.ne.s32.totalorder %s68, %s69
    %p81 = scmp.eq.s32.totalorder %s17, 1
    %p82 = por %p80, %p81
    %p84 = scmp.ne.s32.totalorder %s69, %s83
    %p85 = scmp.eq.s32.totalorder %s17, 0
    %p86 = por %p84, %p85
    %s88 = sadd.s32 %s87, 1
    %p91 = scmp.eq.s32.totalorder %s11, 1
    %p92 = scmp.ne.s32.totalorder %s87, %s89
    %p93 = scmp.eq.s32.totalorder %s11, 0
    %p94 = por %p92, %p93
    %p95 = scmp.ne.s32.totalorder %s87, %s89
    %p96 = scmp.eq.s32.totalorder %s16, 1
    %p97 = por %p95, %p96
    %p98 = scmp.ne.s32.totalorder %s89, %s90
    %p99 = scmp.eq.s32.totalorder %s16, 0
    %p100 = por %p98, %p99
    %p101 = scmp.ne.s32.totalorder %s89, %s90
    %p102 = scmp.eq.s32.totalorder %s17, 1
    %p103 = por %p101, %p102
    %p105 = scmp.ne.s32.totalorder %s90, %s104
    %p106 = scmp.eq.s32.totalorder %s17, 0
    %p107 = por %p105, %p106
    %s109 = sadd.s32 %s108, 1
    %p112 = scmp.eq.s32.totalorder %s11, 1
    %p113 = scmp.ne.s32.totalorder %s108, %s110
    %p114 = scmp.eq.s32.totalorder %s11, 0
    %p115 = por %p113, %p114
    %p116 = scmp.ne.s32.totalorder %s108, %s110
    %p117 = scmp.eq.s32.totalorder %s16, 1
    %p118 = por %p116, %p117
    %p119 = scmp.ne.s32.totalorder %s110, %s111
    %p120 = scmp.eq.s32.totalorder %s16, 0
    %p121 = por %p119, %p120
    %p122 = scmp.ne.s32.totalorder %s110, %s111
    %p123 = scmp.eq.s32.totalorder %s17, 1
    %p124 = por %p122, %p123
    %p126 = scmp.ne.s32.totalorder %s111, %s125
    %p127 = scmp.eq.s32.totalorder %s17, 0
    %p128 = por %p126, %p127
    %s129 = ssub.s32 %s11, %s18
    %p130 = scmp.eq.s32.totalorder %s129, 0
    %s132 = sadd.s32 %s131, 1
    %s133 = scalar_select %p130, %s131, %s132
    %p136 = pneg %p130
    %p137 = scmp.eq.s32.totalorder %s11, 1
    %p138 = por %p136, %p137
    %p139 = scmp.ne.s32.totalorder %s131, %s134
    %p140 = scmp.eq.s32.totalorder %s11, 0
    %p141 = por %p139, %p140
    %p142 = scmp.ne.s32.totalorder %s131, %s134
    %p143 = scmp.eq.s32.totalorder %s16, 1
    %p144 = por %p142, %p143
    %p145 = scmp.ne.s32.totalorder %s134, %s135
    %p146 = scmp.eq.s32.totalorder %s16, 0
    %p147 = por %p145, %p146
    %p148 = scmp.ne.s32.totalorder %s134, %s135
    %p149 = scmp.eq.s32.totalorder %s17, 1
    %p150 = por %p148, %p149
    %p152 = scmp.ne.s32.totalorder %s135, %s151
    %p153 = scmp.eq.s32.totalorder %s17, 0
    %p154 = por %p152, %p153
    %p155 = scmp.le.s32.totalorder 1, %s11
    %p156 = scmp.lt.s32.totalorder %s11, 3
    %p157 = pnand %p155, %p156
    %p158 = pneg %p157
    // Predicated region
    $region9: #{qbwspp_forward.1} parent=5 // pred_check
      _
    $region10: #{qbwspp_forward.1} parent=5 // pred_check_branch
      %160 = sbr.rel (%p157) target = $region12
    $region11: #{qbwspp_forward.1} parent=5 // pred_region
      %s161 = ssub.s32 %s11, 1
      // Predicated region
      $region13: #{qbwspp_forward.1} parent=11 // pred_check
        %p162 = pneg %p58
      $region14: #{qbwspp_forward.1} parent=11 // pred_check_branch
        %164 = sbr.rel (%p162) target = $region16
      $region15: #{qbwspp_forward.1} parent=11 // pred_region
        _
      $region16: #{qbwspp_forward.1} parent=11 // pred_fallthru
        _
      // Predicated region
      $region17: #{qbwspp_forward.1} parent=11 // pred_check
        %p165 = pneg %p79
      $region18: #{qbwspp_forward.1} parent=11 // pred_check_branch
        %167 = sbr.rel (%p165) target = $region20
      $region19: #{qbwspp_forward.1} parent=11 // pred_region
        _
      $region20: #{qbwspp_forward.1} parent=11 // pred_fallthru
        _
      // Predicated region
      $region21: #{qbwspp_forward.1} parent=11 // pred_check
        %p168 = pneg %p100
      $region22: #{qbwspp_forward.1} parent=11 // pred_check_branch
        %170 = sbr.rel (%p168) target = $region24
      $region23: #{qbwspp_forward.1} parent=11 // pred_region
        _
      $region24: #{qbwspp_forward.1} parent=11 // pred_fallthru
        _
      // Predicated region
      $region25: #{qbwspp_forward.1} parent=11 // pred_check
        %p171 = pneg %p121
      $region26: #{qbwspp_forward.1} parent=11 // pred_check_branch
        %173 = sbr.rel (%p171) target = $region28
      $region27: #{qbwspp_forward.1} parent=11 // pred_region
        _
      $region28: #{qbwspp_forward.1} parent=11 // pred_fallthru
        _
    $region12: #{qbwspp_forward.1} parent=5 // pred_fallthru
      _
    %p174 = scmp.lt.s32.totalorder %s11, 2
    // Predicated region
    $region29: #{qbwspp_forward.1} parent=5 // pred_check
      %p175 = pneg %p174
    $region30: #{qbwspp_forward.1} parent=5 // pred_check_branch
      %177 = sbr.rel (%p175) target = $region32
    $region31: #{qbwspp_forward.1} parent=5 // pred_region
      // Predicated region
      $region33: #{qbwspp_forward.1} parent=31 // pred_check
        %p178 = pneg %p31
      $region34: #{qbwspp_forward.1} parent=31 // pred_check_branch
        %180 = sbr.rel (%p178) target = $region36
      $region35: #{qbwspp_forward.1} parent=31 // pred_region
        %p181 = scmp.lt.s32.totalorder %s11, 1
        %s182 = scalar_select %p181, %s11, 1
        %s183 = smul.addr %s182, 32
        %s184 = smul.addr %s183, 8
        %s185 = scalar_lea.vmem %s0, %s184
      $region36: #{qbwspp_forward.1} parent=31 // pred_fallthru
        _
    $region32: #{qbwspp_forward.1} parent=5 // pred_fallthru
      _
    %p186 = scmp.le.s32.totalorder 1, %s11
    %p187 = scmp.lt.s32.totalorder %s11, 3
    %p188 = pnand %p186, %p187
    %p189 = pneg %p188
    // Predicated region
    $region37: #{qbwspp_forward.1} parent=5 // pred_check
      _
    $region38: #{qbwspp_forward.1} parent=5 // pred_check_branch
      %191 = sbr.rel (%p188) target = $region40
    $region39: #{qbwspp_forward.1} parent=5 // pred_region
      %s192 = ssub.s32 %s11, 1
      %p193 = scmp.lt.s32.totalorder %s16, 1
      %s194 = scalar_select %p193, %s16, 1
      %s195 = smul.addr %s194, 32
      %s196 = smul.addr %s195, 8
      %s197 = scalar_lea.vmem %s0, %s196
      %p198 = pneg %p37
      %p199 = pneg %p34
      %p200 = pneg %p58
      %p201 = pneg %p55
      %p202 = pneg %p79
      %p203 = pneg %p76
      %p204 = pneg %p100
      %p205 = pneg %p97
      %p206 = pneg %p121
      %p207 = pneg %p118
      %p208 = pneg %p147
      %p209 = pneg %p144
      %p210 = scmp.lt.s32.totalorder %s16, 1
      %s211 = scalar_select %p210, %s16, 1
      %s212 = smul.addr %s211, 32
      %s213 = smul.addr %s212, 8
      %s214 = scalar_lea.vmem %s5, %s213
      %p215 = scmp.lt.s32.totalorder %s16, 1
      %s216 = scalar_select %p215, %s16, 1
      %s217 = smul.addr %s216, 32
      %s218 = smul.addr %s217, 8
      %s219 = scalar_lea.vmem %s0, %s218
      %p220 = scmp.lt.s32.totalorder %s16, 1
      %s221 = scalar_select %p220, %s16, 1
      %s222 = smul.addr %s221, 32
      %s223 = smul.addr %s222, 8
      %s224 = scalar_lea.vmem %s5, %s223
      %v225 = vld [vmem:[%s219] sm:$0xff]
      %v226 = vld [vmem:[%s219 + $0x8] sm:$0xff]
      %v227 = vld [vmem:[%s219 + $0x10] sm:$0xff]
      %v228 = vld [vmem:[%s219 + $0x18] sm:$0xff]
      %v229 = vld [vmem:[%s219 + $0x20] sm:$0xff]
      %v230 = vld [vmem:[%s219 + $0x28] sm:$0xff]
      %v231 = vld [vmem:[%s219 + $0x30] sm:$0xff]
      %v232 = vld [vmem:[%s219 + $0x38] sm:$0xff]
      %v233 = vld [vmem:[%s219 + $0x40] sm:$0xff]
      %v234 = vld [vmem:[%s219 + $0x48] sm:$0xff]
      %v235 = vld [vmem:[%s219 + $0x50] sm:$0xff]
      %v236 = vld [vmem:[%s219 + $0x58] sm:$0xff]
      %v237 = vld [vmem:[%s219 + $0x60] sm:$0xff]
      %v238 = vld [vmem:[%s219 + $0x68] sm:$0xff]
      %v239 = vld [vmem:[%s219 + $0x70] sm:$0xff]
      %v240 = vld [vmem:[%s219 + $0x78] sm:$0xff]
      %v241 = vld [vmem:[%s219 + $0x80] sm:$0xff]
      %v242 = vld [vmem:[%s219 + $0x88] sm:$0xff]
      %v243 = vld [vmem:[%s219 + $0x90] sm:$0xff]
      %v244 = vld [vmem:[%s219 + $0x98] sm:$0xff]
      %v245 = vld [vmem:[%s219 + $0xa0] sm:$0xff]
      %v246 = vld [vmem:[%s219 + $0xa8] sm:$0xff]
      %v247 = vld [vmem:[%s219 + $0xb0] sm:$0xff]
      %v248 = vld [vmem:[%s219 + $0xb8] sm:$0xff]
      %v249 = vld [vmem:[%s219 + $0xc0] sm:$0xff]
      %v250 = vld [vmem:[%s219 + $0xc8] sm:$0xff]
      %v251 = vld [vmem:[%s219 + $0xd0] sm:$0xff]
      %v252 = vld [vmem:[%s219 + $0xd8] sm:$0xff]
      %v253 = vld [vmem:[%s219 + $0xe0] sm:$0xff]
      %v254 = vld [vmem:[%s219 + $0xe8] sm:$0xff]
      %v255 = vld [vmem:[%s219 + $0xf0] sm:$0xff]
      %v256 = vld [vmem:[%s219 + $0xf8] sm:$0xff]
      %v257 = vld [vmem:[%s1] sm:$0xf]
      %v258 = vld [vmem:[%s2] sm:$0x1]
      %v260 = vlaneseq
      %v261 = vshrl.u32 %v260, 7
      %v262 = vsub.s32 0, %v261
      %v263 = vrot.slane %v258, %v262
      %vm265 = vcmask 31744
      %v267 = vsel %vm265, %v225, 0
      %v270 = vsel %vm265, %v226, 0
      %v273 = vsel %vm265, %v227, 0
      %v276 = vsel %vm265, %v228, 0
      %v279 = vsel %vm265, %v229, 0
      %v282 = vsel %vm265, %v230, 0
      %v285 = vsel %vm265, %v231, 0
      %v288 = vsel %vm265, %v232, 0
      %v291 = vsel %vm265, %v233, 0
      %v294 = vsel %vm265, %v234, 0
      %v297 = vsel %vm265, %v235, 0
      %v300 = vsel %vm265, %v236, 0
      %v303 = vsel %vm265, %v237, 0
      %v306 = vsel %vm265, %v238, 0
      %v309 = vsel %vm265, %v239, 0
      %v312 = vsel %vm265, %v240, 0
      %v315 = vsel %vm265, %v241, 0
      %v318 = vsel %vm265, %v242, 0
      %v321 = vsel %vm265, %v243, 0
      %v324 = vsel %vm265, %v244, 0
      %v327 = vsel %vm265, %v245, 0
      %v330 = vsel %vm265, %v246, 0
      %v333 = vsel %vm265, %v247, 0
      %v336 = vsel %vm265, %v248, 0
      %v339 = vsel %vm265, %v249, 0
      %v342 = vsel %vm265, %v250, 0
      %v345 = vsel %vm265, %v251, 0
      %v348 = vsel %vm265, %v252, 0
      %v351 = vsel %vm265, %v253, 0
      %v354 = vsel %vm265, %v254, 0
      %v357 = vsel %vm265, %v255, 0
      %v360 = vsel %vm265, %v256, 0
      %vm362 = vcmask 1043456
      %v364 = vsel %vm362, %v257, 0
      %366 = vmatprep.subr.mxu0 0.0
      %367 = vmatpush1.msra.mxu0 %v364
      %368 = vmatprep.subr.mxu0 0.0
      %369 = vmatpush1.msra.mxu0 0.0
      %370 = vmatprep.subr.mxu0 0.0
      %371 = vmatpush1.msra.mxu0 0.0
      %372 = vmatprep.subr.mxu0 0.0
      %373 = vmatpush1.msra.mxu0 0.0
      %374 = vmatprep.subr.mxu0 0.0
      %375 = vmatpush1.msra.mxu0 0.0
      %376 = vmatprep.subr.mxu0 0.0
      %377 = vmatpush1.msra.mxu0 0.0
      %378 = vmatprep.subr.mxu0 0.0
      %379 = vmatpush1.msra.mxu0 0.0
      %380 = vmatprep.subr.mxu0 0.0
      %381 = vmatpush1.msra.mxu0 0.0
      %382 = vmatprep.subr.mxu0 0.0
      %383 = vmatpush1.msra.mxu0 0.0
      %384 = vmatprep.subr.mxu0 0.0
      %385 = vmatpush1.msra.mxu0 0.0
      %386 = vmatprep.subr.mxu0 0.0
      %387 = vmatpush1.msra.mxu0 0.0
      %388 = vmatprep.subr.mxu0 0.0
      %389 = vmatpush1.msra.mxu0 0.0
      %390 = vmatprep.subr.mxu0 0.0
      %391 = vmatpush1.msra.mxu0 0.0
      %392 = vmatprep.subr.mxu0 0.0
      %393 = vmatpush1.msra.mxu0 0.0
      %394 = vmatprep.subr.mxu0 0.0
      %395 = vmatpush1.msra.mxu0 0.0
      %396 = vmatprep.subr.mxu0 0.0
      %397 = vmatpush1.msra.mxu0 0.0
      %398 = vmatprep.subr.mxu0 0.0
      %399 = vmatpush1.msra.mxu0 0.0
      %400 = vmatprep.subr.mxu0 0.0
      %401 = vmatpush1.msra.mxu0 0.0
      %402 = vmatprep.subr.mxu0 0.0
      %403 = vmatpush1.msra.mxu0 0.0
      %404 = vmatprep.subr.mxu0 0.0
      %405 = vmatpush1.msra.mxu0 0.0
      %406 = vmatprep.subr.mxu0 0.0
      %407 = vmatpush1.msra.mxu0 0.0
      %408 = vmatprep.subr.mxu0 0.0
      %409 = vmatpush1.msra.mxu0 0.0
      %410 = vmatprep.subr.mxu0 0.0
      %411 = vmatpush1.msra.mxu0 0.0
      %412 = vmatprep.subr.mxu0 0.0
      %413 = vmatpush1.msra.mxu0 0.0
      %414 = vmatprep.subr.mxu0 0.0
      %415 = vmatpush1.msra.mxu0 0.0
      %416 = vmatprep.subr.mxu0 0.0
      %417 = vmatpush1.msra.mxu0 0.0
      %418 = vmatprep.subr.mxu0 0.0
      %419 = vmatpush1.msra.mxu0 0.0
      %420 = vmatprep.subr.mxu0 0.0
      %421 = vmatpush1.msra.mxu0 0.0
      %422 = vmatprep.subr.mxu0 0.0
      %423 = vmatpush1.msra.mxu0 0.0
      %424 = vmatprep.subr.mxu0 0.0
      %425 = vmatpush1.msra.mxu0 0.0
      %426 = vmatprep.subr.mxu0 0.0
      %427 = vmatpush1.msra.mxu0 0.0
      %428 = vmatprep.subr.mxu0 0.0
      %429 = vmatpush1.msra.mxu0 0.0
      %430 = vmatprep.mubr.f32.mxu0 0.0
      %431 = vmatmul.mubr.f32.gmra.mrb[0].mxu0 %v267
      %v432 = vpop.f32.mrb[0].mxu0
      %v433 = vadd.f32 %v263, %v432
      %v434 = vpop.f32.mrb[0].mxu0
      %435 = vmatprep.mubr.f32.mxu0 0.0
      %436 = vmatmul.mubr.f32.gmra.mrb[0].mxu0 %v270
      %v437 = vpop.f32.mrb[0].mxu0
      %v438 = vadd.f32 %v263, %v437
      %v439 = vpop.f32.mrb[0].mxu0
      %440 = vmatprep.mubr.f32.mxu0 0.0
      %441 = vmatmul.mubr.f32.gmra.mrb[0].mxu0 %v273
      %v442 = vpop.f32.mrb[0].mxu0
      %v443 = vadd.f32 %v263, %v442
      %v444 = vpop.f32.mrb[0].mxu0
      %445 = vmatprep.mubr.f32.mxu0 0.0
      %446 = vmatmul.mubr.f32.gmra.mrb[0].mxu0 %v276
      %v447 = vpop.f32.mrb[0].mxu0
      %v448 = vadd.f32 %v263, %v447
      %v449 = vpop.f32.mrb[0].mxu0
      %450 = vmatprep.mubr.f32.mxu0 0.0
      %451 = vmatmul.mubr.f32.gmra.mrb[0].mxu0 %v279
      %v452 = vpop.f32.mrb[0].mxu0
      %v453 = vadd.f32 %v263, %v452
      %v454 = vpop.f32.mrb[0].mxu0
      %455 = vmatprep.mubr.f32.mxu0 0.0
      %456 = vmatmul.mubr.f32.gmra.mrb[0].mxu0 %v282
      %v457 = vpop.f32.mrb[0].mxu0
      %v458 = vadd.f32 %v263, %v457
      %v459 = vpop.f32.mrb[0].mxu0
      %460 = vmatprep.mubr.f32.mxu0 0.0
      %461 = vmatmul.mubr.f32.gmra.mrb[0].mxu0 %v285
      %v462 = vpop.f32.mrb[0].mxu0
      %v463 = vadd.f32 %v263, %v462
      %v464 = vpop.f32.mrb[0].mxu0
      %465 = vmatprep.mubr.f32.mxu0 0.0
      %466 = vmatmul.mubr.f32.gmra.mrb[0].mxu0 %v288
      %v467 = vpop.f32.mrb[0].mxu0
      %v468 = vadd.f32 %v263, %v467
      %v469 = vpop.f32.mrb[0].mxu0
      %470 = vmatprep.mubr.f32.mxu0 0.0
      %471 = vmatmul.mubr.f32.gmra.mrb[0].mxu0 %v291
      %v472 = vpop.f32.mrb[0].mxu0
      %v473 = vadd.f32 %v263, %v472
      %v474 = vpop.f32.mrb[0].mxu0
      %475 = vmatprep.mubr.f32.mxu0 0.0
      %476 = vmatmul.mubr.f32.gmra.mrb[0].mxu0 %v294
      %v477 = vpop.f32.mrb[0].mxu0
      %v478 = vadd.f32 %v263, %v477
      %v479 = vpop.f32.mrb[0].mxu0
      %480 = vmatprep.mubr.f32.mxu0 0.0
      %481 = vmatmul.mubr.f32.gmra.mrb[0].mxu0 %v297
      %v482 = vpop.f32.mrb[0].mxu0
      %v483 = vadd.f32 %v263, %v482
      %v484 = vpop.f32.mrb[0].mxu0
      %485 = vmatprep.mubr.f32.mxu0 0.0
      %486 = vmatmul.mubr.f32.gmra.mrb[0].mxu0 %v300
      %v487 = vpop.f32.mrb[0].mxu0
      %v488 = vadd.f32 %v263, %v487
      %v489 = vpop.f32.mrb[0].mxu0
      %490 = vmatprep.mubr.f32.mxu0 0.0
      %491 = vmatmul.mubr.f32.gmra.mrb[0].mxu0 %v303
      %v492 = vpop.f32.mrb[0].mxu0
      %v493 = vadd.f32 %v263, %v492
      %v494 = vpop.f32.mrb[0].mxu0
      %495 = vmatprep.mubr.f32.mxu0 0.0
      %496 = vmatmul.mubr.f32.gmra.mrb[0].mxu0 %v306
      %v497 = vpop.f32.mrb[0].mxu0
      %v498 = vadd.f32 %v263, %v497
      %v499 = vpop.f32.mrb[0].mxu0
      %500 = vmatprep.mubr.f32.mxu0 0.0
      %501 = vmatmul.mubr.f32.gmra.mrb[0].mxu0 %v309
      %v502 = vpop.f32.mrb[0].mxu0
      %v503 = vadd.f32 %v263, %v502
      %v504 = vpop.f32.mrb[0].mxu0
      %505 = vmatprep.mubr.f32.mxu0 0.0
      %506 = vmatmul.mubr.f32.gmra.mrb[0].mxu0 %v312
      %v507 = vpop.f32.mrb[0].mxu0
      %v508 = vadd.f32 %v263, %v507
      %v509 = vpop.f32.mrb[0].mxu0
      %510 = vmatprep.mubr.f32.mxu0 0.0
      %511 = vmatmul.mubr.f32.gmra.mrb[0].mxu0 %v315
      %v512 = vpop.f32.mrb[0].mxu0
      %v513 = vadd.f32 %v263, %v512
      %v514 = vpop.f32.mrb[0].mxu0
      %515 = vmatprep.mubr.f32.mxu0 0.0
      %516 = vmatmul.mubr.f32.gmra.mrb[0].mxu0 %v318
      %v517 = vpop.f32.mrb[0].mxu0
      %v518 = vadd.f32 %v263, %v517
      %v519 = vpop.f32.mrb[0].mxu0
      %520 = vmatprep.mubr.f32.mxu0 0.0
      %521 = vmatmul.mubr.f32.gmra.mrb[0].mxu0 %v321
      %v522 = vpop.f32.mrb[0].mxu0
      %v523 = vadd.f32 %v263, %v522
      %v524 = vpop.f32.mrb[0].mxu0
      %525 = vmatprep.mubr.f32.mxu0 0.0
      %526 = vmatmul.mubr.f32.gmra.mrb[0].mxu0 %v324
      %v527 = vpop.f32.mrb[0].mxu0
      %v528 = vadd.f32 %v263, %v527
      %v529 = vpop.f32.mrb[0].mxu0
      %530 = vmatprep.mubr.f32.mxu0 0.0
      %531 = vmatmul.mubr.f32.gmra.mrb[0].mxu0 %v327
      %v532 = vpop.f32.mrb[0].mxu0
      %v533 = vadd.f32 %v263, %v532
      %v534 = vpop.f32.mrb[0].mxu0
      %535 = vmatprep.mubr.f32.mxu0 0.0
      %536 = vmatmul.mubr.f32.gmra.mrb[0].mxu0 %v330
      %v537 = vpop.f32.mrb[0].mxu0
      %v538 = vadd.f32 %v263, %v537
      %v539 = vpop.f32.mrb[0].mxu0
      %540 = vmatprep.mubr.f32.mxu0 0.0
      %541 = vmatmul.mubr.f32.gmra.mrb[0].mxu0 %v333
      %v542 = vpop.f32.mrb[0].mxu0
      %v543 = vadd.f32 %v263, %v542
      %v544 = vpop.f32.mrb[0].mxu0
      %545 = vmatprep.mubr.f32.mxu0 0.0
      %546 = vmatmul.mubr.f32.gmra.mrb[0].mxu0 %v336
      %v547 = vpop.f32.mrb[0].mxu0
      %v548 = vadd.f32 %v263, %v547
      %v549 = vpop.f32.mrb[0].mxu0
      %550 = vmatprep.mubr.f32.mxu0 0.0
      %551 = vmatmul.mubr.f32.gmra.mrb[0].mxu0 %v339
      %v552 = vpop.f32.mrb[0].mxu0
      %v553 = vadd.f32 %v263, %v552
      %v554 = vpop.f32.mrb[0].mxu0
      %555 = vmatprep.mubr.f32.mxu0 0.0
      %556 = vmatmul.mubr.f32.gmra.mrb[0].mxu0 %v342
      %v557 = vpop.f32.mrb[0].mxu0
      %v558 = vadd.f32 %v263, %v557
      %v559 = vpop.f32.mrb[0].mxu0
      %560 = vmatprep.mubr.f32.mxu0 0.0
      %561 = vmatmul.mubr.f32.gmra.mrb[0].mxu0 %v345
      %v562 = vpop.f32.mrb[0].mxu0
      %v563 = vadd.f32 %v263, %v562
      %v564 = vpop.f32.mrb[0].mxu0
      %565 = vmatprep.mubr.f32.mxu0 0.0
      %566 = vmatmul.mubr.f32.gmra.mrb[0].mxu0 %v348
      %v567 = vpop.f32.mrb[0].mxu0
      %v568 = vadd.f32 %v263, %v567
      %v569 = vpop.f32.mrb[0].mxu0
      %570 = vmatprep.mubr.f32.mxu0 0.0
      %571 = vmatmul.mubr.f32.gmra.mrb[0].mxu0 %v351
      %v572 = vpop.f32.mrb[0].mxu0
      %v573 = vadd.f32 %v263, %v572
      %v574 = vpop.f32.mrb[0].mxu0
      %575 = vmatprep.mubr.f32.mxu0 0.0
      %576 = vmatmul.mubr.f32.gmra.mrb[0].mxu0 %v354
      %v577 = vpop.f32.mrb[0].mxu0
      %v578 = vadd.f32 %v263, %v577
      %v579 = vpop.f32.mrb[0].mxu0
      %580 = vmatprep.mubr.f32.mxu0 0.0
      %581 = vmatmul.mubr.f32.gmra.mrb[0].mxu0 %v357
      %v582 = vpop.f32.mrb[0].mxu0
      %v583 = vadd.f32 %v263, %v582
      %v584 = vpop.f32.mrb[0].mxu0
      %585 = vmatprep.mubr.f32.mxu0 0.0
      %586 = vmatmul.mubr.f32.gmra.mrb[0].mxu0 %v360
      %v587 = vpop.f32.mrb[0].mxu0
      %v588 = vadd.f32 %v263, %v587
      %v589 = vpop.f32.mrb[0].mxu0
      %590 = vdwg.mxu0
      %v591 = vsub.f32 0.0, %v433
      %v592 = vsub.f32 0.0, %v438
      %v593 = vsub.f32 0.0, %v443
      %v594 = vsub.f32 0.0, %v448
      %v595 = vsub.f32 0.0, %v453
      %v596 = vsub.f32 0.0, %v458
      %v597 = vsub.f32 0.0, %v463
      %v598 = vsub.f32 0.0, %v468
      %v599 = vsub.f32 0.0, %v473
      %v600 = vsub.f32 0.0, %v478
      %v601 = vsub.f32 0.0, %v483
      %v602 = vsub.f32 0.0, %v488
      %v603 = vsub.f32 0.0, %v493
      %v604 = vsub.f32 0.0, %v498
      %v605 = vsub.f32 0.0, %v503
      %v606 = vsub.f32 0.0, %v508
      %v607 = vsub.f32 0.0, %v513
      %v608 = vsub.f32 0.0, %v518
      %v609 = vsub.f32 0.0, %v523
      %v610 = vsub.f32 0.0, %v528
      %v611 = vsub.f32 0.0, %v533
      %v612 = vsub.f32 0.0, %v538
      %v613 = vsub.f32 0.0, %v543
      %v614 = vsub.f32 0.0, %v548
      %v615 = vsub.f32 0.0, %v553
      %v616 = vsub.f32 0.0, %v558
      %v617 = vsub.f32 0.0, %v563
      %v618 = vsub.f32 0.0, %v568
      %v619 = vsub.f32 0.0, %v573
      %v620 = vsub.f32 0.0, %v578
      %v621 = vsub.f32 0.0, %v583
      %v622 = vsub.f32 0.0, %v588
      %v623 = vmul.f32 %v591, 1.442695
      %v624 = vpow.pop %v623
      %v625 = vmul.f32 %v592, 1.442695
      %v626 = vpow.pop %v625
      %v627 = vmul.f32 %v593, 1.442695
      %v628 = vpow.pop %v627
      %v629 = vmul.f32 %v594, 1.442695
      %v630 = vpow.pop %v629
      %v631 = vmul.f32 %v595, 1.442695
      %v632 = vpow.pop %v631
      %v633 = vmul.f32 %v596, 1.442695
      %v634 = vpow.pop %v633
      %v635 = vmul.f32 %v597, 1.442695
      %v636 = vpow.pop %v635
      %v637 = vmul.f32 %v598, 1.442695
      %v638 = vpow.pop %v637
      %v639 = vmul.f32 %v599, 1.442695
      %v640 = vpow.pop %v639
      %v641 = vmul.f32 %v600, 1.442695
      %v642 = vpow.pop %v641
      %v643 = vmul.f32 %v601, 1.442695
      %v644 = vpow.pop %v643
      %v645 = vmul.f32 %v602, 1.442695
      %v646 = vpow.pop %v645
      %v647 = vmul.f32 %v603, 1.442695
      %v648 = vpow.pop %v647
      %v649 = vmul.f32 %v604, 1.442695
      %v650 = vpow.pop %v649
      %v651 = vmul.f32 %v605, 1.442695
      %v652 = vpow.pop %v651
      %v653 = vmul.f32 %v606, 1.442695
      %v654 = vpow.pop %v653
      %v655 = vmul.f32 %v607, 1.442695
      %v656 = vpow.pop %v655
      %v657 = vmul.f32 %v608, 1.442695
      %v658 = vpow.pop %v657
      %v659 = vmul.f32 %v609, 1.442695
      %v660 = vpow.pop %v659
      %v661 = vmul.f32 %v610, 1.442695
      %v662 = vpow.pop %v661
      %v663 = vmul.f32 %v611, 1.442695
      %v664 = vpow.pop %v663
      %v665 = vmul.f32 %v612, 1.442695
      %v666 = vpow.pop %v665
      %v667 = vmul.f32 %v613, 1.442695
      %v668 = vpow.pop %v667
      %v669 = vmul.f32 %v614, 1.442695
      %v670 = vpow.pop %v669
      %v671 = vmul.f32 %v615, 1.442695
      %v672 = vpow.pop %v671
      %v673 = vmul.f32 %v616, 1.442695
      %v674 = vpow.pop %v673
      %v675 = vmul.f32 %v617, 1.442695
      %v676 = vpow.pop %v675
      %v677 = vmul.f32 %v618, 1.442695
      %v678 = vpow.pop %v677
      %v679 = vmul.f32 %v619, 1.442695
      %v680 = vpow.pop %v679
      %v681 = vmul.f32 %v620, 1.442695
      %v682 = vpow.pop %v681
      %v683 = vmul.f32 %v621, 1.442695
      %v684 = vpow.pop %v683
      %v685 = vmul.f32 %v622, 1.442695
      %v686 = vpow.pop %v685
      %v687 = vadd.f32 %v624, 1.0
      %v688 = vadd.f32 %v626, 1.0
      %v689 = vadd.f32 %v628, 1.0
      %v690 = vadd.f32 %v630, 1.0
      %v691 = vadd.f32 %v632, 1.0
      %v692 = vadd.f32 %v634, 1.0
      %v693 = vadd.f32 %v636, 1.0
      %v694 = vadd.f32 %v638, 1.0
      %v695 = vadd.f32 %v640, 1.0
      %v696 = vadd.f32 %v642, 1.0
      %v697 = vadd.f32 %v644, 1.0
      %v698 = vadd.f32 %v646, 1.0
      %v699 = vadd.f32 %v648, 1.0
      %v700 = vadd.f32 %v650, 1.0
      %v701 = vadd.f32 %v652, 1.0
      %v702 = vadd.f32 %v654, 1.0
      %v703 = vadd.f32 %v656, 1.0
      %v704 = vadd.f32 %v658, 1.0
      %v705 = vadd.f32 %v660, 1.0
      %v706 = vadd.f32 %v662, 1.0
      %v707 = vadd.f32 %v664, 1.0
      %v708 = vadd.f32 %v666, 1.0
      %v709 = vadd.f32 %v668, 1.0
      %v710 = vadd.f32 %v670, 1.0
      %v711 = vadd.f32 %v672, 1.0
      %v712 = vadd.f32 %v674, 1.0
      %v713 = vadd.f32 %v676, 1.0
      %v714 = vadd.f32 %v678, 1.0
      %v715 = vadd.f32 %v680, 1.0
      %v716 = vadd.f32 %v682, 1.0
      %v717 = vadd.f32 %v684, 1.0
      %v718 = vadd.f32 %v686, 1.0
      %v719 = vrcp.pop %v687
      %v720 = vrcp.pop %v688
      %v721 = vrcp.pop %v689
      %v722 = vrcp.pop %v690
      %v723 = vrcp.pop %v691
      %v724 = vrcp.pop %v692
      %v725 = vrcp.pop %v693
      %v726 = vrcp.pop %v694
      %v727 = vrcp.pop %v695
      %v728 = vrcp.pop %v696
      %v729 = vrcp.pop %v697
      %v730 = vrcp.pop %v698
      %v731 = vrcp.pop %v699
      %v732 = vrcp.pop %v700
      %v733 = vrcp.pop %v701
      %v734 = vrcp.pop %v702
      %v735 = vrcp.pop %v703
      %v736 = vrcp.pop %v704
      %v737 = vrcp.pop %v705
      %v738 = vrcp.pop %v706
      %v739 = vrcp.pop %v707
      %v740 = vrcp.pop %v708
      %v741 = vrcp.pop %v709
      %v742 = vrcp.pop %v710
      %v743 = vrcp.pop %v711
      %v744 = vrcp.pop %v712
      %v745 = vrcp.pop %v713
      %v746 = vrcp.pop %v714
      %v747 = vrcp.pop %v715
      %v748 = vrcp.pop %v716
      %v749 = vrcp.pop %v717
      %v750 = vrcp.pop %v718
      %v751 = vmul.f32 %v433, %v719
      %v752 = vmul.f32 %v438, %v720
      %v753 = vmul.f32 %v443, %v721
      %v754 = vmul.f32 %v448, %v722
      %v755 = vmul.f32 %v453, %v723
      %v756 = vmul.f32 %v458, %v724
      %v757 = vmul.f32 %v463, %v725
      %v758 = vmul.f32 %v468, %v726
      %v759 = vmul.f32 %v473, %v727
      %v760 = vmul.f32 %v478, %v728
      %v761 = vmul.f32 %v483, %v729
      %v762 = vmul.f32 %v488, %v730
      %v763 = vmul.f32 %v493, %v731
      %v764 = vmul.f32 %v498, %v732
      %v765 = vmul.f32 %v503, %v733
      %v766 = vmul.f32 %v508, %v734
      %v767 = vmul.f32 %v513, %v735
      %v768 = vmul.f32 %v518, %v736
      %v769 = vmul.f32 %v523, %v737
      %v770 = vmul.f32 %v528, %v738
      %v771 = vmul.f32 %v533, %v739
      %v772 = vmul.f32 %v538, %v740
      %v773 = vmul.f32 %v543, %v741
      %v774 = vmul.f32 %v548, %v742
      %v775 = vmul.f32 %v553, %v743
      %v776 = vmul.f32 %v558, %v744
      %v777 = vmul.f32 %v563, %v745
      %v778 = vmul.f32 %v568, %v746
      %v779 = vmul.f32 %v573, %v747
      %v780 = vmul.f32 %v578, %v748
      %v781 = vmul.f32 %v583, %v749
      %v782 = vmul.f32 %v588, %v750
      %v783 = vld [vmem:[%s3] sm:$0xff]
      %v784 = vld [vmem:[%s3 + $0x8] sm:$0xff]
      %v785 = vld [vmem:[%s3 + $0x10] sm:$0xff]
      %v786 = vld [vmem:[%s3 + $0x18] sm:$0xff]
      %v787 = vld [vmem:[%s3 + $0x20] sm:$0xff]
      %v788 = vld [vmem:[%s3 + $0x28] sm:$0xff]
      %v789 = vld [vmem:[%s3 + $0x30] sm:$0xff]
      %v790 = vld [vmem:[%s3 + $0x38] sm:$0xff]
      %v791 = vld [vmem:[%s3 + $0x40] sm:$0xff]
      %v792 = vld [vmem:[%s3 + $0x48] sm:$0xff]
      %v793 = vld [vmem:[%s3 + $0x50] sm:$0xff]
      %v794 = vld [vmem:[%s3 + $0x58] sm:$0xff]
      %v795 = vld [vmem:[%s3 + $0x60] sm:$0xff]
      %v796 = vld [vmem:[%s3 + $0x68] sm:$0xff]
      %v797 = vld [vmem:[%s3 + $0x70] sm:$0xff]
      %v798 = vld [vmem:[%s3 + $0x78] sm:$0xff]
      %799 = vmatprep.subr.mxu0 0.0
      %800 = vmatpush1.msra.mxu0 %v783
      %801 = vmatprep.subr.mxu0 0.0
      %802 = vmatpush1.msra.mxu0 %v784
      %803 = vmatprep.subr.mxu0 0.0
      %804 = vmatpush1.msra.mxu0 %v785
      %805 = vmatprep.subr.mxu0 0.0
      %806 = vmatpush1.msra.mxu0 %v786
      %807 = vmatprep.subr.mxu0 0.0
      %808 = vmatpush1.msra.mxu0 %v787
      %809 = vmatprep.subr.mxu0 0.0
      %810 = vmatpush1.msra.mxu0 %v788
      %811 = vmatprep.subr.mxu0 0.0
      %812 = vmatpush1.msra.mxu0 %v789
      %813 = vmatprep.subr.mxu0 0.0
      %814 = vmatpush1.msra.mxu0 %v790
      %815 = vmatprep.subr.mxu0 0.0
      %816 = vmatpush1.msra.mxu0 %v791
      %817 = vmatprep.subr.mxu0 0.0
      %818 = vmatpush1.msra.mxu0 %v792
      %819 = vmatprep.subr.mxu0 0.0
      %820 = vmatpush1.msra.mxu0 %v793
      %821 = vmatprep.subr.mxu0 0.0
      %822 = vmatpush1.msra.mxu0 %v794
      %823 = vmatprep.subr.mxu0 0.0
      %824 = vmatpush1.msra.mxu0 %v795
      %825 = vmatprep.subr.mxu0 0.0
      %826 = vmatpush1.msra.mxu0 %v796
      %827 = vmatprep.subr.mxu0 0.0
      %828 = vmatpush1.msra.mxu0 %v797
      %829 = vmatprep.subr.mxu0 0.0
      %830 = vmatpush1.msra.mxu0 %v798
      %831 = vmatprep.subr.mxu0 0.0
      %832 = vmatpush1.msra.mxu0 0.0
      %833 = vmatprep.subr.mxu0 0.0
      %834 = vmatpush1.msra.mxu0 0.0
      %835 = vmatprep.subr.mxu0 0.0
      %836 = vmatpush1.msra.mxu0 0.0
      %837 = vmatprep.subr.mxu0 0.0
      %838 = vmatpush1.msra.mxu0 0.0
      %839 = vmatprep.subr.mxu0 0.0
      %840 = vmatpush1.msra.mxu0 0.0
      %841 = vmatprep.subr.mxu0 0.0
      %842 = vmatpush1.msra.mxu0 0.0
      %843 = vmatprep.subr.mxu0 0.0
      %844 = vmatpush1.msra.mxu0 0.0
      %845 = vmatprep.subr.mxu0 0.0
      %846 = vmatpush1.msra.mxu0 0.0
      %847 = vmatprep.subr.mxu0 0.0
      %848 = vmatpush1.msra.mxu0 0.0
      %849 = vmatprep.subr.mxu0 0.0
      %850 = vmatpush1.msra.mxu0 0.0
      %851 = vmatprep.subr.mxu0 0.0
      %852 = vmatpush1.msra.mxu0 0.0
      %853 = vmatprep.subr.mxu0 0.0
      %854 = vmatpush1.msra.mxu0 0.0
      %855 = vmatprep.subr.mxu0 0.0
      %856 = vmatpush1.msra.mxu0 0.0
      %857 = vmatprep.subr.mxu0 0.0
      %858 = vmatpush1.msra.mxu0 0.0
      %859 = vmatprep.subr.mxu0 0.0
      %860 = vmatpush1.msra.mxu0 0.0
      %861 = vmatprep.subr.mxu0 0.0
      %862 = vmatpush1.msra.mxu0 0.0
      %863 = vmatprep.mubr.f32.mxu0 0.0
      %864 = vmatmul.mubr.f32.gmra.mrb[0].mxu0 %v751
      %v865 = vpop.f32.mrb[0].mxu0
      %v866 = vadd.f32 0.0, %v865
      %v867 = vpop.f32.mrb[0].mxu0
      %868 = vmatprep.mubr.f32.mxu0 0.0
      %869 = vmatmul.mubr.f32.gmra.mrb[0].mxu0 %v752
      %v870 = vpop.f32.mrb[0].mxu0
      %v871 = vadd.f32 0.0, %v870
      %v872 = vpop.f32.mrb[0].mxu0
      %873 = vmatprep.mubr.f32.mxu0 0.0
      %874 = vmatmul.mubr.f32.gmra.mrb[0].mxu0 %v753
      %v875 = vpop.f32.mrb[0].mxu0
      %v876 = vadd.f32 0.0, %v875
      %v877 = vpop.f32.mrb[0].mxu0
      %878 = vmatprep.mubr.f32.mxu0 0.0
      %879 = vmatmul.mubr.f32.gmra.mrb[0].mxu0 %v754
      %v880 = vpop.f32.mrb[0].mxu0
      %v881 = vadd.f32 0.0, %v880
      %v882 = vpop.f32.mrb[0].mxu0
      %883 = vmatprep.mubr.f32.mxu0 0.0
      %884 = vmatmul.mubr.f32.gmra.mrb[0].mxu0 %v755
      %v885 = vpop.f32.mrb[0].mxu0
      %v886 = vadd.f32 0.0, %v885
      %v887 = vpop.f32.mrb[0].mxu0
      %888 = vmatprep.mubr.f32.mxu0 0.0
      %889 = vmatmul.mubr.f32.gmra.mrb[0].mxu0 %v756
      %v890 = vpop.f32.mrb[0].mxu0
      %v891 = vadd.f32 0.0, %v890
      %v892 = vpop.f32.mrb[0].mxu0
      %893 = vmatprep.mubr.f32.mxu0 0.0
      %894 = vmatmul.mubr.f32.gmra.mrb[0].mxu0 %v757
      %v895 = vpop.f32.mrb[0].mxu0
      %v896 = vadd.f32 0.0, %v895
      %v897 = vpop.f32.mrb[0].mxu0
      %898 = vmatprep.mubr.f32.mxu0 0.0
      %899 = vmatmul.mubr.f32.gmra.mrb[0].mxu0 %v758
      %v900 = vpop.f32.mrb[0].mxu0
      %v901 = vadd.f32 0.0, %v900
      %v902 = vpop.f32.mrb[0].mxu0
      %903 = vmatprep.mubr.f32.mxu0 0.0
      %904 = vmatmul.mubr.f32.gmra.mrb[0].mxu0 %v759
      %v905 = vpop.f32.mrb[0].mxu0
      %v906 = vadd.f32 0.0, %v905
      %v907 = vpop.f32.mrb[0].mxu0
      %908 = vmatprep.mubr.f32.mxu0 0.0
      %909 = vmatmul.mubr.f32.gmra.mrb[0].mxu0 %v760
      %v910 = vpop.f32.mrb[0].mxu0
      %v911 = vadd.f32 0.0, %v910
      %v912 = vpop.f32.mrb[0].mxu0
      %913 = vmatprep.mubr.f32.mxu0 0.0
      %914 = vmatmul.mubr.f32.gmra.mrb[0].mxu0 %v761
      %v915 = vpop.f32.mrb[0].mxu0
      %v916 = vadd.f32 0.0, %v915
      %v917 = vpop.f32.mrb[0].mxu0
      %918 = vmatprep.mubr.f32.mxu0 0.0
      %919 = vmatmul.mubr.f32.gmra.mrb[0].mxu0 %v762
      %v920 = vpop.f32.mrb[0].mxu0
      %v921 = vadd.f32 0.0, %v920
      %v922 = vpop.f32.mrb[0].mxu0
      %923 = vmatprep.mubr.f32.mxu0 0.0
      %924 = vmatmul.mubr.f32.gmra.mrb[0].mxu0 %v763
      %v925 = vpop.f32.mrb[0].mxu0
      %v926 = vadd.f32 0.0, %v925
      %v927 = vpop.f32.mrb[0].mxu0
      %928 = vmatprep.mubr.f32.mxu0 0.0
      %929 = vmatmul.mubr.f32.gmra.mrb[0].mxu0 %v764
      %v930 = vpop.f32.mrb[0].mxu0
      %v931 = vadd.f32 0.0, %v930
      %v932 = vpop.f32.mrb[0].mxu0
      %933 = vmatprep.mubr.f32.mxu0 0.0
      %934 = vmatmul.mubr.f32.gmra.mrb[0].mxu0 %v765
      %v935 = vpop.f32.mrb[0].mxu0
      %v936 = vadd.f32 0.0, %v935
      %v937 = vpop.f32.mrb[0].mxu0
      %938 = vmatprep.mubr.f32.mxu0 0.0
      %939 = vmatmul.mubr.f32.gmra.mrb[0].mxu0 %v766
      %v940 = vpop.f32.mrb[0].mxu0
      %v941 = vadd.f32 0.0, %v940
      %v942 = vpop.f32.mrb[0].mxu0
      %943 = vmatprep.mubr.f32.mxu0 0.0
      %944 = vmatmul.mubr.f32.gmra.mrb[0].mxu0 %v767
      %v945 = vpop.f32.mrb[0].mxu0
      %v946 = vadd.f32 0.0, %v945
      %v947 = vpop.f32.mrb[0].mxu0
      %948 = vmatprep.mubr.f32.mxu0 0.0
      %949 = vmatmul.mubr.f32.gmra.mrb[0].mxu0 %v768
      %v950 = vpop.f32.mrb[0].mxu0
      %v951 = vadd.f32 0.0, %v950
      %v952 = vpop.f32.mrb[0].mxu0
      %953 = vmatprep.mubr.f32.mxu0 0.0
      %954 = vmatmul.mubr.f32.gmra.mrb[0].mxu0 %v769
      %v955 = vpop.f32.mrb[0].mxu0
      %v956 = vadd.f32 0.0, %v955
      %v957 = vpop.f32.mrb[0].mxu0
      %958 = vmatprep.mubr.f32.mxu0 0.0
      %959 = vmatmul.mubr.f32.gmra.mrb[0].mxu0 %v770
      %v960 = vpop.f32.mrb[0].mxu0
      %v961 = vadd.f32 0.0, %v960
      %v962 = vpop.f32.mrb[0].mxu0
      %963 = vmatprep.mubr.f32.mxu0 0.0
      %964 = vmatmul.mubr.f32.gmra.mrb[0].mxu0 %v771
      %v965 = vpop.f32.mrb[0].mxu0
      %v966 = vadd.f32 0.0, %v965
      %v967 = vpop.f32.mrb[0].mxu0
      %968 = vmatprep.mubr.f32.mxu0 0.0
      %969 = vmatmul.mubr.f32.gmra.mrb[0].mxu0 %v772
      %v970 = vpop.f32.mrb[0].mxu0
      %v971 = vadd.f32 0.0, %v970
      %v972 = vpop.f32.mrb[0].mxu0
      %973 = vmatprep.mubr.f32.mxu0 0.0
      %974 = vmatmul.mubr.f32.gmra.mrb[0].mxu0 %v773
      %v975 = vpop.f32.mrb[0].mxu0
      %v976 = vadd.f32 0.0, %v975
      %v977 = vpop.f32.mrb[0].mxu0
      %978 = vmatprep.mubr.f32.mxu0 0.0
      %979 = vmatmul.mubr.f32.gmra.mrb[0].mxu0 %v774
      %v980 = vpop.f32.mrb[0].mxu0
      %v981 = vadd.f32 0.0, %v980
      %v982 = vpop.f32.mrb[0].mxu0
      %983 = vmatprep.mubr.f32.mxu0 0.0
      %984 = vmatmul.mubr.f32.gmra.mrb[0].mxu0 %v775
      %v985 = vpop.f32.mrb[0].mxu0
      %v986 = vadd.f32 0.0, %v985
      %v987 = vpop.f32.mrb[0].mxu0
      %988 = vmatprep.mubr.f32.mxu0 0.0
      %989 = vmatmul.mubr.f32.gmra.mrb[0].mxu0 %v776
      %v990 = vpop.f32.mrb[0].mxu0
      %v991 = vadd.f32 0.0, %v990
      %v992 = vpop.f32.mrb[0].mxu0
      %993 = vmatprep.mubr.f32.mxu0 0.0
      %994 = vmatmul.mubr.f32.gmra.mrb[0].mxu0 %v777
      %v995 = vpop.f32.mrb[0].mxu0
      %v996 = vadd.f32 0.0, %v995
      %v997 = vpop.f32.mrb[0].mxu0
      %998 = vmatprep.mubr.f32.mxu0 0.0
      %999 = vmatmul.mubr.f32.gmra.mrb[0].mxu0 %v778
      %v1000 = vpop.f32.mrb[0].mxu0
      %v1001 = vadd.f32 0.0, %v1000
      %v1002 = vpop.f32.mrb[0].mxu0
      %1003 = vmatprep.mubr.f32.mxu0 0.0
      %1004 = vmatmul.mubr.f32.gmra.mrb[0].mxu0 %v779
      %v1005 = vpop.f32.mrb[0].mxu0
      %v1006 = vadd.f32 0.0, %v1005
      %v1007 = vpop.f32.mrb[0].mxu0
      %1008 = vmatprep.mubr.f32.mxu0 0.0
      %1009 = vmatmul.mubr.f32.gmra.mrb[0].mxu0 %v780
      %v1010 = vpop.f32.mrb[0].mxu0
      %v1011 = vadd.f32 0.0, %v1010
      %v1012 = vpop.f32.mrb[0].mxu0
      %1013 = vmatprep.mubr.f32.mxu0 0.0
      %1014 = vmatmul.mubr.f32.gmra.mrb[0].mxu0 %v781
      %v1015 = vpop.f32.mrb[0].mxu0
      %v1016 = vadd.f32 0.0, %v1015
      %v1017 = vpop.f32.mrb[0].mxu0
      %1018 = vmatprep.mubr.f32.mxu0 0.0
      %1019 = vmatmul.mubr.f32.gmra.mrb[0].mxu0 %v782
      %v1020 = vpop.f32.mrb[0].mxu0
      %v1021 = vadd.f32 0.0, %v1020
      %v1022 = vpop.f32.mrb[0].mxu0
      %1023 = vdwg.mxu0
      %1024 = vst [vmem:[#allocation3] sm:$0xff] %v866
      %1025 = vst [vmem:[#allocation3 + $0x8] sm:$0xff] %v871
      %1026 = vst [vmem:[#allocation3 + $0x10] sm:$0xff] %v876
      %1027 = vst [vmem:[#allocation3 + $0x18] sm:$0xff] %v881
      %1028 = vst [vmem:[#allocation3 + $0x20] sm:$0xff] %v886
      %1029 = vst [vmem:[#allocation3 + $0x28] sm:$0xff] %v891
      %1030 = vst [vmem:[#allocation3 + $0x30] sm:$0xff] %v896
      %1031 = vst [vmem:[#allocation3 + $0x38] sm:$0xff] %v901
      %1032 = vst [vmem:[#allocation3 + $0x40] sm:$0xff] %v906
      %1033 = vst [vmem:[#allocation3 + $0x48] sm:$0xff] %v911
      %1034 = vst [vmem:[#allocation3 + $0x50] sm:$0xff] %v916
      %1035 = vst [vmem:[#allocation3 + $0x58] sm:$0xff] %v921
      %1036 = vst [vmem:[#allocation3 + $0x60] sm:$0xff] %v926
      %1037 = vst [vmem:[#allocation3 + $0x68] sm:$0xff] %v931
      %1038 = vst [vmem:[#allocation3 + $0x70] sm:$0xff] %v936
      %1039 = vst [vmem:[#allocation3 + $0x78] sm:$0xff] %v941
      %1040 = vst [vmem:[#allocation3 + $0x80] sm:$0xff] %v946
      %1041 = vst [vmem:[#allocation3 + $0x88] sm:$0xff] %v951
      %1042 = vst [vmem:[#allocation3 + $0x90] sm:$0xff] %v956
      %1043 = vst [vmem:[#allocation3 + $0x98] sm:$0xff] %v961
      %1044 = vst [vmem:[#allocation3 + $0xa0] sm:$0xff] %v966
      %1045 = vst [vmem:[#allocation3 + $0xa8] sm:$0xff] %v971
      %1046 = vst [vmem:[#allocation3 + $0xb0] sm:$0xff] %v976
      %1047 = vst [vmem:[#allocation3 + $0xb8] sm:$0xff] %v981
      %1048 = vst [vmem:[#allocation3 + $0xc0] sm:$0xff] %v986
      %1049 = vst [vmem:[#allocation3 + $0xc8] sm:$0xff] %v991
      %1050 = vst [vmem:[#allocation3 + $0xd0] sm:$0xff] %v996
      %1051 = vst [vmem:[#allocation3 + $0xd8] sm:$0xff] %v1001
      %1052 = vst [vmem:[#allocation3 + $0xe0] sm:$0xff] %v1006
      %1053 = vst [vmem:[#allocation3 + $0xe8] sm:$0xff] %v1011
      %1054 = vst [vmem:[#allocation3 + $0xf0] sm:$0xff] %v1016
      %1055 = vst [vmem:[#allocation3 + $0xf8] sm:$0xff] %v1021
      %1056 = vst [vmem:[#allocation2] sm:$0xff] -inf
      %1057 = vst [vmem:[#allocation2 + $0x8] sm:$0xff] -inf
      %1058 = vst [vmem:[#allocation2 + $0x10] sm:$0xff] -inf
      %1059 = vst [vmem:[#allocation2 + $0x18] sm:$0xff] -inf
      %1060 = vst [vmem:[#allocation2 + $0x20] sm:$0xff] -inf
      %1061 = vst [vmem:[#allocation2 + $0x28] sm:$0xff] -inf
      %1062 = vst [vmem:[#allocation2 + $0x30] sm:$0xff] -inf
      %1063 = vst [vmem:[#allocation2 + $0x38] sm:$0xff] -inf
      %1064 = vst [vmem:[#allocation2 + $0x40] sm:$0xff] -inf
      %1065 = vst [vmem:[#allocation2 + $0x48] sm:$0xff] -inf
      %1066 = vst [vmem:[#allocation2 + $0x50] sm:$0xff] -inf
      %1067 = vst [vmem:[#allocation2 + $0x58] sm:$0xff] -inf
      %1068 = vst [vmem:[#allocation2 + $0x60] sm:$0xff] -inf
      %1069 = vst [vmem:[#allocation2 + $0x68] sm:$0xff] -inf
      %1070 = vst [vmem:[#allocation2 + $0x70] sm:$0xff] -inf
      %1071 = vst [vmem:[#allocation2 + $0x78] sm:$0xff] -inf
      %1072 = vst [vmem:[#allocation2 + $0x80] sm:$0xff] -inf
      %1073 = vst [vmem:[#allocation2 + $0x88] sm:$0xff] -inf
      %1074 = vst [vmem:[#allocation2 + $0x90] sm:$0xff] -inf
      %1075 = vst [vmem:[#allocation2 + $0x98] sm:$0xff] -inf
      %1076 = vst [vmem:[#allocation2 + $0xa0] sm:$0xff] -inf
      %1077 = vst [vmem:[#allocation2 + $0xa8] sm:$0xff] -inf
      %1078 = vst [vmem:[#allocation2 + $0xb0] sm:$0xff] -inf
      %1079 = vst [vmem:[#allocation2 + $0xb8] sm:$0xff] -inf
      %1080 = vst [vmem:[#allocation2 + $0xc0] sm:$0xff] -inf
      %1081 = vst [vmem:[#allocation2 + $0xc8] sm:$0xff] -inf
      %1082 = vst [vmem:[#allocation2 + $0xd0] sm:$0xff] -inf
      %1083 = vst [vmem:[#allocation2 + $0xd8] sm:$0xff] -inf
      %1084 = vst [vmem:[#allocation2 + $0xe0] sm:$0xff] -inf
      %1085 = vst [vmem:[#allocation2 + $0xe8] sm:$0xff] -inf
      %1086 = vst [vmem:[#allocation2 + $0xf0] sm:$0xff] -inf
      %1087 = vst [vmem:[#allocation2 + $0xf8] sm:$0xff] -inf
      %1088 = vst [vmem:[#allocation2 + $0x100] sm:$0xff] -inf
      %1089 = vst [vmem:[#allocation2 + $0x108] sm:$0xff] -inf
      %1090 = vst [vmem:[#allocation2 + $0x110] sm:$0xff] -inf
      %1091 = vst [vmem:[#allocation2 + $0x118] sm:$0xff] -inf
      %1092 = vst [vmem:[#allocation2 + $0x120] sm:$0xff] -inf
      %1093 = vst [vmem:[#allocation2 + $0x128] sm:$0xff] -inf
      %1094 = vst [vmem:[#allocation2 + $0x130] sm:$0xff] -inf
      %1095 = vst [vmem:[#allocation2 + $0x138] sm:$0xff] -inf
      %1096 = vst [vmem:[#allocation2 + $0x140] sm:$0xff] -inf
      %1097 = vst [vmem:[#allocation2 + $0x148] sm:$0xff] -inf
      %1098 = vst [vmem:[#allocation2 + $0x150] sm:$0xff] -inf
      %1099 = vst [vmem:[#allocation2 + $0x158] sm:$0xff] -inf
      %1100 = vst [vmem:[#allocation2 + $0x160] sm:$0xff] -inf
      %1101 = vst [vmem:[#allocation2 + $0x168] sm:$0xff] -inf
      %1102 = vst [vmem:[#allocation2 + $0x170] sm:$0xff] -inf
      %1103 = vst [vmem:[#allocation2 + $0x178] sm:$0xff] -inf
      %1104 = vst [vmem:[#allocation2 + $0x180] sm:$0xff] -inf
      %1105 = vst [vmem:[#allocation2 + $0x188] sm:$0xff] -inf
      %1106 = vst [vmem:[#allocation2 + $0x190] sm:$0xff] -inf
      %1107 = vst [vmem:[#allocation2 + $0x198] sm:$0xff] -inf
      %1108 = vst [vmem:[#allocation2 + $0x1a0] sm:$0xff] -inf
      %1109 = vst [vmem:[#allocation2 + $0x1a8] sm:$0xff] -inf
      %1110 = vst [vmem:[#allocation2 + $0x1b0] sm:$0xff] -inf
      %1111 = vst [vmem:[#allocation2 + $0x1b8] sm:$0xff] -inf
      %1112 = vst [vmem:[#allocation2 + $0x1c0] sm:$0xff] -inf
      %1113 = vst [vmem:[#allocation2 + $0x1c8] sm:$0xff] -inf
      %1114 = vst [vmem:[#allocation2 + $0x1d0] sm:$0xff] -inf
      %1115 = vst [vmem:[#allocation2 + $0x1d8] sm:$0xff] -inf
      %s1116 = scalar_lea.vmem [#allocation2], 48
      %1117 = vst [vmem:[%s1116 + $0x2] sm:$0xff] %v751
      %1118 = vst [vmem:[%s1116 + $0xa] sm:$0xff] %v752
      %1119 = vst [vmem:[%s1116 + $0x1a] sm:$0xff] %v753
      %1120 = vst [vmem:[%s1116 + $0x22] sm:$0xff] %v754
      %1121 = vst [vmem:[%s1116 + $0x32] sm:$0xff] %v755
      %1122 = vst [vmem:[%s1116 + $0x3a] sm:$0xff] %v756
      %1123 = vst [vmem:[%s1116 + $0x4a] sm:$0xff] %v757
      %1124 = vst [vmem:[%s1116 + $0x52] sm:$0xff] %v758
      %1125 = vst [vmem:[%s1116 + $0x62] sm:$0xff] %v759
      %1126 = vst [vmem:[%s1116 + $0x6a] sm:$0xff] %v760
      %1127 = vst [vmem:[%s1116 + $0x7a] sm:$0xff] %v761
      %1128 = vst [vmem:[%s1116 + $0x82] sm:$0xff] %v762
      %1129 = vst [vmem:[%s1116 + $0x92] sm:$0xff] %v763
      %1130 = vst [vmem:[%s1116 + $0x9a] sm:$0xff] %v764
      %1131 = vst [vmem:[%s1116 + $0xaa] sm:$0xff] %v765
      %1132 = vst [vmem:[%s1116 + $0xb2] sm:$0xff] %v766
      %1133 = vst [vmem:[%s1116 + $0xc2] sm:$0xff] %v767
      %1134 = vst [vmem:[%s1116 + $0xca] sm:$0xff] %v768
      %1135 = vst [vmem:[%s1116 + $0xda] sm:$0xff] %v769
      %1136 = vst [vmem:[%s1116 + $0xe2] sm:$0xff] %v770
      %1137 = vst [vmem:[%s1116 + $0xf2] sm:$0xff] %v771
      %1138 = vst [vmem:[%s1116 + $0xfa] sm:$0xff] %v772
      %1139 = vst [vmem:[%s1116 + $0x10a] sm:$0xff] %v773
      %1140 = vst [vmem:[%s1116 + $0x112] sm:$0xff] %v774
      %1141 = vst [vmem:[%s1116 + $0x122] sm:$0xff] %v775
      %1142 = vst [vmem:[%s1116 + $0x12a] sm:$0xff] %v776
      %1143 = vst [vmem:[%s1116 + $0x13a] sm:$0xff] %v777
      %1144 = vst [vmem:[%s1116 + $0x142] sm:$0xff] %v778
      %1145 = vst [vmem:[%s1116 + $0x152] sm:$0xff] %v779
      %1146 = vst [vmem:[%s1116 + $0x15a] sm:$0xff] %v780
      %1147 = vst [vmem:[%s1116 + $0x16a] sm:$0xff] %v781
      %1148 = vst [vmem:[%s1116 + $0x172] sm:$0xff] %v782
      %v1149 = vld [vmem:[#allocation2] sm:$0xff]
      %v1150 = vld [vmem:[#allocation2 + $0x8] sm:$0xff]
      %v1151 = vld [vmem:[#allocation2 + $0x10] sm:$0xff]
      %v1152 = vld [vmem:[#allocation2 + $0x18] sm:$0xff]
      %v1153 = vld [vmem:[#allocation2 + $0x20] sm:$0xff]
      %v1154 = vld [vmem:[#allocation2 + $0x28] sm:$0xff]
      %v1155 = vld [vmem:[#allocation2 + $0x30] sm:$0xff]
      %v1156 = vld [vmem:[#allocation2 + $0x38] sm:$0xff]
      %v1157 = vld [vmem:[#allocation2 + $0x40] sm:$0xff]
      %v1158 = vld [vmem:[#allocation2 + $0x48] sm:$0xff]
      %v1159 = vld [vmem:[#allocation2 + $0x50] sm:$0xff]
      %v1160 = vld [vmem:[#allocation2 + $0x58] sm:$0xff]
      %v1161 = vld [vmem:[#allocation2 + $0x60] sm:$0xff]
      %v1162 = vld [vmem:[#allocation2 + $0x68] sm:$0xff]
      %v1163 = vld [vmem:[#allocation2 + $0x70] sm:$0xff]
      %v1164 = vld [vmem:[#allocation2 + $0x78] sm:$0xff]
      %v1165 = vld [vmem:[#allocation2 + $0x80] sm:$0xff]
      %v1166 = vld [vmem:[#allocation2 + $0x88] sm:$0xff]
      %v1167 = vld [vmem:[#allocation2 + $0x90] sm:$0xff]
      %v1168 = vld [vmem:[#allocation2 + $0x98] sm:$0xff]
      %v1169 = vld [vmem:[#allocation2 + $0xa0] sm:$0xff]
      %v1170 = vld [vmem:[#allocation2 + $0xa8] sm:$0xff]
      %v1171 = vld [vmem:[#allocation2 + $0xb0] sm:$0xff]
      %v1172 = vld [vmem:[#allocation2 + $0xb8] sm:$0xff]
      %v1173 = vld [vmem:[#allocation2 + $0xc0] sm:$0xff]
      %v1174 = vld [vmem:[#allocation2 + $0xc8] sm:$0xff]
      %v1175 = vld [vmem:[#allocation2 + $0xd0] sm:$0xff]
      %v1176 = vld [vmem:[#allocation2 + $0xd8] sm:$0xff]
      %v1177 = vld [vmem:[#allocation2 + $0xe0] sm:$0xff]
      %v1178 = vld [vmem:[#allocation2 + $0xe8] sm:$0xff]
      %v1179 = vld [vmem:[#allocation2 + $0xf0] sm:$0xff]
      %v1180 = vld [vmem:[#allocation2 + $0xf8] sm:$0xff]
      %v1181 = vld [vmem:[#allocation2 + $0x100] sm:$0xff]
      %v1182 = vld [vmem:[#allocation2 + $0x108] sm:$0xff]
      %v1183 = vld [vmem:[#allocation2 + $0x110] sm:$0xff]
      %v1184 = vld [vmem:[#allocation2 + $0x118] sm:$0xff]
      %v1185 = vld [vmem:[#allocation2 + $0x120] sm:$0xff]
      %v1186 = vld [vmem:[#allocation2 + $0x128] sm:$0xff]
      %v1187 = vld [vmem:[#allocation2 + $0x130] sm:$0xff]
      %v1188 = vld [vmem:[#allocation2 + $0x138] sm:$0xff]
      %v1189 = vld [vmem:[#allocation2 + $0x140] sm:$0xff]
      %v1190 = vld [vmem:[#allocation2 + $0x148] sm:$0xff]
      %v1191 = vld [vmem:[#allocation2 + $0x150] sm:$0xff]
      %v1192 = vld [vmem:[#allocation2 + $0x158] sm:$0xff]
      %v1193 = vld [vmem:[#allocation2 + $0x160] sm:$0xff]
      %v1194 = vld [vmem:[#allocation2 + $0x168] sm:$0xff]
      %v1195 = vld [vmem:[#allocation2 + $0x170] sm:$0xff]
      %v1196 = vld [vmem:[#allocation2 + $0x178] sm:$0xff]
      %s1197 = scalar_lea.vmem [#allocation2], 24
      %v1198 = vld [vmem:[%s1197] sm:$0xff]
      %v1199 = vld [vmem:[%s1197 + $0x8] sm:$0xff]
      %v1200 = vld [vmem:[%s1197 + $0x10] sm:$0xff]
      %v1201 = vld [vmem:[%s1197 + $0x18] sm:$0xff]
      %v1202 = vld [vmem:[%s1197 + $0x20] sm:$0xff]
      %v1203 = vld [vmem:[%s1197 + $0x28] sm:$0xff]
      %v1204 = vld [vmem:[%s1197 + $0x30] sm:$0xff]
      %v1205 = vld [vmem:[%s1197 + $0x38] sm:$0xff]
      %v1206 = vld [vmem:[%s1197 + $0x40] sm:$0xff]
      %v1207 = vld [vmem:[%s1197 + $0x48] sm:$0xff]
      %v1208 = vld [vmem:[%s1197 + $0x50] sm:$0xff]
      %v1209 = vld [vmem:[%s1197 + $0x58] sm:$0xff]
      %v1210 = vld [vmem:[%s1197 + $0x60] sm:$0xff]
      %v1211 = vld [vmem:[%s1197 + $0x68] sm:$0xff]
      %v1212 = vld [vmem:[%s1197 + $0x70] sm:$0xff]
      %v1213 = vld [vmem:[%s1197 + $0x78] sm:$0xff]
      %v1214 = vld [vmem:[%s1197 + $0x80] sm:$0xff]
      %v1215 = vld [vmem:[%s1197 + $0x88] sm:$0xff]
      %v1216 = vld [vmem:[%s1197 + $0x90] sm:$0xff]
      %v1217 = vld [vmem:[%s1197 + $0x98] sm:$0xff]
      %v1218 = vld [vmem:[%s1197 + $0xa0] sm:$0xff]
      %v1219 = vld [vmem:[%s1197 + $0xa8] sm:$0xff]
      %v1220 = vld [vmem:[%s1197 + $0xb0] sm:$0xff]
      %v1221 = vld [vmem:[%s1197 + $0xb8] sm:$0xff]
      %v1222 = vld [vmem:[%s1197 + $0xc0] sm:$0xff]
      %v1223 = vld [vmem:[%s1197 + $0xc8] sm:$0xff]
      %v1224 = vld [vmem:[%s1197 + $0xd0] sm:$0xff]
      %v1225 = vld [vmem:[%s1197 + $0xd8] sm:$0xff]
      %v1226 = vld [vmem:[%s1197 + $0xe0] sm:$0xff]
      %v1227 = vld [vmem:[%s1197 + $0xe8] sm:$0xff]
      %v1228 = vld [vmem:[%s1197 + $0xf0] sm:$0xff]
      %v1229 = vld [vmem:[%s1197 + $0xf8] sm:$0xff]
      %v1230 = vld [vmem:[%s1197 + $0x100] sm:$0xff]
      %v1231 = vld [vmem:[%s1197 + $0x108] sm:$0xff]
      %v1232 = vld [vmem:[%s1197 + $0x110] sm:$0xff]
      %v1233 = vld [vmem:[%s1197 + $0x118] sm:$0xff]
      %v1234 = vld [vmem:[%s1197 + $0x120] sm:$0xff]
      %v1235 = vld [vmem:[%s1197 + $0x128] sm:$0xff]
      %v1236 = vld [vmem:[%s1197 + $0x130] sm:$0xff]
      %v1237 = vld [vmem:[%s1197 + $0x138] sm:$0xff]
      %v1238 = vld [vmem:[%s1197 + $0x140] sm:$0xff]
      %v1239 = vld [vmem:[%s1197 + $0x148] sm:$0xff]
      %v1240 = vld [vmem:[%s1197 + $0x150] sm:$0xff]
      %v1241 = vld [vmem:[%s1197 + $0x158] sm:$0xff]
      %v1242 = vld [vmem:[%s1197 + $0x160] sm:$0xff]
      %v1243 = vld [vmem:[%s1197 + $0x168] sm:$0xff]
      %v1244 = vld [vmem:[%s1197 + $0x170] sm:$0xff]
      %v1245 = vld [vmem:[%s1197 + $0x178] sm:$0xff]
      %v1246 = vmax.f32 %v1149, %v1198
      %v1247 = vmax.f32 %v1150, %v1199
      %v1248 = vmax.f32 %v1151, %v1200
      %v1249 = vmax.f32 %v1152, %v1201
      %v1250 = vmax.f32 %v1153, %v1202
      %v1251 = vmax.f32 %v1154, %v1203
      %v1252 = vmax.f32 %v1155, %v1204
      %v1253 = vmax.f32 %v1156, %v1205
      %v1254 = vmax.f32 %v1157, %v1206
      %v1255 = vmax.f32 %v1158, %v1207
      %v1256 = vmax.f32 %v1159, %v1208
      %v1257 = vmax.f32 %v1160, %v1209
      %v1258 = vmax.f32 %v1161, %v1210
      %v1259 = vmax.f32 %v1162, %v1211
      %v1260 = vmax.f32 %v1163, %v1212
      %v1261 = vmax.f32 %v1164, %v1213
      %v1262 = vmax.f32 %v1165, %v1214
      %v1263 = vmax.f32 %v1166, %v1215
      %v1264 = vmax.f32 %v1167, %v1216
      %v1265 = vmax.f32 %v1168, %v1217
      %v1266 = vmax.f32 %v1169, %v1218
      %v1267 = vmax.f32 %v1170, %v1219
      %v1268 = vmax.f32 %v1171, %v1220
      %v1269 = vmax.f32 %v1172, %v1221
      %v1270 = vmax.f32 %v1173, %v1222
      %v1271 = vmax.f32 %v1174, %v1223
      %v1272 = vmax.f32 %v1175, %v1224
      %v1273 = vmax.f32 %v1176, %v1225
      %v1274 = vmax.f32 %v1177, %v1226
      %v1275 = vmax.f32 %v1178, %v1227
      %v1276 = vmax.f32 %v1179, %v1228
      %v1277 = vmax.f32 %v1180, %v1229
      %v1278 = vmax.f32 %v1181, %v1230
      %v1279 = vmax.f32 %v1182, %v1231
      %v1280 = vmax.f32 %v1183, %v1232
      %v1281 = vmax.f32 %v1184, %v1233
      %v1282 = vmax.f32 %v1185, %v1234
      %v1283 = vmax.f32 %v1186, %v1235
      %v1284 = vmax.f32 %v1187, %v1236
      %v1285 = vmax.f32 %v1188, %v1237
      %v1286 = vmax.f32 %v1189, %v1238
      %v1287 = vmax.f32 %v1190, %v1239
      %v1288 = vmax.f32 %v1191, %v1240
      %v1289 = vmax.f32 %v1192, %v1241
      %v1290 = vmax.f32 %v1193, %v1242
      %v1291 = vmax.f32 %v1194, %v1243
      %v1292 = vmax.f32 %v1195, %v1244
      %v1293 = vmax.f32 %v1196, %v1245
      %v1294 = vld [vmem:[%s1116] sm:$0xff]
      %v1295 = vld [vmem:[%s1116 + $0x8] sm:$0xff]
      %v1296 = vld [vmem:[%s1116 + $0x10] sm:$0xff]
      %v1297 = vld [vmem:[%s1116 + $0x18] sm:$0xff]
      %v1298 = vld [vmem:[%s1116 + $0x20] sm:$0xff]
      %v1299 = vld [vmem:[%s1116 + $0x28] sm:$0xff]
      %v1300 = vld [vmem:[%s1116 + $0x30] sm:$0xff]
      %v1301 = vld [vmem:[%s1116 + $0x38] sm:$0xff]
      %v1302 = vld [vmem:[%s1116 + $0x40] sm:$0xff]
      %v1303 = vld [vmem:[%s1116 + $0x48] sm:$0xff]
      %v1304 = vld [vmem:[%s1116 + $0x50] sm:$0xff]
      %v1305 = vld [vmem:[%s1116 + $0x58] sm:$0xff]
      %v1306 = vld [vmem:[%s1116 + $0x60] sm:$0xff]
      %v1307 = vld [vmem:[%s1116 + $0x68] sm:$0xff]
      %v1308 = vld [vmem:[%s1116 + $0x70] sm:$0xff]
      %v1309 = vld [vmem:[%s1116 + $0x78] sm:$0xff]
      %v1310 = vld [vmem:[%s1116 + $0x80] sm:$0xff]
      %v1311 = vld [vmem:[%s1116 + $0x88] sm:$0xff]
      %v1312 = vld [vmem:[%s1116 + $0x90] sm:$0xff]
      %v1313 = vld [vmem:[%s1116 + $0x98] sm:$0xff]
      %v1314 = vld [vmem:[%s1116 + $0xa0] sm:$0xff]
      %v1315 = vld [vmem:[%s1116 + $0xa8] sm:$0xff]
      %v1316 = vld [vmem:[%s1116 + $0xb0] sm:$0xff]
      %v1317 = vld [vmem:[%s1116 + $0xb8] sm:$0xff]
      %v1318 = vld [vmem:[%s1116 + $0xc0] sm:$0xff]
      %v1319 = vld [vmem:[%s1116 + $0xc8] sm:$0xff]
      %v1320 = vld [vmem:[%s1116 + $0xd0] sm:$0xff]
      %v1321 = vld [vmem:[%s1116 + $0xd8] sm:$0xff]
      %v1322 = vld [vmem:[%s1116 + $0xe0] sm:$0xff]
      %v1323 = vld [vmem:[%s1116 + $0xe8] sm:$0xff]
      %v1324 = vld [vmem:[%s1116 + $0xf0] sm:$0xff]
      %v1325 = vld [vmem:[%s1116 + $0xf8] sm:$0xff]
      %v1326 = vld [vmem:[%s1116 + $0x100] sm:$0xff]
      %v1327 = vld [vmem:[%s1116 + $0x108] sm:$0xff]
      %v1328 = vld [vmem:[%s1116 + $0x110] sm:$0xff]
      %v1329 = vld [vmem:[%s1116 + $0x118] sm:$0xff]
      %v1330 = vld [vmem:[%s1116 + $0x120] sm:$0xff]
      %v1331 = vld [vmem:[%s1116 + $0x128] sm:$0xff]
      %v1332 = vld [vmem:[%s1116 + $0x130] sm:$0xff]
      %v1333 = vld [vmem:[%s1116 + $0x138] sm:$0xff]
      %v1334 = vld [vmem:[%s1116 + $0x140] sm:$0xff]
      %v1335 = vld [vmem:[%s1116 + $0x148] sm:$0xff]
      %v1336 = vld [vmem:[%s1116 + $0x150] sm:$0xff]
      %v1337 = vld [vmem:[%s1116 + $0x158] sm:$0xff]
      %v1338 = vld [vmem:[%s1116 + $0x160] sm:$0xff]
      %v1339 = vld [vmem:[%s1116 + $0x168] sm:$0xff]
      %v1340 = vld [vmem:[%s1116 + $0x170] sm:$0xff]
      %v1341 = vld [vmem:[%s1116 + $0x178] sm:$0xff]
      %v1342 = vmax.f32 %v1246, %v1294
      %v1343 = vmax.f32 %v1247, %v1295
      %v1344 = vmax.f32 %v1248, %v1296
      %v1345 = vmax.f32 %v1249, %v1297
      %v1346 = vmax.f32 %v1250, %v1298
      %v1347 = vmax.f32 %v1251, %v1299
      %v1348 = vmax.f32 %v1252, %v1300
      %v1349 = vmax.f32 %v1253, %v1301
      %v1350 = vmax.f32 %v1254, %v1302
      %v1351 = vmax.f32 %v1255, %v1303
      %v1352 = vmax.f32 %v1256, %v1304
      %v1353 = vmax.f32 %v1257, %v1305
      %v1354 = vmax.f32 %v1258, %v1306
      %v1355 = vmax.f32 %v1259, %v1307
      %v1356 = vmax.f32 %v1260, %v1308
      %v1357 = vmax.f32 %v1261, %v1309
      %v1358 = vmax.f32 %v1262, %v1310
      %v1359 = vmax.f32 %v1263, %v1311
      %v1360 = vmax.f32 %v1264, %v1312
      %v1361 = vmax.f32 %v1265, %v1313
      %v1362 = vmax.f32 %v1266, %v1314
      %v1363 = vmax.f32 %v1267, %v1315
      %v1364 = vmax.f32 %v1268, %v1316
      %v1365 = vmax.f32 %v1269, %v1317
      %v1366 = vmax.f32 %v1270, %v1318
      %v1367 = vmax.f32 %v1271, %v1319
      %v1368 = vmax.f32 %v1272, %v1320
      %v1369 = vmax.f32 %v1273, %v1321
      %v1370 = vmax.f32 %v1274, %v1322
      %v1371 = vmax.f32 %v1275, %v1323
      %v1372 = vmax.f32 %v1276, %v1324
      %v1373 = vmax.f32 %v1277, %v1325
      %v1374 = vmax.f32 %v1278, %v1326
      %v1375 = vmax.f32 %v1279, %v1327
      %v1376 = vmax.f32 %v1280, %v1328
      %v1377 = vmax.f32 %v1281, %v1329
      %v1378 = vmax.f32 %v1282, %v1330
      %v1379 = vmax.f32 %v1283, %v1331
      %v1380 = vmax.f32 %v1284, %v1332
      %v1381 = vmax.f32 %v1285, %v1333
      %v1382 = vmax.f32 %v1286, %v1334
      %v1383 = vmax.f32 %v1287, %v1335
      %v1384 = vmax.f32 %v1288, %v1336
      %v1385 = vmax.f32 %v1289, %v1337
      %v1386 = vmax.f32 %v1290, %v1338
      %v1387 = vmax.f32 %v1291, %v1339
      %v1388 = vmax.f32 %v1292, %v1340
      %v1389 = vmax.f32 %v1293, %v1341
      %s1390 = scalar_lea.vmem [#allocation2], 72
      %v1391 = vld [vmem:[%s1390] sm:$0xff]
      %v1392 = vld [vmem:[%s1390 + $0x8] sm:$0xff]
      %v1393 = vld [vmem:[%s1390 + $0x10] sm:$0xff]
      %v1394 = vld [vmem:[%s1390 + $0x18] sm:$0xff]
      %v1395 = vld [vmem:[%s1390 + $0x20] sm:$0xff]
      %v1396 = vld [vmem:[%s1390 + $0x28] sm:$0xff]
      %v1397 = vld [vmem:[%s1390 + $0x30] sm:$0xff]
      %v1398 = vld [vmem:[%s1390 + $0x38] sm:$0xff]
      %v1399 = vld [vmem:[%s1390 + $0x40] sm:$0xff]
      %v1400 = vld [vmem:[%s1390 + $0x48] sm:$0xff]
      %v1401 = vld [vmem:[%s1390 + $0x50] sm:$0xff]
      %v1402 = vld [vmem:[%s1390 + $0x58] sm:$0xff]
      %v1403 = vld [vmem:[%s1390 + $0x60] sm:$0xff]
      %v1404 = vld [vmem:[%s1390 + $0x68] sm:$0xff]
      %v1405 = vld [vmem:[%s1390 + $0x70] sm:$0xff]
      %v1406 = vld [vmem:[%s1390 + $0x78] sm:$0xff]
      %v1407 = vld [vmem:[%s1390 + $0x80] sm:$0xff]
      %v1408 = vld [vmem:[%s1390 + $0x88] sm:$0xff]
      %v1409 = vld [vmem:[%s1390 + $0x90] sm:$0xff]
      %v1410 = vld [vmem:[%s1390 + $0x98] sm:$0xff]
      %v1411 = vld [vmem:[%s1390 + $0xa0] sm:$0xff]
      %v1412 = vld [vmem:[%s1390 + $0xa8] sm:$0xff]
      %v1413 = vld [vmem:[%s1390 + $0xb0] sm:$0xff]
      %v1414 = vld [vmem:[%s1390 + $0xb8] sm:$0xff]
      %v1415 = vld [vmem:[%s1390 + $0xc0] sm:$0xff]
      %v1416 = vld [vmem:[%s1390 + $0xc8] sm:$0xff]
      %v1417 = vld [vmem:[%s1390 + $0xd0] sm:$0xff]
      %v1418 = vld [vmem:[%s1390 + $0xd8] sm:$0xff]
      %v1419 = vld [vmem:[%s1390 + $0xe0] sm:$0xff]
      %v1420 = vld [vmem:[%s1390 + $0xe8] sm:$0xff]
      %v1421 = vld [vmem:[%s1390 + $0xf0] sm:$0xff]
      %v1422 = vld [vmem:[%s1390 + $0xf8] sm:$0xff]
      %v1423 = vld [vmem:[%s1390 + $0x100] sm:$0xff]
      %v1424 = vld [vmem:[%s1390 + $0x108] sm:$0xff]
      %v1425 = vld [vmem:[%s1390 + $0x110] sm:$0xff]
      %v1426 = vld [vmem:[%s1390 + $0x118] sm:$0xff]
      %v1427 = vld [vmem:[%s1390 + $0x120] sm:$0xff]
      %v1428 = vld [vmem:[%s1390 + $0x128] sm:$0xff]
      %v1429 = vld [vmem:[%s1390 + $0x130] sm:$0xff]
      %v1430 = vld [vmem:[%s1390 + $0x138] sm:$0xff]
      %v1431 = vld [vmem:[%s1390 + $0x140] sm:$0xff]
      %v1432 = vld [vmem:[%s1390 + $0x148] sm:$0xff]
      %v1433 = vld [vmem:[%s1390 + $0x150] sm:$0xff]
      %v1434 = vld [vmem:[%s1390 + $0x158] sm:$0xff]
      %v1435 = vld [vmem:[%s1390 + $0x160] sm:$0xff]
      %v1436 = vld [vmem:[%s1390 + $0x168] sm:$0xff]
      %v1437 = vld [vmem:[%s1390 + $0x170] sm:$0xff]
      %v1438 = vld [vmem:[%s1390 + $0x178] sm:$0xff]
      %v1439 = vmax.f32 %v1342, %v1391
      %v1440 = vmax.f32 %v1343, %v1392
      %v1441 = vmax.f32 %v1344, %v1393
      %v1442 = vmax.f32 %v1345, %v1394
      %v1443 = vmax.f32 %v1346, %v1395
      %v1444 = vmax.f32 %v1347, %v1396
      %v1445 = vmax.f32 %v1348, %v1397
      %v1446 = vmax.f32 %v1349, %v1398
      %v1447 = vmax.f32 %v1350, %v1399
      %v1448 = vmax.f32 %v1351, %v1400
      %v1449 = vmax.f32 %v1352, %v1401
      %v1450 = vmax.f32 %v1353, %v1402
      %v1451 = vmax.f32 %v1354, %v1403
      %v1452 = vmax.f32 %v1355, %v1404
      %v1453 = vmax.f32 %v1356, %v1405
      %v1454 = vmax.f32 %v1357, %v1406
      %v1455 = vmax.f32 %v1358, %v1407
      %v1456 = vmax.f32 %v1359, %v1408
      %v1457 = vmax.f32 %v1360, %v1409
      %v1458 = vmax.f32 %v1361, %v1410
      %v1459 = vmax.f32 %v1362, %v1411
      %v1460 = vmax.f32 %v1363, %v1412
      %v1461 = vmax.f32 %v1364, %v1413
      %v1462 = vmax.f32 %v1365, %v1414
      %v1463 = vmax.f32 %v1366, %v1415
      %v1464 = vmax.f32 %v1367, %v1416
      %v1465 = vmax.f32 %v1368, %v1417
      %v1466 = vmax.f32 %v1369, %v1418
      %v1467 = vmax.f32 %v1370, %v1419
      %v1468 = vmax.f32 %v1371, %v1420
      %v1469 = vmax.f32 %v1372, %v1421
      %v1470 = vmax.f32 %v1373, %v1422
      %v1471 = vmax.f32 %v1374, %v1423
      %v1472 = vmax.f32 %v1375, %v1424
      %v1473 = vmax.f32 %v1376, %v1425
      %v1474 = vmax.f32 %v1377, %v1426
      %v1475 = vmax.f32 %v1378, %v1427
      %v1476 = vmax.f32 %v1379, %v1428
      %v1477 = vmax.f32 %v1380, %v1429
      %v1478 = vmax.f32 %v1381, %v1430
      %v1479 = vmax.f32 %v1382, %v1431
      %v1480 = vmax.f32 %v1383, %v1432
      %v1481 = vmax.f32 %v1384, %v1433
      %v1482 = vmax.f32 %v1385, %v1434
      %v1483 = vmax.f32 %v1386, %v1435
      %v1484 = vmax.f32 %v1387, %v1436
      %v1485 = vmax.f32 %v1388, %v1437
      %v1486 = vmax.f32 %v1389, %v1438
      %s1487 = scalar_lea.vmem [#allocation2], 96
      %v1488 = vld [vmem:[%s1487] sm:$0xff]
      %v1489 = vld [vmem:[%s1487 + $0x8] sm:$0xff]
      %v1490 = vld [vmem:[%s1487 + $0x10] sm:$0xff]
      %v1491 = vld [vmem:[%s1487 + $0x18] sm:$0xff]
      %v1492 = vld [vmem:[%s1487 + $0x20] sm:$0xff]
      %v1493 = vld [vmem:[%s1487 + $0x28] sm:$0xff]
      %v1494 = vld [vmem:[%s1487 + $0x30] sm:$0xff]
      %v1495 = vld [vmem:[%s1487 + $0x38] sm:$0xff]
      %v1496 = vld [vmem:[%s1487 + $0x40] sm:$0xff]
      %v1497 = vld [vmem:[%s1487 + $0x48] sm:$0xff]
      %v1498 = vld [vmem:[%s1487 + $0x50] sm:$0xff]
      %v1499 = vld [vmem:[%s1487 + $0x58] sm:$0xff]
      %v1500 = vld [vmem:[%s1487 + $0x60] sm:$0xff]
      %v1501 = vld [vmem:[%s1487 + $0x68] sm:$0xff]
      %v1502 = vld [vmem:[%s1487 + $0x70] sm:$0xff]
      %v1503 = vld [vmem:[%s1487 + $0x78] sm:$0xff]
      %v1504 = vld [vmem:[%s1487 + $0x80] sm:$0xff]
      %v1505 = vld [vmem:[%s1487 + $0x88] sm:$0xff]
      %v1506 = vld [vmem:[%s1487 + $0x90] sm:$0xff]
      %v1507 = vld [vmem:[%s1487 + $0x98] sm:$0xff]
      %v1508 = vld [vmem:[%s1487 + $0xa0] sm:$0xff]
      %v1509 = vld [vmem:[%s1487 + $0xa8] sm:$0xff]
      %v1510 = vld [vmem:[%s1487 + $0xb0] sm:$0xff]
      %v1511 = vld [vmem:[%s1487 + $0xb8] sm:$0xff]
      %v1512 = vld [vmem:[%s1487 + $0xc0] sm:$0xff]
      %v1513 = vld [vmem:[%s1487 + $0xc8] sm:$0xff]
      %v1514 = vld [vmem:[%s1487 + $0xd0] sm:$0xff]
      %v1515 = vld [vmem:[%s1487 + $0xd8] sm:$0xff]
      %v1516 = vld [vmem:[%s1487 + $0xe0] sm:$0xff]
      %v1517 = vld [vmem:[%s1487 + $0xe8] sm:$0xff]
      %v1518 = vld [vmem:[%s1487 + $0xf0] sm:$0xff]
      %v1519 = vld [vmem:[%s1487 + $0xf8] sm:$0xff]
      %v1520 = vld [vmem:[%s1487 + $0x100] sm:$0xff]
      %v1521 = vld [vmem:[%s1487 + $0x108] sm:$0xff]
      %v1522 = vld [vmem:[%s1487 + $0x110] sm:$0xff]
      %v1523 = vld [vmem:[%s1487 + $0x118] sm:$0xff]
      %v1524 = vld [vmem:[%s1487 + $0x120] sm:$0xff]
      %v1525 = vld [vmem:[%s1487 + $0x128] sm:$0xff]
      %v1526 = vld [vmem:[%s1487 + $0x130] sm:$0xff]
      %v1527 = vld [vmem:[%s1487 + $0x138] sm:$0xff]
      %v1528 = vld [vmem:[%s1487 + $0x140] sm:$0xff]
      %v1529 = vld [vmem:[%s1487 + $0x148] sm:$0xff]
      %v1530 = vld [vmem:[%s1487 + $0x150] sm:$0xff]
      %v1531 = vld [vmem:[%s1487 + $0x158] sm:$0xff]
      %v1532 = vld [vmem:[%s1487 + $0x160] sm:$0xff]
      %v1533 = vld [vmem:[%s1487 + $0x168] sm:$0xff]
      %v1534 = vld [vmem:[%s1487 + $0x170] sm:$0xff]
      %v1535 = vld [vmem:[%s1487 + $0x178] sm:$0xff]
      %v1536 = vmax.f32 %v1439, %v1488
      %v1537 = vmax.f32 %v1440, %v1489
      %v1538 = vmax.f32 %v1441, %v1490
      %v1539 = vmax.f32 %v1442, %v1491
      %v1540 = vmax.f32 %v1443, %v1492
      %v1541 = vmax.f32 %v1444, %v1493
      %v1542 = vmax.f32 %v1445, %v1494
      %v1543 = vmax.f32 %v1446, %v1495
      %v1544 = vmax.f32 %v1447, %v1496
      %v1545 = vmax.f32 %v1448, %v1497
      %v1546 = vmax.f32 %v1449, %v1498
      %v1547 = vmax.f32 %v1450, %v1499
      %v1548 = vmax.f32 %v1451, %v1500
      %v1549 = vmax.f32 %v1452, %v1501
      %v1550 = vmax.f32 %v1453, %v1502
      %v1551 = vmax.f32 %v1454, %v1503
      %v1552 = vmax.f32 %v1455, %v1504
      %v1553 = vmax.f32 %v1456, %v1505
      %v1554 = vmax.f32 %v1457, %v1506
      %v1555 = vmax.f32 %v1458, %v1507
      %v1556 = vmax.f32 %v1459, %v1508
      %v1557 = vmax.f32 %v1460, %v1509
      %v1558 = vmax.f32 %v1461, %v1510
      %v1559 = vmax.f32 %v1462, %v1511
      %v1560 = vmax.f32 %v1463, %v1512
      %v1561 = vmax.f32 %v1464, %v1513
      %v1562 = vmax.f32 %v1465, %v1514
      %v1563 = vmax.f32 %v1466, %v1515
      %v1564 = vmax.f32 %v1467, %v1516
      %v1565 = vmax.f32 %v1468, %v1517
      %v1566 = vmax.f32 %v1469, %v1518
      %v1567 = vmax.f32 %v1470, %v1519
      %v1568 = vmax.f32 %v1471, %v1520
      %v1569 = vmax.f32 %v1472, %v1521
      %v1570 = vmax.f32 %v1473, %v1522
      %v1571 = vmax.f32 %v1474, %v1523
      %v1572 = vmax.f32 %v1475, %v1524
      %v1573 = vmax.f32 %v1476, %v1525
      %v1574 = vmax.f32 %v1477, %v1526
      %v1575 = vmax.f32 %v1478, %v1527
      %v1576 = vmax.f32 %v1479, %v1528
      %v1577 = vmax.f32 %v1480, %v1529
      %v1578 = vmax.f32 %v1481, %v1530
      %v1579 = vmax.f32 %v1482, %v1531
      %v1580 = vmax.f32 %v1483, %v1532
      %v1581 = vmax.f32 %v1484, %v1533
      %v1582 = vmax.f32 %v1485, %v1534
      %v1583 = vmax.f32 %v1486, %v1535
      %vm1632 = vcmask 1046528
      %v1633 = vrot.slane %v1536, 1
      %v1634 = vrot.slane %v1537, 1
      %v1635 = vsel %vm1632, %v1633, %v1634
      %v1636 = vrot.slane %v1538, 1
      %v1637 = vsel %vm1632, %v1634, %v1636
      %v1638 = vrot.slane %v1539, 1
      %v1639 = vrot.slane %v1540, 1
      %v1640 = vsel %vm1632, %v1638, %v1639
      %v1641 = vrot.slane %v1541, 1
      %v1642 = vsel %vm1632, %v1639, %v1641
      %v1643 = vrot.slane %v1542, 1
      %v1644 = vrot.slane %v1543, 1
      %v1645 = vsel %vm1632, %v1643, %v1644
      %v1646 = vrot.slane %v1544, 1
      %v1647 = vsel %vm1632, %v1644, %v1646
      %v1648 = vrot.slane %v1545, 1
      %v1649 = vrot.slane %v1546, 1
      %v1650 = vsel %vm1632, %v1648, %v1649
      %v1651 = vrot.slane %v1547, 1
      %v1652 = vsel %vm1632, %v1649, %v1651
      %v1653 = vrot.slane %v1548, 1
      %v1654 = vrot.slane %v1549, 1
      %v1655 = vsel %vm1632, %v1653, %v1654
      %v1656 = vrot.slane %v1550, 1
      %v1657 = vsel %vm1632, %v1654, %v1656
      %v1658 = vrot.slane %v1551, 1
      %v1659 = vrot.slane %v1552, 1
      %v1660 = vsel %vm1632, %v1658, %v1659
      %v1661 = vrot.slane %v1553, 1
      %v1662 = vsel %vm1632, %v1659, %v1661
      %v1663 = vrot.slane %v1554, 1
      %v1664 = vrot.slane %v1555, 1
      %v1665 = vsel %vm1632, %v1663, %v1664
      %v1666 = vrot.slane %v1556, 1
      %v1667 = vsel %vm1632, %v1664, %v1666
      %v1668 = vrot.slane %v1557, 1
      %v1669 = vrot.slane %v1558, 1
      %v1670 = vsel %vm1632, %v1668, %v1669
      %v1671 = vrot.slane %v1559, 1
      %v1672 = vsel %vm1632, %v1669, %v1671
      %v1673 = vrot.slane %v1560, 1
      %v1674 = vrot.slane %v1561, 1
      %v1675 = vsel %vm1632, %v1673, %v1674
      %v1676 = vrot.slane %v1562, 1
      %v1677 = vsel %vm1632, %v1674, %v1676
      %v1678 = vrot.slane %v1563, 1
      %v1679 = vrot.slane %v1564, 1
      %v1680 = vsel %vm1632, %v1678, %v1679
      %v1681 = vrot.slane %v1565, 1
      %v1682 = vsel %vm1632, %v1679, %v1681
      %v1683 = vrot.slane %v1566, 1
      %v1684 = vrot.slane %v1567, 1
      %v1685 = vsel %vm1632, %v1683, %v1684
      %v1686 = vrot.slane %v1568, 1
      %v1687 = vsel %vm1632, %v1684, %v1686
      %v1688 = vrot.slane %v1569, 1
      %v1689 = vrot.slane %v1570, 1
      %v1690 = vsel %vm1632, %v1688, %v1689
      %v1691 = vrot.slane %v1571, 1
      %v1692 = vsel %vm1632, %v1689, %v1691
      %v1693 = vrot.slane %v1572, 1
      %v1694 = vrot.slane %v1573, 1
      %v1695 = vsel %vm1632, %v1693, %v1694
      %v1696 = vrot.slane %v1574, 1
      %v1697 = vsel %vm1632, %v1694, %v1696
      %v1698 = vrot.slane %v1575, 1
      %v1699 = vrot.slane %v1576, 1
      %v1700 = vsel %vm1632, %v1698, %v1699
      %v1701 = vrot.slane %v1577, 1
      %v1702 = vsel %vm1632, %v1699, %v1701
      %v1703 = vrot.slane %v1578, 1
      %v1704 = vrot.slane %v1579, 1
      %v1705 = vsel %vm1632, %v1703, %v1704
      %v1706 = vrot.slane %v1580, 1
      %v1707 = vsel %vm1632, %v1704, %v1706
      %v1708 = vrot.slane %v1581, 1
      %v1709 = vrot.slane %v1582, 1
      %v1710 = vsel %vm1632, %v1708, %v1709
      %v1711 = vrot.slane %v1583, 1
      %v1712 = vsel %vm1632, %v1709, %v1711
      %v1745 = vmax.f32 %v1536, %v1635
      %v1746 = vmax.f32 %v1537, %v1637
      %v1747 = vmax.f32 %v1539, %v1640
      %v1748 = vmax.f32 %v1540, %v1642
      %v1749 = vmax.f32 %v1542, %v1645
      %v1750 = vmax.f32 %v1543, %v1647
      %v1751 = vmax.f32 %v1545, %v1650
      %v1752 = vmax.f32 %v1546, %v1652
      %v1753 = vmax.f32 %v1548, %v1655
      %v1754 = vmax.f32 %v1549, %v1657
      %v1755 = vmax.f32 %v1551, %v1660
      %v1756 = vmax.f32 %v1552, %v1662
      %v1757 = vmax.f32 %v1554, %v1665
      %v1758 = vmax.f32 %v1555, %v1667
      %v1759 = vmax.f32 %v1557, %v1670
      %v1760 = vmax.f32 %v1558, %v1672
      %v1761 = vmax.f32 %v1560, %v1675
      %v1762 = vmax.f32 %v1561, %v1677
      %v1763 = vmax.f32 %v1563, %v1680
      %v1764 = vmax.f32 %v1564, %v1682
      %v1765 = vmax.f32 %v1566, %v1685
      %v1766 = vmax.f32 %v1567, %v1687
      %v1767 = vmax.f32 %v1569, %v1690
      %v1768 = vmax.f32 %v1570, %v1692
      %v1769 = vmax.f32 %v1572, %v1695
      %v1770 = vmax.f32 %v1573, %v1697
      %v1771 = vmax.f32 %v1575, %v1700
      %v1772 = vmax.f32 %v1576, %v1702
      %v1773 = vmax.f32 %v1578, %v1705
      %v1774 = vmax.f32 %v1579, %v1707
      %v1775 = vmax.f32 %v1581, %v1710
      %v1776 = vmax.f32 %v1582, %v1712
      %vm1777 = vcmask 1045504
      %v1778 = vrot.slane %v1536, 2
      %v1779 = vrot.slane %v1537, 2
      %v1780 = vsel %vm1777, %v1778, %v1779
      %v1781 = vrot.slane %v1538, 2
      %v1782 = vsel %vm1777, %v1779, %v1781
      %v1783 = vrot.slane %v1539, 2
      %v1784 = vrot.slane %v1540, 2
      %v1785 = vsel %vm1777, %v1783, %v1784
      %v1786 = vrot.slane %v1541, 2
      %v1787 = vsel %vm1777, %v1784, %v1786
      %v1788 = vrot.slane %v1542, 2
      %v1789 = vrot.slane %v1543, 2
      %v1790 = vsel %vm1777, %v1788, %v1789
      %v1791 = vrot.slane %v1544, 2
      %v1792 = vsel %vm1777, %v1789, %v1791
      %v1793 = vrot.slane %v1545, 2
      %v1794 = vrot.slane %v1546, 2
      %v1795 = vsel %vm1777, %v1793, %v1794
      %v1796 = vrot.slane %v1547, 2
      %v1797 = vsel %vm1777, %v1794, %v1796
      %v1798 = vrot.slane %v1548, 2
      %v1799 = vrot.slane %v1549, 2
      %v1800 = vsel %vm1777, %v1798, %v1799
      %v1801 = vrot.slane %v1550, 2
      %v1802 = vsel %vm1777, %v1799, %v1801
      %v1803 = vrot.slane %v1551, 2
      %v1804 = vrot.slane %v1552, 2
      %v1805 = vsel %vm1777, %v1803, %v1804
      %v1806 = vrot.slane %v1553, 2
      %v1807 = vsel %vm1777, %v1804, %v1806
      %v1808 = vrot.slane %v1554, 2
      %v1809 = vrot.slane %v1555, 2
      %v1810 = vsel %vm1777, %v1808, %v1809
      %v1811 = vrot.slane %v1556, 2
      %v1812 = vsel %vm1777, %v1809, %v1811
      %v1813 = vrot.slane %v1557, 2
      %v1814 = vrot.slane %v1558, 2
      %v1815 = vsel %vm1777, %v1813, %v1814
      %v1816 = vrot.slane %v1559, 2
      %v1817 = vsel %vm1777, %v1814, %v1816
      %v1818 = vrot.slane %v1560, 2
      %v1819 = vrot.slane %v1561, 2
      %v1820 = vsel %vm1777, %v1818, %v1819
      %v1821 = vrot.slane %v1562, 2
      %v1822 = vsel %vm1777, %v1819, %v1821
      %v1823 = vrot.slane %v1563, 2
      %v1824 = vrot.slane %v1564, 2
      %v1825 = vsel %vm1777, %v1823, %v1824
      %v1826 = vrot.slane %v1565, 2
      %v1827 = vsel %vm1777, %v1824, %v1826
      %v1828 = vrot.slane %v1566, 2
      %v1829 = vrot.slane %v1567, 2
      %v1830 = vsel %vm1777, %v1828, %v1829
      %v1831 = vrot.slane %v1568, 2
      %v1832 = vsel %vm1777, %v1829, %v1831
      %v1833 = vrot.slane %v1569, 2
      %v1834 = vrot.slane %v1570, 2
      %v1835 = vsel %vm1777, %v1833, %v1834
      %v1836 = vrot.slane %v1571, 2
      %v1837 = vsel %vm1777, %v1834, %v1836
      %v1838 = vrot.slane %v1572, 2
      %v1839 = vrot.slane %v1573, 2
      %v1840 = vsel %vm1777, %v1838, %v1839
      %v1841 = vrot.slane %v1574, 2
      %v1842 = vsel %vm1777, %v1839, %v1841
      %v1843 = vrot.slane %v1575, 2
      %v1844 = vrot.slane %v1576, 2
      %v1845 = vsel %vm1777, %v1843, %v1844
      %v1846 = vrot.slane %v1577, 2
      %v1847 = vsel %vm1777, %v1844, %v1846
      %v1848 = vrot.slane %v1578, 2
      %v1849 = vrot.slane %v1579, 2
      %v1850 = vsel %vm1777, %v1848, %v1849
      %v1851 = vrot.slane %v1580, 2
      %v1852 = vsel %vm1777, %v1849, %v1851
      %v1853 = vrot.slane %v1581, 2
      %v1854 = vrot.slane %v1582, 2
      %v1855 = vsel %vm1777, %v1853, %v1854
      %v1856 = vrot.slane %v1583, 2
      %v1857 = vsel %vm1777, %v1854, %v1856
      %v1890 = vmax.f32 %v1745, %v1780
      %v1891 = vmax.f32 %v1746, %v1782
      %v1892 = vmax.f32 %v1747, %v1785
      %v1893 = vmax.f32 %v1748, %v1787
      %v1894 = vmax.f32 %v1749, %v1790
      %v1895 = vmax.f32 %v1750, %v1792
      %v1896 = vmax.f32 %v1751, %v1795
      %v1897 = vmax.f32 %v1752, %v1797
      %v1898 = vmax.f32 %v1753, %v1800
      %v1899 = vmax.f32 %v1754, %v1802
      %v1900 = vmax.f32 %v1755, %v1805
      %v1901 = vmax.f32 %v1756, %v1807
      %v1902 = vmax.f32 %v1757, %v1810
      %v1903 = vmax.f32 %v1758, %v1812
      %v1904 = vmax.f32 %v1759, %v1815
      %v1905 = vmax.f32 %v1760, %v1817
      %v1906 = vmax.f32 %v1761, %v1820
      %v1907 = vmax.f32 %v1762, %v1822
      %v1908 = vmax.f32 %v1763, %v1825
      %v1909 = vmax.f32 %v1764, %v1827
      %v1910 = vmax.f32 %v1765, %v1830
      %v1911 = vmax.f32 %v1766, %v1832
      %v1912 = vmax.f32 %v1767, %v1835
      %v1913 = vmax.f32 %v1768, %v1837
      %v1914 = vmax.f32 %v1769, %v1840
      %v1915 = vmax.f32 %v1770, %v1842
      %v1916 = vmax.f32 %v1771, %v1845
      %v1917 = vmax.f32 %v1772, %v1847
      %v1918 = vmax.f32 %v1773, %v1850
      %v1919 = vmax.f32 %v1774, %v1852
      %v1920 = vmax.f32 %v1775, %v1855
      %v1921 = vmax.f32 %v1776, %v1857
      %vm1922 = vcmask 1044480
      %v1923 = vrot.slane %v1536, 3
      %v1924 = vrot.slane %v1537, 3
      %v1925 = vsel %vm1922, %v1923, %v1924
      %v1926 = vrot.slane %v1538, 3
      %v1927 = vsel %vm1922, %v1924, %v1926
      %v1928 = vrot.slane %v1539, 3
      %v1929 = vrot.slane %v1540, 3
      %v1930 = vsel %vm1922, %v1928, %v1929
      %v1931 = vrot.slane %v1541, 3
      %v1932 = vsel %vm1922, %v1929, %v1931
      %v1933 = vrot.slane %v1542, 3
      %v1934 = vrot.slane %v1543, 3
      %v1935 = vsel %vm1922, %v1933, %v1934
      %v1936 = vrot.slane %v1544, 3
      %v1937 = vsel %vm1922, %v1934, %v1936
      %v1938 = vrot.slane %v1545, 3
      %v1939 = vrot.slane %v1546, 3
      %v1940 = vsel %vm1922, %v1938, %v1939
      %v1941 = vrot.slane %v1547, 3
      %v1942 = vsel %vm1922, %v1939, %v1941
      %v1943 = vrot.slane %v1548, 3
      %v1944 = vrot.slane %v1549, 3
      %v1945 = vsel %vm1922, %v1943, %v1944
      %v1946 = vrot.slane %v1550, 3
      %v1947 = vsel %vm1922, %v1944, %v1946
      %v1948 = vrot.slane %v1551, 3
      %v1949 = vrot.slane %v1552, 3
      %v1950 = vsel %vm1922, %v1948, %v1949
      %v1951 = vrot.slane %v1553, 3
      %v1952 = vsel %vm1922, %v1949, %v1951
      %v1953 = vrot.slane %v1554, 3
      %v1954 = vrot.slane %v1555, 3
      %v1955 = vsel %vm1922, %v1953, %v1954
      %v1956 = vrot.slane %v1556, 3
      %v1957 = vsel %vm1922, %v1954, %v1956
      %v1958 = vrot.slane %v1557, 3
      %v1959 = vrot.slane %v1558, 3
      %v1960 = vsel %vm1922, %v1958, %v1959
      %v1961 = vrot.slane %v1559, 3
      %v1962 = vsel %vm1922, %v1959, %v1961
      %v1963 = vrot.slane %v1560, 3
      %v1964 = vrot.slane %v1561, 3
      %v1965 = vsel %vm1922, %v1963, %v1964
      %v1966 = vrot.slane %v1562, 3
      %v1967 = vsel %vm1922, %v1964, %v1966
      %v1968 = vrot.slane %v1563, 3
      %v1969 = vrot.slane %v1564, 3
      %v1970 = vsel %vm1922, %v1968, %v1969
      %v1971 = vrot.slane %v1565, 3
      %v1972 = vsel %vm1922, %v1969, %v1971
      %v1973 = vrot.slane %v1566, 3
      %v1974 = vrot.slane %v1567, 3
      %v1975 = vsel %vm1922, %v1973, %v1974
      %v1976 = vrot.slane %v1568, 3
      %v1977 = vsel %vm1922, %v1974, %v1976
      %v1978 = vrot.slane %v1569, 3
      %v1979 = vrot.slane %v1570, 3
      %v1980 = vsel %vm1922, %v1978, %v1979
      %v1981 = vrot.slane %v1571, 3
      %v1982 = vsel %vm1922, %v1979, %v1981
      %v1983 = vrot.slane %v1572, 3
      %v1984 = vrot.slane %v1573, 3
      %v1985 = vsel %vm1922, %v1983, %v1984
      %v1986 = vrot.slane %v1574, 3
      %v1987 = vsel %vm1922, %v1984, %v1986
      %v1988 = vrot.slane %v1575, 3
      %v1989 = vrot.slane %v1576, 3
      %v1990 = vsel %vm1922, %v1988, %v1989
      %v1991 = vrot.slane %v1577, 3
      %v1992 = vsel %vm1922, %v1989, %v1991
      %v1993 = vrot.slane %v1578, 3
      %v1994 = vrot.slane %v1579, 3
      %v1995 = vsel %vm1922, %v1993, %v1994
      %v1996 = vrot.slane %v1580, 3
      %v1997 = vsel %vm1922, %v1994, %v1996
      %v1998 = vrot.slane %v1581, 3
      %v1999 = vrot.slane %v1582, 3
      %v2000 = vsel %vm1922, %v1998, %v1999
      %v2001 = vrot.slane %v1583, 3
      %v2002 = vsel %vm1922, %v1999, %v2001
      %v2035 = vmax.f32 %v1890, %v1925
      %v2036 = vmax.f32 %v1891, %v1927
      %v2037 = vmax.f32 %v1892, %v1930
      %v2038 = vmax.f32 %v1893, %v1932
      %v2039 = vmax.f32 %v1894, %v1935
      %v2040 = vmax.f32 %v1895, %v1937
      %v2041 = vmax.f32 %v1896, %v1940
      %v2042 = vmax.f32 %v1897, %v1942
      %v2043 = vmax.f32 %v1898, %v1945
      %v2044 = vmax.f32 %v1899, %v1947
      %v2045 = vmax.f32 %v1900, %v1950
      %v2046 = vmax.f32 %v1901, %v1952
      %v2047 = vmax.f32 %v1902, %v1955
      %v2048 = vmax.f32 %v1903, %v1957
      %v2049 = vmax.f32 %v1904, %v1960
      %v2050 = vmax.f32 %v1905, %v1962
      %v2051 = vmax.f32 %v1906, %v1965
      %v2052 = vmax.f32 %v1907, %v1967
      %v2053 = vmax.f32 %v1908, %v1970
      %v2054 = vmax.f32 %v1909, %v1972
      %v2055 = vmax.f32 %v1910, %v1975
      %v2056 = vmax.f32 %v1911, %v1977
      %v2057 = vmax.f32 %v1912, %v1980
      %v2058 = vmax.f32 %v1913, %v1982
      %v2059 = vmax.f32 %v1914, %v1985
      %v2060 = vmax.f32 %v1915, %v1987
      %v2061 = vmax.f32 %v1916, %v1990
      %v2062 = vmax.f32 %v1917, %v1992
      %v2063 = vmax.f32 %v1918, %v1995
      %v2064 = vmax.f32 %v1919, %v1997
      %v2065 = vmax.f32 %v1920, %v2000
      %v2066 = vmax.f32 %v1921, %v2002
      %v2067 = vrot.slane %v1536, 4
      %v2068 = vrot.slane %v1537, 4
      %v2069 = vsel %vm362, %v2067, %v2068
      %v2070 = vrot.slane %v1538, 4
      %v2071 = vsel %vm362, %v2068, %v2070
      %v2072 = vrot.slane %v1539, 4
      %v2073 = vrot.slane %v1540, 4
      %v2074 = vsel %vm362, %v2072, %v2073
      %v2075 = vrot.slane %v1541, 4
      %v2076 = vsel %vm362, %v2073, %v2075
      %v2077 = vrot.slane %v1542, 4
      %v2078 = vrot.slane %v1543, 4
      %v2079 = vsel %vm362, %v2077, %v2078
      %v2080 = vrot.slane %v1544, 4
      %v2081 = vsel %vm362, %v2078, %v2080
      %v2082 = vrot.slane %v1545, 4
      %v2083 = vrot.slane %v1546, 4
      %v2084 = vsel %vm362, %v2082, %v2083
      %v2085 = vrot.slane %v1547, 4
      %v2086 = vsel %vm362, %v2083, %v2085
      %v2087 = vrot.slane %v1548, 4
      %v2088 = vrot.slane %v1549, 4
      %v2089 = vsel %vm362, %v2087, %v2088
      %v2090 = vrot.slane %v1550, 4
      %v2091 = vsel %vm362, %v2088, %v2090
      %v2092 = vrot.slane %v1551, 4
      %v2093 = vrot.slane %v1552, 4
      %v2094 = vsel %vm362, %v2092, %v2093
      %v2095 = vrot.slane %v1553, 4
      %v2096 = vsel %vm362, %v2093, %v2095
      %v2097 = vrot.slane %v1554, 4
      %v2098 = vrot.slane %v1555, 4
      %v2099 = vsel %vm362, %v2097, %v2098
      %v2100 = vrot.slane %v1556, 4
      %v2101 = vsel %vm362, %v2098, %v2100
      %v2102 = vrot.slane %v1557, 4
      %v2103 = vrot.slane %v1558, 4
      %v2104 = vsel %vm362, %v2102, %v2103
      %v2105 = vrot.slane %v1559, 4
      %v2106 = vsel %vm362, %v2103, %v2105
      %v2107 = vrot.slane %v1560, 4
      %v2108 = vrot.slane %v1561, 4
      %v2109 = vsel %vm362, %v2107, %v2108
      %v2110 = vrot.slane %v1562, 4
      %v2111 = vsel %vm362, %v2108, %v2110
      %v2112 = vrot.slane %v1563, 4
      %v2113 = vrot.slane %v1564, 4
      %v2114 = vsel %vm362, %v2112, %v2113
      %v2115 = vrot.slane %v1565, 4
      %v2116 = vsel %vm362, %v2113, %v2115
      %v2117 = vrot.slane %v1566, 4
      %v2118 = vrot.slane %v1567, 4
      %v2119 = vsel %vm362, %v2117, %v2118
      %v2120 = vrot.slane %v1568, 4
      %v2121 = vsel %vm362, %v2118, %v2120
      %v2122 = vrot.slane %v1569, 4
      %v2123 = vrot.slane %v1570, 4
      %v2124 = vsel %vm362, %v2122, %v2123
      %v2125 = vrot.slane %v1571, 4
      %v2126 = vsel %vm362, %v2123, %v2125
      %v2127 = vrot.slane %v1572, 4
      %v2128 = vrot.slane %v1573, 4
      %v2129 = vsel %vm362, %v2127, %v2128
      %v2130 = vrot.slane %v1574, 4
      %v2131 = vsel %vm362, %v2128, %v2130
      %v2132 = vrot.slane %v1575, 4
      %v2133 = vrot.slane %v1576, 4
      %v2134 = vsel %vm362, %v2132, %v2133
      %v2135 = vrot.slane %v1577, 4
      %v2136 = vsel %vm362, %v2133, %v2135
      %v2137 = vrot.slane %v1578, 4
      %v2138 = vrot.slane %v1579, 4
      %v2139 = vsel %vm362, %v2137, %v2138
      %v2140 = vrot.slane %v1580, 4
      %v2141 = vsel %vm362, %v2138, %v2140
      %v2142 = vrot.slane %v1581, 4
      %v2143 = vrot.slane %v1582, 4
      %v2144 = vsel %vm362, %v2142, %v2143
      %v2145 = vrot.slane %v1583, 4
      %v2146 = vsel %vm362, %v2143, %v2145
      %v2179 = vmax.f32 %v2035, %v2069
      %v2180 = vmax.f32 %v2036, %v2071
      %v2181 = vmax.f32 %v2037, %v2074
      %v2182 = vmax.f32 %v2038, %v2076
      %v2183 = vmax.f32 %v2039, %v2079
      %v2184 = vmax.f32 %v2040, %v2081
      %v2185 = vmax.f32 %v2041, %v2084
      %v2186 = vmax.f32 %v2042, %v2086
      %v2187 = vmax.f32 %v2043, %v2089
      %v2188 = vmax.f32 %v2044, %v2091
      %v2189 = vmax.f32 %v2045, %v2094
      %v2190 = vmax.f32 %v2046, %v2096
      %v2191 = vmax.f32 %v2047, %v2099
      %v2192 = vmax.f32 %v2048, %v2101
      %v2193 = vmax.f32 %v2049, %v2104
      %v2194 = vmax.f32 %v2050, %v2106
      %v2195 = vmax.f32 %v2051, %v2109
      %v2196 = vmax.f32 %v2052, %v2111
      %v2197 = vmax.f32 %v2053, %v2114
      %v2198 = vmax.f32 %v2054, %v2116
      %v2199 = vmax.f32 %v2055, %v2119
      %v2200 = vmax.f32 %v2056, %v2121
      %v2201 = vmax.f32 %v2057, %v2124
      %v2202 = vmax.f32 %v2058, %v2126
      %v2203 = vmax.f32 %v2059, %v2129
      %v2204 = vmax.f32 %v2060, %v2131
      %v2205 = vmax.f32 %v2061, %v2134
      %v2206 = vmax.f32 %v2062, %v2136
      %v2207 = vmax.f32 %v2063, %v2139
      %v2208 = vmax.f32 %v2064, %v2141
      %v2209 = vmax.f32 %v2065, %v2144
      %v2210 = vmax.f32 %v2066, %v2146
      %2211 = vst [vmem:[%s1116 + $0x2] sm:$0xff] %v2179
      %2212 = vst [vmem:[%s1116 + $0xa] sm:$0xff] %v2180
      %2213 = vst [vmem:[%s1116 + $0x1a] sm:$0xff] %v2181
      %2214 = vst [vmem:[%s1116 + $0x22] sm:$0xff] %v2182
      %2215 = vst [vmem:[%s1116 + $0x32] sm:$0xff] %v2183
      %2216 = vst [vmem:[%s1116 + $0x3a] sm:$0xff] %v2184
      %2217 = vst [vmem:[%s1116 + $0x4a] sm:$0xff] %v2185
      %2218 = vst [vmem:[%s1116 + $0x52] sm:$0xff] %v2186
      %2219 = vst [vmem:[%s1116 + $0x62] sm:$0xff] %v2187
      %2220 = vst [vmem:[%s1116 + $0x6a] sm:$0xff] %v2188
      %2221 = vst [vmem:[%s1116 + $0x7a] sm:$0xff] %v2189
      %2222 = vst [vmem:[%s1116 + $0x82] sm:$0xff] %v2190
      %2223 = vst [vmem:[%s1116 + $0x92] sm:$0xff] %v2191
      %2224 = vst [vmem:[%s1116 + $0x9a] sm:$0xff] %v2192
      %2225 = vst [vmem:[%s1116 + $0xaa] sm:$0xff] %v2193
      %2226 = vst [vmem:[%s1116 + $0xb2] sm:$0xff] %v2194
      %2227 = vst [vmem:[%s1116 + $0xc2] sm:$0xff] %v2195
      %2228 = vst [vmem:[%s1116 + $0xca] sm:$0xff] %v2196
      %2229 = vst [vmem:[%s1116 + $0xda] sm:$0xff] %v2197
      %2230 = vst [vmem:[%s1116 + $0xe2] sm:$0xff] %v2198
      %2231 = vst [vmem:[%s1116 + $0xf2] sm:$0xff] %v2199
      %2232 = vst [vmem:[%s1116 + $0xfa] sm:$0xff] %v2200
      %2233 = vst [vmem:[%s1116 + $0x10a] sm:$0xff] %v2201
      %2234 = vst [vmem:[%s1116 + $0x112] sm:$0xff] %v2202
      %2235 = vst [vmem:[%s1116 + $0x122] sm:$0xff] %v2203
      %2236 = vst [vmem:[%s1116 + $0x12a] sm:$0xff] %v2204
      %2237 = vst [vmem:[%s1116 + $0x13a] sm:$0xff] %v2205
      %2238 = vst [vmem:[%s1116 + $0x142] sm:$0xff] %v2206
      %2239 = vst [vmem:[%s1116 + $0x152] sm:$0xff] %v2207
      %2240 = vst [vmem:[%s1116 + $0x15a] sm:$0xff] %v2208
      %2241 = vst [vmem:[%s1116 + $0x16a] sm:$0xff] %v2209
      %2242 = vst [vmem:[%s1116 + $0x172] sm:$0xff] %v2210
      %v2243 = vld [vmem:[#allocation3] sm:$0xff]
      %v2244 = vld [vmem:[#allocation3 + $0x8] sm:$0xff]
      %v2245 = vld [vmem:[#allocation3 + $0x10] sm:$0xff]
      %v2246 = vld [vmem:[#allocation3 + $0x18] sm:$0xff]
      %v2247 = vld [vmem:[#allocation3 + $0x20] sm:$0xff]
      %v2248 = vld [vmem:[#allocation3 + $0x28] sm:$0xff]
      %v2249 = vld [vmem:[#allocation3 + $0x30] sm:$0xff]
      %v2250 = vld [vmem:[#allocation3 + $0x38] sm:$0xff]
      %v2251 = vld [vmem:[#allocation3 + $0x40] sm:$0xff]
      %v2252 = vld [vmem:[#allocation3 + $0x48] sm:$0xff]
      %v2253 = vld [vmem:[#allocation3 + $0x50] sm:$0xff]
      %v2254 = vld [vmem:[#allocation3 + $0x58] sm:$0xff]
      %v2255 = vld [vmem:[#allocation3 + $0x60] sm:$0xff]
      %v2256 = vld [vmem:[#allocation3 + $0x68] sm:$0xff]
      %v2257 = vld [vmem:[#allocation3 + $0x70] sm:$0xff]
      %v2258 = vld [vmem:[#allocation3 + $0x78] sm:$0xff]
      %v2259 = vld [vmem:[#allocation3 + $0x80] sm:$0xff]
      %v2260 = vld [vmem:[#allocation3 + $0x88] sm:$0xff]
      %v2261 = vld [vmem:[#allocation3 + $0x90] sm:$0xff]
      %v2262 = vld [vmem:[#allocation3 + $0x98] sm:$0xff]
      %v2263 = vld [vmem:[#allocation3 + $0xa0] sm:$0xff]
      %v2264 = vld [vmem:[#allocation3 + $0xa8] sm:$0xff]
      %v2265 = vld [vmem:[#allocation3 + $0xb0] sm:$0xff]
      %v2266 = vld [vmem:[#allocation3 + $0xb8] sm:$0xff]
      %v2267 = vld [vmem:[#allocation3 + $0xc0] sm:$0xff]
      %v2268 = vld [vmem:[#allocation3 + $0xc8] sm:$0xff]
      %v2269 = vld [vmem:[#allocation3 + $0xd0] sm:$0xff]
      %v2270 = vld [vmem:[#allocation3 + $0xd8] sm:$0xff]
      %v2271 = vld [vmem:[#allocation3 + $0xe0] sm:$0xff]
      %v2272 = vld [vmem:[#allocation3 + $0xe8] sm:$0xff]
      %v2273 = vld [vmem:[#allocation3 + $0xf0] sm:$0xff]
      %v2274 = vld [vmem:[#allocation3 + $0xf8] sm:$0xff]
      %s2275 = scalar_lea.vmem %s3, 128
      %v2276 = vld [vmem:[%s2275] sm:$0xff]
      %v2277 = vld [vmem:[%s2275 + $0x8] sm:$0xff]
      %v2278 = vld [vmem:[%s2275 + $0x10] sm:$0xff]
      %v2279 = vld [vmem:[%s2275 + $0x18] sm:$0xff]
      %v2280 = vld [vmem:[%s2275 + $0x20] sm:$0xff]
      %v2281 = vld [vmem:[%s2275 + $0x28] sm:$0xff]
      %v2282 = vld [vmem:[%s2275 + $0x30] sm:$0xff]
      %v2283 = vld [vmem:[%s2275 + $0x38] sm:$0xff]
      %v2284 = vld [vmem:[%s2275 + $0x40] sm:$0xff]
      %v2285 = vld [vmem:[%s2275 + $0x48] sm:$0xff]
      %v2286 = vld [vmem:[%s2275 + $0x50] sm:$0xff]
      %v2287 = vld [vmem:[%s2275 + $0x58] sm:$0xff]
      %v2288 = vld [vmem:[%s2275 + $0x60] sm:$0xff]
      %v2289 = vld [vmem:[%s2275 + $0x68] sm:$0xff]
      %v2290 = vld [vmem:[%s2275 + $0x70] sm:$0xff]
      %v2291 = vld [vmem:[%s2275 + $0x78] sm:$0xff]
      %2292 = vmatprep.subr.mxu0 0.0
      %2293 = vmatpush1.msra.mxu0 %v2276
      %2294 = vmatprep.subr.mxu0 0.0
      %2295 = vmatpush1.msra.mxu0 %v2277
      %2296 = vmatprep.subr.mxu0 0.0
      %2297 = vmatpush1.msra.mxu0 %v2278
      %2298 = vmatprep.subr.mxu0 0.0
      %2299 = vmatpush1.msra.mxu0 %v2279
      %2300 = vmatprep.subr.mxu0 0.0
      %2301 = vmatpush1.msra.mxu0 %v2280
      %2302 = vmatprep.subr.mxu0 0.0
      %2303 = vmatpush1.msra.mxu0 %v2281
      %2304 = vmatprep.subr.mxu0 0.0
      %2305 = vmatpush1.msra.mxu0 %v2282
      %2306 = vmatprep.subr.mxu0 0.0
      %2307 = vmatpush1.msra.mxu0 %v2283
      %2308 = vmatprep.subr.mxu0 0.0
      %2309 = vmatpush1.msra.mxu0 %v2284
      %2310 = vmatprep.subr.mxu0 0.0
      %2311 = vmatpush1.msra.mxu0 %v2285
      %2312 = vmatprep.subr.mxu0 0.0
      %2313 = vmatpush1.msra.mxu0 %v2286
      %2314 = vmatprep.subr.mxu0 0.0
      %2315 = vmatpush1.msra.mxu0 %v2287
      %2316 = vmatprep.subr.mxu0 0.0
      %2317 = vmatpush1.msra.mxu0 %v2288
      %2318 = vmatprep.subr.mxu0 0.0
      %2319 = vmatpush1.msra.mxu0 %v2289
      %2320 = vmatprep.subr.mxu0 0.0
      %2321 = vmatpush1.msra.mxu0 %v2290
      %2322 = vmatprep.subr.mxu0 0.0
      %2323 = vmatpush1.msra.mxu0 %v2291
      %2324 = vmatprep.subr.mxu0 0.0
      %2325 = vmatpush1.msra.mxu0 0.0
      %2326 = vmatprep.subr.mxu0 0.0
      %2327 = vmatpush1.msra.mxu0 0.0
      %2328 = vmatprep.subr.mxu0 0.0
      %2329 = vmatpush1.msra.mxu0 0.0
      %2330 = vmatprep.subr.mxu0 0.0
      %2331 = vmatpush1.msra.mxu0 0.0
      %2332 = vmatprep.subr.mxu0 0.0
      %2333 = vmatpush1.msra.mxu0 0.0
      %2334 = vmatprep.subr.mxu0 0.0
      %2335 = vmatpush1.msra.mxu0 0.0
      %2336 = vmatprep.subr.mxu0 0.0
      %2337 = vmatpush1.msra.mxu0 0.0
      %2338 = vmatprep.subr.mxu0 0.0
      %2339 = vmatpush1.msra.mxu0 0.0
      %2340 = vmatprep.subr.mxu0 0.0
      %2341 = vmatpush1.msra.mxu0 0.0
      %2342 = vmatprep.subr.mxu0 0.0
      %2343 = vmatpush1.msra.mxu0 0.0
      %2344 = vmatprep.subr.mxu0 0.0
      %2345 = vmatpush1.msra.mxu0 0.0
      %2346 = vmatprep.subr.mxu0 0.0
      %2347 = vmatpush1.msra.mxu0 0.0
      %2348 = vmatprep.subr.mxu0 0.0
      %2349 = vmatpush1.msra.mxu0 0.0
      %2350 = vmatprep.subr.mxu0 0.0
      %2351 = vmatpush1.msra.mxu0 0.0
      %2352 = vmatprep.subr.mxu0 0.0
      %2353 = vmatpush1.msra.mxu0 0.0
      %2354 = vmatprep.subr.mxu0 0.0
      %2355 = vmatpush1.msra.mxu0 0.0
      %2356 = vmatprep.mubr.f32.mxu0 0.0
      %2357 = vmatmul.mubr.f32.gmra.mrb[0].mxu0 %v2179
      %v2358 = vpop.f32.mrb[0].mxu0
      %v2359 = vadd.f32 0.0, %v2358
      %v2360 = vpop.f32.mrb[0].mxu0
      %2361 = vmatprep.mubr.f32.mxu0 0.0
      %2362 = vmatmul.mubr.f32.gmra.mrb[0].mxu0 %v2180
      %v2363 = vpop.f32.mrb[0].mxu0
      %v2364 = vadd.f32 0.0, %v2363
      %v2365 = vpop.f32.mrb[0].mxu0
      %2366 = vmatprep.mubr.f32.mxu0 0.0
      %2367 = vmatmul.mubr.f32.gmra.mrb[0].mxu0 %v2181
      %v2368 = vpop.f32.mrb[0].mxu0
      %v2369 = vadd.f32 0.0, %v2368
      %v2370 = vpop.f32.mrb[0].mxu0
      %2371 = vmatprep.mubr.f32.mxu0 0.0
      %2372 = vmatmul.mubr.f32.gmra.mrb[0].mxu0 %v2182
      %v2373 = vpop.f32.mrb[0].mxu0
      %v2374 = vadd.f32 0.0, %v2373
      %v2375 = vpop.f32.mrb[0].mxu0
      %2376 = vmatprep.mubr.f32.mxu0 0.0
      %2377 = vmatmul.mubr.f32.gmra.mrb[0].mxu0 %v2183
      %v2378 = vpop.f32.mrb[0].mxu0
      %v2379 = vadd.f32 0.0, %v2378
      %v2380 = vpop.f32.mrb[0].mxu0
      %2381 = vmatprep.mubr.f32.mxu0 0.0
      %2382 = vmatmul.mubr.f32.gmra.mrb[0].mxu0 %v2184
      %v2383 = vpop.f32.mrb[0].mxu0
      %v2384 = vadd.f32 0.0, %v2383
      %v2385 = vpop.f32.mrb[0].mxu0
      %2386 = vmatprep.mubr.f32.mxu0 0.0
      %2387 = vmatmul.mubr.f32.gmra.mrb[0].mxu0 %v2185
      %v2388 = vpop.f32.mrb[0].mxu0
      %v2389 = vadd.f32 0.0, %v2388
      %v2390 = vpop.f32.mrb[0].mxu0
      %2391 = vmatprep.mubr.f32.mxu0 0.0
      %2392 = vmatmul.mubr.f32.gmra.mrb[0].mxu0 %v2186
      %v2393 = vpop.f32.mrb[0].mxu0
      %v2394 = vadd.f32 0.0, %v2393
      %v2395 = vpop.f32.mrb[0].mxu0
      %2396 = vmatprep.mubr.f32.mxu0 0.0
      %2397 = vmatmul.mubr.f32.gmra.mrb[0].mxu0 %v2187
      %v2398 = vpop.f32.mrb[0].mxu0
      %v2399 = vadd.f32 0.0, %v2398
      %v2400 = vpop.f32.mrb[0].mxu0
      %2401 = vmatprep.mubr.f32.mxu0 0.0
      %2402 = vmatmul.mubr.f32.gmra.mrb[0].mxu0 %v2188
      %v2403 = vpop.f32.mrb[0].mxu0
      %v2404 = vadd.f32 0.0, %v2403
      %v2405 = vpop.f32.mrb[0].mxu0
      %2406 = vmatprep.mubr.f32.mxu0 0.0
      %2407 = vmatmul.mubr.f32.gmra.mrb[0].mxu0 %v2189
      %v2408 = vpop.f32.mrb[0].mxu0
      %v2409 = vadd.f32 0.0, %v2408
      %v2410 = vpop.f32.mrb[0].mxu0
      %2411 = vmatprep.mubr.f32.mxu0 0.0
      %2412 = vmatmul.mubr.f32.gmra.mrb[0].mxu0 %v2190
      %v2413 = vpop.f32.mrb[0].mxu0
      %v2414 = vadd.f32 0.0, %v2413
      %v2415 = vpop.f32.mrb[0].mxu0
      %2416 = vmatprep.mubr.f32.mxu0 0.0
      %2417 = vmatmul.mubr.f32.gmra.mrb[0].mxu0 %v2191
      %v2418 = vpop.f32.mrb[0].mxu0
      %v2419 = vadd.f32 0.0, %v2418
      %v2420 = vpop.f32.mrb[0].mxu0
      %2421 = vmatprep.mubr.f32.mxu0 0.0
      %2422 = vmatmul.mubr.f32.gmra.mrb[0].mxu0 %v2192
      %v2423 = vpop.f32.mrb[0].mxu0
      %v2424 = vadd.f32 0.0, %v2423
      %v2425 = vpop.f32.mrb[0].mxu0
      %2426 = vmatprep.mubr.f32.mxu0 0.0
      %2427 = vmatmul.mubr.f32.gmra.mrb[0].mxu0 %v2193
      %v2428 = vpop.f32.mrb[0].mxu0
      %v2429 = vadd.f32 0.0, %v2428
      %v2430 = vpop.f32.mrb[0].mxu0
      %2431 = vmatprep.mubr.f32.mxu0 0.0
      %2432 = vmatmul.mubr.f32.gmra.mrb[0].mxu0 %v2194
      %v2433 = vpop.f32.mrb[0].mxu0
      %v2434 = vadd.f32 0.0, %v2433
      %v2435 = vpop.f32.mrb[0].mxu0
      %2436 = vmatprep.mubr.f32.mxu0 0.0
      %2437 = vmatmul.mubr.f32.gmra.mrb[0].mxu0 %v2195
      %v2438 = vpop.f32.mrb[0].mxu0
      %v2439 = vadd.f32 0.0, %v2438
      %v2440 = vpop.f32.mrb[0].mxu0
      %2441 = vmatprep.mubr.f32.mxu0 0.0
      %2442 = vmatmul.mubr.f32.gmra.mrb[0].mxu0 %v2196
      %v2443 = vpop.f32.mrb[0].mxu0
      %v2444 = vadd.f32 0.0, %v2443
      %v2445 = vpop.f32.mrb[0].mxu0
      %2446 = vmatprep.mubr.f32.mxu0 0.0
      %2447 = vmatmul.mubr.f32.gmra.mrb[0].mxu0 %v2197
      %v2448 = vpop.f32.mrb[0].mxu0
      %v2449 = vadd.f32 0.0, %v2448
      %v2450 = vpop.f32.mrb[0].mxu0
      %2451 = vmatprep.mubr.f32.mxu0 0.0
      %2452 = vmatmul.mubr.f32.gmra.mrb[0].mxu0 %v2198
      %v2453 = vpop.f32.mrb[0].mxu0
      %v2454 = vadd.f32 0.0, %v2453
      %v2455 = vpop.f32.mrb[0].mxu0
      %2456 = vmatprep.mubr.f32.mxu0 0.0
      %2457 = vmatmul.mubr.f32.gmra.mrb[0].mxu0 %v2199
      %v2458 = vpop.f32.mrb[0].mxu0
      %v2459 = vadd.f32 0.0, %v2458
      %v2460 = vpop.f32.mrb[0].mxu0
      %2461 = vmatprep.mubr.f32.mxu0 0.0
      %2462 = vmatmul.mubr.f32.gmra.mrb[0].mxu0 %v2200
      %v2463 = vpop.f32.mrb[0].mxu0
      %v2464 = vadd.f32 0.0, %v2463
      %v2465 = vpop.f32.mrb[0].mxu0
      %2466 = vmatprep.mubr.f32.mxu0 0.0
      %2467 = vmatmul.mubr.f32.gmra.mrb[0].mxu0 %v2201
      %v2468 = vpop.f32.mrb[0].mxu0
      %v2469 = vadd.f32 0.0, %v2468
      %v2470 = vpop.f32.mrb[0].mxu0
      %2471 = vmatprep.mubr.f32.mxu0 0.0
      %2472 = vmatmul.mubr.f32.gmra.mrb[0].mxu0 %v2202
      %v2473 = vpop.f32.mrb[0].mxu0
      %v2474 = vadd.f32 0.0, %v2473
      %v2475 = vpop.f32.mrb[0].mxu0
      %2476 = vmatprep.mubr.f32.mxu0 0.0
      %2477 = vmatmul.mubr.f32.gmra.mrb[0].mxu0 %v2203
      %v2478 = vpop.f32.mrb[0].mxu0
      %v2479 = vadd.f32 0.0, %v2478
      %v2480 = vpop.f32.mrb[0].mxu0
      %2481 = vmatprep.mubr.f32.mxu0 0.0
      %2482 = vmatmul.mubr.f32.gmra.mrb[0].mxu0 %v2204
      %v2483 = vpop.f32.mrb[0].mxu0
      %v2484 = vadd.f32 0.0, %v2483
      %v2485 = vpop.f32.mrb[0].mxu0
      %2486 = vmatprep.mubr.f32.mxu0 0.0
      %2487 = vmatmul.mubr.f32.gmra.mrb[0].mxu0 %v2205
      %v2488 = vpop.f32.mrb[0].mxu0
      %v2489 = vadd.f32 0.0, %v2488
      %v2490 = vpop.f32.mrb[0].mxu0
      %2491 = vmatprep.mubr.f32.mxu0 0.0
      %2492 = vmatmul.mubr.f32.gmra.mrb[0].mxu0 %v2206
      %v2493 = vpop.f32.mrb[0].mxu0
      %v2494 = vadd.f32 0.0, %v2493
      %v2495 = vpop.f32.mrb[0].mxu0
      %2496 = vmatprep.mubr.f32.mxu0 0.0
      %2497 = vmatmul.mubr.f32.gmra.mrb[0].mxu0 %v2207
      %v2498 = vpop.f32.mrb[0].mxu0
      %v2499 = vadd.f32 0.0, %v2498
      %v2500 = vpop.f32.mrb[0].mxu0
      %2501 = vmatprep.mubr.f32.mxu0 0.0
      %2502 = vmatmul.mubr.f32.gmra.mrb[0].mxu0 %v2208
      %v2503 = vpop.f32.mrb[0].mxu0
      %v2504 = vadd.f32 0.0, %v2503
      %v2505 = vpop.f32.mrb[0].mxu0
      %2506 = vmatprep.mubr.f32.mxu0 0.0
      %2507 = vmatmul.mubr.f32.gmra.mrb[0].mxu0 %v2209
      %v2508 = vpop.f32.mrb[0].mxu0
      %v2509 = vadd.f32 0.0, %v2508
      %v2510 = vpop.f32.mrb[0].mxu0
      %2511 = vmatprep.mubr.f32.mxu0 0.0
      %2512 = vmatmul.mubr.f32.gmra.mrb[0].mxu0 %v2210
      %v2513 = vpop.f32.mrb[0].mxu0
      %v2514 = vadd.f32 0.0, %v2513
      %v2515 = vpop.f32.mrb[0].mxu0
      %2516 = vdwg.mxu0
      %v2517 = vadd.f32 %v2243, %v2359
      %v2518 = vadd.f32 %v2244, %v2364
      %v2519 = vadd.f32 %v2245, %v2369
      %v2520 = vadd.f32 %v2246, %v2374
      %v2521 = vadd.f32 %v2247, %v2379
      %v2522 = vadd.f32 %v2248, %v2384
      %v2523 = vadd.f32 %v2249, %v2389
      %v2524 = vadd.f32 %v2250, %v2394
      %v2525 = vadd.f32 %v2251, %v2399
      %v2526 = vadd.f32 %v2252, %v2404
      %v2527 = vadd.f32 %v2253, %v2409
      %v2528 = vadd.f32 %v2254, %v2414
      %v2529 = vadd.f32 %v2255, %v2419
      %v2530 = vadd.f32 %v2256, %v2424
      %v2531 = vadd.f32 %v2257, %v2429
      %v2532 = vadd.f32 %v2258, %v2434
      %v2533 = vadd.f32 %v2259, %v2439
      %v2534 = vadd.f32 %v2260, %v2444
      %v2535 = vadd.f32 %v2261, %v2449
      %v2536 = vadd.f32 %v2262, %v2454
      %v2537 = vadd.f32 %v2263, %v2459
      %v2538 = vadd.f32 %v2264, %v2464
      %v2539 = vadd.f32 %v2265, %v2469
      %v2540 = vadd.f32 %v2266, %v2474
      %v2541 = vadd.f32 %v2267, %v2479
      %v2542 = vadd.f32 %v2268, %v2484
      %v2543 = vadd.f32 %v2269, %v2489
      %v2544 = vadd.f32 %v2270, %v2494
      %v2545 = vadd.f32 %v2271, %v2499
      %v2546 = vadd.f32 %v2272, %v2504
      %v2547 = vadd.f32 %v2273, %v2509
      %v2548 = vadd.f32 %v2274, %v2514
      %2549 = vst [vmem:[#allocation3] sm:$0xff] %v2517
      %2550 = vst [vmem:[#allocation3 + $0x8] sm:$0xff] %v2518
      %2551 = vst [vmem:[#allocation3 + $0x10] sm:$0xff] %v2519
      %2552 = vst [vmem:[#allocation3 + $0x18] sm:$0xff] %v2520
      %2553 = vst [vmem:[#allocation3 + $0x20] sm:$0xff] %v2521
      %2554 = vst [vmem:[#allocation3 + $0x28] sm:$0xff] %v2522
      %2555 = vst [vmem:[#allocation3 + $0x30] sm:$0xff] %v2523
      %2556 = vst [vmem:[#allocation3 + $0x38] sm:$0xff] %v2524
      %2557 = vst [vmem:[#allocation3 + $0x40] sm:$0xff] %v2525
      %2558 = vst [vmem:[#allocation3 + $0x48] sm:$0xff] %v2526
      %2559 = vst [vmem:[#allocation3 + $0x50] sm:$0xff] %v2527
      %2560 = vst [vmem:[#allocation3 + $0x58] sm:$0xff] %v2528
      %2561 = vst [vmem:[#allocation3 + $0x60] sm:$0xff] %v2529
      %2562 = vst [vmem:[#allocation3 + $0x68] sm:$0xff] %v2530
      %2563 = vst [vmem:[#allocation3 + $0x70] sm:$0xff] %v2531
      %2564 = vst [vmem:[#allocation3 + $0x78] sm:$0xff] %v2532
      %2565 = vst [vmem:[#allocation3 + $0x80] sm:$0xff] %v2533
      %2566 = vst [vmem:[#allocation3 + $0x88] sm:$0xff] %v2534
      %2567 = vst [vmem:[#allocation3 + $0x90] sm:$0xff] %v2535
      %2568 = vst [vmem:[#allocation3 + $0x98] sm:$0xff] %v2536
      %2569 = vst [vmem:[#allocation3 + $0xa0] sm:$0xff] %v2537
      %2570 = vst [vmem:[#allocation3 + $0xa8] sm:$0xff] %v2538
      %2571 = vst [vmem:[#allocation3 + $0xb0] sm:$0xff] %v2539
      %2572 = vst [vmem:[#allocation3 + $0xb8] sm:$0xff] %v2540
      %2573 = vst [vmem:[#allocation3 + $0xc0] sm:$0xff] %v2541
      %2574 = vst [vmem:[#allocation3 + $0xc8] sm:$0xff] %v2542
      %2575 = vst [vmem:[#allocation3 + $0xd0] sm:$0xff] %v2543
      %2576 = vst [vmem:[#allocation3 + $0xd8] sm:$0xff] %v2544
      %2577 = vst [vmem:[#allocation3 + $0xe0] sm:$0xff] %v2545
      %2578 = vst [vmem:[#allocation3 + $0xe8] sm:$0xff] %v2546
      %2579 = vst [vmem:[#allocation3 + $0xf0] sm:$0xff] %v2547
      %2580 = vst [vmem:[#allocation3 + $0xf8] sm:$0xff] %v2548
      %v2581 = vld [vmem:[#allocation2] sm:$0xff]
      %v2582 = vld [vmem:[#allocation2 + $0x8] sm:$0xff]
      %v2583 = vld [vmem:[#allocation2 + $0x10] sm:$0xff]
      %v2584 = vld [vmem:[#allocation2 + $0x18] sm:$0xff]
      %v2585 = vld [vmem:[#allocation2 + $0x20] sm:$0xff]
      %v2586 = vld [vmem:[#allocation2 + $0x28] sm:$0xff]
      %v2587 = vld [vmem:[#allocation2 + $0x30] sm:$0xff]
      %v2588 = vld [vmem:[#allocation2 + $0x38] sm:$0xff]
      %v2589 = vld [vmem:[#allocation2 + $0x40] sm:$0xff]
      %v2590 = vld [vmem:[#allocation2 + $0x48] sm:$0xff]
      %v2591 = vld [vmem:[#allocation2 + $0x50] sm:$0xff]
      %v2592 = vld [vmem:[#allocation2 + $0x58] sm:$0xff]
      %v2593 = vld [vmem:[#allocation2 + $0x60] sm:$0xff]
      %v2594 = vld [vmem:[#allocation2 + $0x68] sm:$0xff]
      %v2595 = vld [vmem:[#allocation2 + $0x70] sm:$0xff]
      %v2596 = vld [vmem:[#allocation2 + $0x78] sm:$0xff]
      %v2597 = vld [vmem:[#allocation2 + $0x80] sm:$0xff]
      %v2598 = vld [vmem:[#allocation2 + $0x88] sm:$0xff]
      %v2599 = vld [vmem:[#allocation2 + $0x90] sm:$0xff]
      %v2600 = vld [vmem:[#allocation2 + $0x98] sm:$0xff]
      %v2601 = vld [vmem:[#allocation2 + $0xa0] sm:$0xff]
      %v2602 = vld [vmem:[#allocation2 + $0xa8] sm:$0xff]
      %v2603 = vld [vmem:[#allocation2 + $0xb0] sm:$0xff]
      %v2604 = vld [vmem:[#allocation2 + $0xb8] sm:$0xff]
      %v2605 = vld [vmem:[#allocation2 + $0xc0] sm:$0xff]
      %v2606 = vld [vmem:[#allocation2 + $0xc8] sm:$0xff]
      %v2607 = vld [vmem:[#allocation2 + $0xd0] sm:$0xff]
      %v2608 = vld [vmem:[#allocation2 + $0xd8] sm:$0xff]
      %v2609 = vld [vmem:[#allocation2 + $0xe0] sm:$0xff]
      %v2610 = vld [vmem:[#allocation2 + $0xe8] sm:$0xff]
      %v2611 = vld [vmem:[#allocation2 + $0xf0] sm:$0xff]
      %v2612 = vld [vmem:[#allocation2 + $0xf8] sm:$0xff]
      %v2613 = vld [vmem:[#allocation2 + $0x100] sm:$0xff]
      %v2614 = vld [vmem:[#allocation2 + $0x108] sm:$0xff]
      %v2615 = vld [vmem:[#allocation2 + $0x110] sm:$0xff]
      %v2616 = vld [vmem:[#allocation2 + $0x118] sm:$0xff]
      %v2617 = vld [vmem:[#allocation2 + $0x120] sm:$0xff]
      %v2618 = vld [vmem:[#allocation2 + $0x128] sm:$0xff]
      %v2619 = vld [vmem:[#allocation2 + $0x130] sm:$0xff]
      %v2620 = vld [vmem:[#allocation2 + $0x138] sm:$0xff]
      %v2621 = vld [vmem:[#allocation2 + $0x140] sm:$0xff]
      %v2622 = vld [vmem:[#allocation2 + $0x148] sm:$0xff]
      %v2623 = vld [vmem:[#allocation2 + $0x150] sm:$0xff]
      %v2624 = vld [vmem:[#allocation2 + $0x158] sm:$0xff]
      %v2625 = vld [vmem:[#allocation2 + $0x160] sm:$0xff]
      %v2626 = vld [vmem:[#allocation2 + $0x168] sm:$0xff]
      %v2627 = vld [vmem:[#allocation2 + $0x170] sm:$0xff]
      %v2628 = vld [vmem:[#allocation2 + $0x178] sm:$0xff]
      %v2629 = vld [vmem:[%s1197] sm:$0xff]
      %v2630 = vld [vmem:[%s1197 + $0x8] sm:$0xff]
      %v2631 = vld [vmem:[%s1197 + $0x10] sm:$0xff]
      %v2632 = vld [vmem:[%s1197 + $0x18] sm:$0xff]
      %v2633 = vld [vmem:[%s1197 + $0x20] sm:$0xff]
      %v2634 = vld [vmem:[%s1197 + $0x28] sm:$0xff]
      %v2635 = vld [vmem:[%s1197 + $0x30] sm:$0xff]
      %v2636 = vld [vmem:[%s1197 + $0x38] sm:$0xff]
      %v2637 = vld [vmem:[%s1197 + $0x40] sm:$0xff]
      %v2638 = vld [vmem:[%s1197 + $0x48] sm:$0xff]
      %v2639 = vld [vmem:[%s1197 + $0x50] sm:$0xff]
      %v2640 = vld [vmem:[%s1197 + $0x58] sm:$0xff]
      %v2641 = vld [vmem:[%s1197 + $0x60] sm:$0xff]
      %v2642 = vld [vmem:[%s1197 + $0x68] sm:$0xff]
      %v2643 = vld [vmem:[%s1197 + $0x70] sm:$0xff]
      %v2644 = vld [vmem:[%s1197 + $0x78] sm:$0xff]
      %v2645 = vld [vmem:[%s1197 + $0x80] sm:$0xff]
      %v2646 = vld [vmem:[%s1197 + $0x88] sm:$0xff]
      %v2647 = vld [vmem:[%s1197 + $0x90] sm:$0xff]
      %v2648 = vld [vmem:[%s1197 + $0x98] sm:$0xff]
      %v2649 = vld [vmem:[%s1197 + $0xa0] sm:$0xff]
      %v2650 = vld [vmem:[%s1197 + $0xa8] sm:$0xff]
      %v2651 = vld [vmem:[%s1197 + $0xb0] sm:$0xff]
      %v2652 = vld [vmem:[%s1197 + $0xb8] sm:$0xff]
      %v2653 = vld [vmem:[%s1197 + $0xc0] sm:$0xff]
      %v2654 = vld [vmem:[%s1197 + $0xc8] sm:$0xff]
      %v2655 = vld [vmem:[%s1197 + $0xd0] sm:$0xff]
      %v2656 = vld [vmem:[%s1197 + $0xd8] sm:$0xff]
      %v2657 = vld [vmem:[%s1197 + $0xe0] sm:$0xff]
      %v2658 = vld [vmem:[%s1197 + $0xe8] sm:$0xff]
      %v2659 = vld [vmem:[%s1197 + $0xf0] sm:$0xff]
      %v2660 = vld [vmem:[%s1197 + $0xf8] sm:$0xff]
      %v2661 = vld [vmem:[%s1197 + $0x100] sm:$0xff]
      %v2662 = vld [vmem:[%s1197 + $0x108] sm:$0xff]
      %v2663 = vld [vmem:[%s1197 + $0x110] sm:$0xff]
      %v2664 = vld [vmem:[%s1197 + $0x118] sm:$0xff]
      %v2665 = vld [vmem:[%s1197 + $0x120] sm:$0xff]
      %v2666 = vld [vmem:[%s1197 + $0x128] sm:$0xff]
      %v2667 = vld [vmem:[%s1197 + $0x130] sm:$0xff]
      %v2668 = vld [vmem:[%s1197 + $0x138] sm:$0xff]
      %v2669 = vld [vmem:[%s1197 + $0x140] sm:$0xff]
      %v2670 = vld [vmem:[%s1197 + $0x148] sm:$0xff]
      %v2671 = vld [vmem:[%s1197 + $0x150] sm:$0xff]
      %v2672 = vld [vmem:[%s1197 + $0x158] sm:$0xff]
      %v2673 = vld [vmem:[%s1197 + $0x160] sm:$0xff]
      %v2674 = vld [vmem:[%s1197 + $0x168] sm:$0xff]
      %v2675 = vld [vmem:[%s1197 + $0x170] sm:$0xff]
      %v2676 = vld [vmem:[%s1197 + $0x178] sm:$0xff]
      %v2677 = vmax.f32 %v2581, %v2629
      %v2678 = vmax.f32 %v2582, %v2630
      %v2679 = vmax.f32 %v2583, %v2631
      %v2680 = vmax.f32 %v2584, %v2632
      %v2681 = vmax.f32 %v2585, %v2633
      %v2682 = vmax.f32 %v2586, %v2634
      %v2683 = vmax.f32 %v2587, %v2635
      %v2684 = vmax.f32 %v2588, %v2636
      %v2685 = vmax.f32 %v2589, %v2637
      %v2686 = vmax.f32 %v2590, %v2638
      %v2687 = vmax.f32 %v2591, %v2639
      %v2688 = vmax.f32 %v2592, %v2640
      %v2689 = vmax.f32 %v2593, %v2641
      %v2690 = vmax.f32 %v2594, %v2642
      %v2691 = vmax.f32 %v2595, %v2643
      %v2692 = vmax.f32 %v2596, %v2644
      %v2693 = vmax.f32 %v2597, %v2645
      %v2694 = vmax.f32 %v2598, %v2646
      %v2695 = vmax.f32 %v2599, %v2647
      %v2696 = vmax.f32 %v2600, %v2648
      %v2697 = vmax.f32 %v2601, %v2649
      %v2698 = vmax.f32 %v2602, %v2650
      %v2699 = vmax.f32 %v2603, %v2651
      %v2700 = vmax.f32 %v2604, %v2652
      %v2701 = vmax.f32 %v2605, %v2653
      %v2702 = vmax.f32 %v2606, %v2654
      %v2703 = vmax.f32 %v2607, %v2655
      %v2704 = vmax.f32 %v2608, %v2656
      %v2705 = vmax.f32 %v2609, %v2657
      %v2706 = vmax.f32 %v2610, %v2658
      %v2707 = vmax.f32 %v2611, %v2659
      %v2708 = vmax.f32 %v2612, %v2660
      %v2709 = vmax.f32 %v2613, %v2661
      %v2710 = vmax.f32 %v2614, %v2662
      %v2711 = vmax.f32 %v2615, %v2663
      %v2712 = vmax.f32 %v2616, %v2664
      %v2713 = vmax.f32 %v2617, %v2665
      %v2714 = vmax.f32 %v2618, %v2666
      %v2715 = vmax.f32 %v2619, %v2667
      %v2716 = vmax.f32 %v2620, %v2668
      %v2717 = vmax.f32 %v2621, %v2669
      %v2718 = vmax.f32 %v2622, %v2670
      %v2719 = vmax.f32 %v2623, %v2671
      %v2720 = vmax.f32 %v2624, %v2672
      %v2721 = vmax.f32 %v2625, %v2673
      %v2722 = vmax.f32 %v2626, %v2674
      %v2723 = vmax.f32 %v2627, %v2675
      %v2724 = vmax.f32 %v2628, %v2676
      %v2725 = vld [vmem:[%s1116] sm:$0xff]
      %v2726 = vld [vmem:[%s1116 + $0x8] sm:$0xff]
      %v2727 = vld [vmem:[%s1116 + $0x10] sm:$0xff]
      %v2728 = vld [vmem:[%s1116 + $0x18] sm:$0xff]
      %v2729 = vld [vmem:[%s1116 + $0x20] sm:$0xff]
      %v2730 = vld [vmem:[%s1116 + $0x28] sm:$0xff]
      %v2731 = vld [vmem:[%s1116 + $0x30] sm:$0xff]
      %v2732 = vld [vmem:[%s1116 + $0x38] sm:$0xff]
      %v2733 = vld [vmem:[%s1116 + $0x40] sm:$0xff]
      %v2734 = vld [vmem:[%s1116 + $0x48] sm:$0xff]
      %v2735 = vld [vmem:[%s1116 + $0x50] sm:$0xff]
      %v2736 = vld [vmem:[%s1116 + $0x58] sm:$0xff]
      %v2737 = vld [vmem:[%s1116 + $0x60] sm:$0xff]
      %v2738 = vld [vmem:[%s1116 + $0x68] sm:$0xff]
      %v2739 = vld [vmem:[%s1116 + $0x70] sm:$0xff]
      %v2740 = vld [vmem:[%s1116 + $0x78] sm:$0xff]
      %v2741 = vld [vmem:[%s1116 + $0x80] sm:$0xff]
      %v2742 = vld [vmem:[%s1116 + $0x88] sm:$0xff]
      %v2743 = vld [vmem:[%s1116 + $0x90] sm:$0xff]
      %v2744 = vld [vmem:[%s1116 + $0x98] sm:$0xff]
      %v2745 = vld [vmem:[%s1116 + $0xa0] sm:$0xff]
      %v2746 = vld [vmem:[%s1116 + $0xa8] sm:$0xff]
      %v2747 = vld [vmem:[%s1116 + $0xb0] sm:$0xff]
      %v2748 = vld [vmem:[%s1116 + $0xb8] sm:$0xff]
      %v2749 = vld [vmem:[%s1116 + $0xc0] sm:$0xff]
      %v2750 = vld [vmem:[%s1116 + $0xc8] sm:$0xff]
      %v2751 = vld [vmem:[%s1116 + $0xd0] sm:$0xff]
      %v2752 = vld [vmem:[%s1116 + $0xd8] sm:$0xff]
      %v2753 = vld [vmem:[%s1116 + $0xe0] sm:$0xff]
      %v2754 = vld [vmem:[%s1116 + $0xe8] sm:$0xff]
      %v2755 = vld [vmem:[%s1116 + $0xf0] sm:$0xff]
      %v2756 = vld [vmem:[%s1116 + $0xf8] sm:$0xff]
      %v2757 = vld [vmem:[%s1116 + $0x100] sm:$0xff]
      %v2758 = vld [vmem:[%s1116 + $0x108] sm:$0xff]
      %v2759 = vld [vmem:[%s1116 + $0x110] sm:$0xff]
      %v2760 = vld [vmem:[%s1116 + $0x118] sm:$0xff]
      %v2761 = vld [vmem:[%s1116 + $0x120] sm:$0xff]
      %v2762 = vld [vmem:[%s1116 + $0x128] sm:$0xff]
      %v2763 = vld [vmem:[%s1116 + $0x130] sm:$0xff]
      %v2764 = vld [vmem:[%s1116 + $0x138] sm:$0xff]
      %v2765 = vld [vmem:[%s1116 + $0x140] sm:$0xff]
      %v2766 = vld [vmem:[%s1116 + $0x148] sm:$0xff]
      %v2767 = vld [vmem:[%s1116 + $0x150] sm:$0xff]
      %v2768 = vld [vmem:[%s1116 + $0x158] sm:$0xff]
      %v2769 = vld [vmem:[%s1116 + $0x160] sm:$0xff]
      %v2770 = vld [vmem:[%s1116 + $0x168] sm:$0xff]
      %v2771 = vld [vmem:[%s1116 + $0x170] sm:$0xff]
      %v2772 = vld [vmem:[%s1116 + $0x178] sm:$0xff]
      %v2773 = vmax.f32 %v2677, %v2725
      %v2774 = vmax.f32 %v2678, %v2726
      %v2775 = vmax.f32 %v2679, %v2727
      %v2776 = vmax.f32 %v2680, %v2728
      %v2777 = vmax.f32 %v2681, %v2729
      %v2778 = vmax.f32 %v2682, %v2730
      %v2779 = vmax.f32 %v2683, %v2731
      %v2780 = vmax.f32 %v2684, %v2732
      %v2781 = vmax.f32 %v2685, %v2733
      %v2782 = vmax.f32 %v2686, %v2734
      %v2783 = vmax.f32 %v2687, %v2735
      %v2784 = vmax.f32 %v2688, %v2736
      %v2785 = vmax.f32 %v2689, %v2737
      %v2786 = vmax.f32 %v2690, %v2738
      %v2787 = vmax.f32 %v2691, %v2739
      %v2788 = vmax.f32 %v2692, %v2740
      %v2789 = vmax.f32 %v2693, %v2741
      %v2790 = vmax.f32 %v2694, %v2742
      %v2791 = vmax.f32 %v2695, %v2743
      %v2792 = vmax.f32 %v2696, %v2744
      %v2793 = vmax.f32 %v2697, %v2745
      %v2794 = vmax.f32 %v2698, %v2746
      %v2795 = vmax.f32 %v2699, %v2747
      %v2796 = vmax.f32 %v2700, %v2748
      %v2797 = vmax.f32 %v2701, %v2749
      %v2798 = vmax.f32 %v2702, %v2750
      %v2799 = vmax.f32 %v2703, %v2751
      %v2800 = vmax.f32 %v2704, %v2752
      %v2801 = vmax.f32 %v2705, %v2753
      %v2802 = vmax.f32 %v2706, %v2754
      %v2803 = vmax.f32 %v2707, %v2755
      %v2804 = vmax.f32 %v2708, %v2756
      %v2805 = vmax.f32 %v2709, %v2757
      %v2806 = vmax.f32 %v2710, %v2758
      %v2807 = vmax.f32 %v2711, %v2759
      %v2808 = vmax.f32 %v2712, %v2760
      %v2809 = vmax.f32 %v2713, %v2761
      %v2810 = vmax.f32 %v2714, %v2762
      %v2811 = vmax.f32 %v2715, %v2763
      %v2812 = vmax.f32 %v2716, %v2764
      %v2813 = vmax.f32 %v2717, %v2765
      %v2814 = vmax.f32 %v2718, %v2766
      %v2815 = vmax.f32 %v2719, %v2767
      %v2816 = vmax.f32 %v2720, %v2768
      %v2817 = vmax.f32 %v2721, %v2769
      %v2818 = vmax.f32 %v2722, %v2770
      %v2819 = vmax.f32 %v2723, %v2771
      %v2820 = vmax.f32 %v2724, %v2772
      %v2821 = vld [vmem:[%s1390] sm:$0xff]
      %v2822 = vld [vmem:[%s1390 + $0x8] sm:$0xff]
      %v2823 = vld [vmem:[%s1390 + $0x10] sm:$0xff]
      %v2824 = vld [vmem:[%s1390 + $0x18] sm:$0xff]
      %v2825 = vld [vmem:[%s1390 + $0x20] sm:$0xff]
      %v2826 = vld [vmem:[%s1390 + $0x28] sm:$0xff]
      %v2827 = vld [vmem:[%s1390 + $0x30] sm:$0xff]
      %v2828 = vld [vmem:[%s1390 + $0x38] sm:$0xff]
      %v2829 = vld [vmem:[%s1390 + $0x40] sm:$0xff]
      %v2830 = vld [vmem:[%s1390 + $0x48] sm:$0xff]
      %v2831 = vld [vmem:[%s1390 + $0x50] sm:$0xff]
      %v2832 = vld [vmem:[%s1390 + $0x58] sm:$0xff]
      %v2833 = vld [vmem:[%s1390 + $0x60] sm:$0xff]
      %v2834 = vld [vmem:[%s1390 + $0x68] sm:$0xff]
      %v2835 = vld [vmem:[%s1390 + $0x70] sm:$0xff]
      %v2836 = vld [vmem:[%s1390 + $0x78] sm:$0xff]
      %v2837 = vld [vmem:[%s1390 + $0x80] sm:$0xff]
      %v2838 = vld [vmem:[%s1390 + $0x88] sm:$0xff]
      %v2839 = vld [vmem:[%s1390 + $0x90] sm:$0xff]
      %v2840 = vld [vmem:[%s1390 + $0x98] sm:$0xff]
      %v2841 = vld [vmem:[%s1390 + $0xa0] sm:$0xff]
      %v2842 = vld [vmem:[%s1390 + $0xa8] sm:$0xff]
      %v2843 = vld [vmem:[%s1390 + $0xb0] sm:$0xff]
      %v2844 = vld [vmem:[%s1390 + $0xb8] sm:$0xff]
      %v2845 = vld [vmem:[%s1390 + $0xc0] sm:$0xff]
      %v2846 = vld [vmem:[%s1390 + $0xc8] sm:$0xff]
      %v2847 = vld [vmem:[%s1390 + $0xd0] sm:$0xff]
      %v2848 = vld [vmem:[%s1390 + $0xd8] sm:$0xff]
      %v2849 = vld [vmem:[%s1390 + $0xe0] sm:$0xff]
      %v2850 = vld [vmem:[%s1390 + $0xe8] sm:$0xff]
      %v2851 = vld [vmem:[%s1390 + $0xf0] sm:$0xff]
      %v2852 = vld [vmem:[%s1390 + $0xf8] sm:$0xff]
      %v2853 = vld [vmem:[%s1390 + $0x100] sm:$0xff]
      %v2854 = vld [vmem:[%s1390 + $0x108] sm:$0xff]
      %v2855 = vld [vmem:[%s1390 + $0x110] sm:$0xff]
      %v2856 = vld [vmem:[%s1390 + $0x118] sm:$0xff]
      %v2857 = vld [vmem:[%s1390 + $0x120] sm:$0xff]
      %v2858 = vld [vmem:[%s1390 + $0x128] sm:$0xff]
      %v2859 = vld [vmem:[%s1390 + $0x130] sm:$0xff]
      %v2860 = vld [vmem:[%s1390 + $0x138] sm:$0xff]
      %v2861 = vld [vmem:[%s1390 + $0x140] sm:$0xff]
      %v2862 = vld [vmem:[%s1390 + $0x148] sm:$0xff]
      %v2863 = vld [vmem:[%s1390 + $0x150] sm:$0xff]
      %v2864 = vld [vmem:[%s1390 + $0x158] sm:$0xff]
      %v2865 = vld [vmem:[%s1390 + $0x160] sm:$0xff]
      %v2866 = vld [vmem:[%s1390 + $0x168] sm:$0xff]
      %v2867 = vld [vmem:[%s1390 + $0x170] sm:$0xff]
      %v2868 = vld [vmem:[%s1390 + $0x178] sm:$0xff]
      %v2869 = vmax.f32 %v2773, %v2821
      %v2870 = vmax.f32 %v2774, %v2822
      %v2871 = vmax.f32 %v2775, %v2823
      %v2872 = vmax.f32 %v2776, %v2824
      %v2873 = vmax.f32 %v2777, %v2825
      %v2874 = vmax.f32 %v2778, %v2826
      %v2875 = vmax.f32 %v2779, %v2827
      %v2876 = vmax.f32 %v2780, %v2828
      %v2877 = vmax.f32 %v2781, %v2829
      %v2878 = vmax.f32 %v2782, %v2830
      %v2879 = vmax.f32 %v2783, %v2831
      %v2880 = vmax.f32 %v2784, %v2832
      %v2881 = vmax.f32 %v2785, %v2833
      %v2882 = vmax.f32 %v2786, %v2834
      %v2883 = vmax.f32 %v2787, %v2835
      %v2884 = vmax.f32 %v2788, %v2836
      %v2885 = vmax.f32 %v2789, %v2837
      %v2886 = vmax.f32 %v2790, %v2838
      %v2887 = vmax.f32 %v2791, %v2839
      %v2888 = vmax.f32 %v2792, %v2840
      %v2889 = vmax.f32 %v2793, %v2841
      %v2890 = vmax.f32 %v2794, %v2842
      %v2891 = vmax.f32 %v2795, %v2843
      %v2892 = vmax.f32 %v2796, %v2844
      %v2893 = vmax.f32 %v2797, %v2845
      %v2894 = vmax.f32 %v2798, %v2846
      %v2895 = vmax.f32 %v2799, %v2847
      %v2896 = vmax.f32 %v2800, %v2848
      %v2897 = vmax.f32 %v2801, %v2849
      %v2898 = vmax.f32 %v2802, %v2850
      %v2899 = vmax.f32 %v2803, %v2851
      %v2900 = vmax.f32 %v2804, %v2852
      %v2901 = vmax.f32 %v2805, %v2853
      %v2902 = vmax.f32 %v2806, %v2854
      %v2903 = vmax.f32 %v2807, %v2855
      %v2904 = vmax.f32 %v2808, %v2856
      %v2905 = vmax.f32 %v2809, %v2857
      %v2906 = vmax.f32 %v2810, %v2858
      %v2907 = vmax.f32 %v2811, %v2859
      %v2908 = vmax.f32 %v2812, %v2860
      %v2909 = vmax.f32 %v2813, %v2861
      %v2910 = vmax.f32 %v2814, %v2862
      %v2911 = vmax.f32 %v2815, %v2863
      %v2912 = vmax.f32 %v2816, %v2864
      %v2913 = vmax.f32 %v2817, %v2865
      %v2914 = vmax.f32 %v2818, %v2866
      %v2915 = vmax.f32 %v2819, %v2867
      %v2916 = vmax.f32 %v2820, %v2868
      %v2917 = vld [vmem:[%s1487] sm:$0xff]
      %v2918 = vld [vmem:[%s1487 + $0x8] sm:$0xff]
      %v2919 = vld [vmem:[%s1487 + $0x10] sm:$0xff]
      %v2920 = vld [vmem:[%s1487 + $0x18] sm:$0xff]
      %v2921 = vld [vmem:[%s1487 + $0x20] sm:$0xff]
      %v2922 = vld [vmem:[%s1487 + $0x28] sm:$0xff]
      %v2923 = vld [vmem:[%s1487 + $0x30] sm:$0xff]
      %v2924 = vld [vmem:[%s1487 + $0x38] sm:$0xff]
      %v2925 = vld [vmem:[%s1487 + $0x40] sm:$0xff]
      %v2926 = vld [vmem:[%s1487 + $0x48] sm:$0xff]
      %v2927 = vld [vmem:[%s1487 + $0x50] sm:$0xff]
      %v2928 = vld [vmem:[%s1487 + $0x58] sm:$0xff]
      %v2929 = vld [vmem:[%s1487 + $0x60] sm:$0xff]
      %v2930 = vld [vmem:[%s1487 + $0x68] sm:$0xff]
      %v2931 = vld [vmem:[%s1487 + $0x70] sm:$0xff]
      %v2932 = vld [vmem:[%s1487 + $0x78] sm:$0xff]
      %v2933 = vld [vmem:[%s1487 + $0x80] sm:$0xff]
      %v2934 = vld [vmem:[%s1487 + $0x88] sm:$0xff]
      %v2935 = vld [vmem:[%s1487 + $0x90] sm:$0xff]
      %v2936 = vld [vmem:[%s1487 + $0x98] sm:$0xff]
      %v2937 = vld [vmem:[%s1487 + $0xa0] sm:$0xff]
      %v2938 = vld [vmem:[%s1487 + $0xa8] sm:$0xff]
      %v2939 = vld [vmem:[%s1487 + $0xb0] sm:$0xff]
      %v2940 = vld [vmem:[%s1487 + $0xb8] sm:$0xff]
      %v2941 = vld [vmem:[%s1487 + $0xc0] sm:$0xff]
      %v2942 = vld [vmem:[%s1487 + $0xc8] sm:$0xff]
      %v2943 = vld [vmem:[%s1487 + $0xd0] sm:$0xff]
      %v2944 = vld [vmem:[%s1487 + $0xd8] sm:$0xff]
      %v2945 = vld [vmem:[%s1487 + $0xe0] sm:$0xff]
      %v2946 = vld [vmem:[%s1487 + $0xe8] sm:$0xff]
      %v2947 = vld [vmem:[%s1487 + $0xf0] sm:$0xff]
      %v2948 = vld [vmem:[%s1487 + $0xf8] sm:$0xff]
      %v2949 = vld [vmem:[%s1487 + $0x100] sm:$0xff]
      %v2950 = vld [vmem:[%s1487 + $0x108] sm:$0xff]
      %v2951 = vld [vmem:[%s1487 + $0x110] sm:$0xff]
      %v2952 = vld [vmem:[%s1487 + $0x118] sm:$0xff]
      %v2953 = vld [vmem:[%s1487 + $0x120] sm:$0xff]
      %v2954 = vld [vmem:[%s1487 + $0x128] sm:$0xff]
      %v2955 = vld [vmem:[%s1487 + $0x130] sm:$0xff]
      %v2956 = vld [vmem:[%s1487 + $0x138] sm:$0xff]
      %v2957 = vld [vmem:[%s1487 + $0x140] sm:$0xff]
      %v2958 = vld [vmem:[%s1487 + $0x148] sm:$0xff]
      %v2959 = vld [vmem:[%s1487 + $0x150] sm:$0xff]
      %v2960 = vld [vmem:[%s1487 + $0x158] sm:$0xff]
      %v2961 = vld [vmem:[%s1487 + $0x160] sm:$0xff]
      %v2962 = vld [vmem:[%s1487 + $0x168] sm:$0xff]
      %v2963 = vld [vmem:[%s1487 + $0x170] sm:$0xff]
      %v2964 = vld [vmem:[%s1487 + $0x178] sm:$0xff]
      %v2965 = vmax.f32 %v2869, %v2917
      %v2966 = vmax.f32 %v2870, %v2918
      %v2967 = vmax.f32 %v2871, %v2919
      %v2968 = vmax.f32 %v2872, %v2920
      %v2969 = vmax.f32 %v2873, %v2921
      %v2970 = vmax.f32 %v2874, %v2922
      %v2971 = vmax.f32 %v2875, %v2923
      %v2972 = vmax.f32 %v2876, %v2924
      %v2973 = vmax.f32 %v2877, %v2925
      %v2974 = vmax.f32 %v2878, %v2926
      %v2975 = vmax.f32 %v2879, %v2927
      %v2976 = vmax.f32 %v2880, %v2928
      %v2977 = vmax.f32 %v2881, %v2929
      %v2978 = vmax.f32 %v2882, %v2930
      %v2979 = vmax.f32 %v2883, %v2931
      %v2980 = vmax.f32 %v2884, %v2932
      %v2981 = vmax.f32 %v2885, %v2933
      %v2982 = vmax.f32 %v2886, %v2934
      %v2983 = vmax.f32 %v2887, %v2935
      %v2984 = vmax.f32 %v2888, %v2936
      %v2985 = vmax.f32 %v2889, %v2937
      %v2986 = vmax.f32 %v2890, %v2938
      %v2987 = vmax.f32 %v2891, %v2939
      %v2988 = vmax.f32 %v2892, %v2940
      %v2989 = vmax.f32 %v2893, %v2941
      %v2990 = vmax.f32 %v2894, %v2942
      %v2991 = vmax.f32 %v2895, %v2943
      %v2992 = vmax.f32 %v2896, %v2944
      %v2993 = vmax.f32 %v2897, %v2945
      %v2994 = vmax.f32 %v2898, %v2946
      %v2995 = vmax.f32 %v2899, %v2947
      %v2996 = vmax.f32 %v2900, %v2948
      %v2997 = vmax.f32 %v2901, %v2949
      %v2998 = vmax.f32 %v2902, %v2950
      %v2999 = vmax.f32 %v2903, %v2951
      %v3000 = vmax.f32 %v2904, %v2952
      %v3001 = vmax.f32 %v2905, %v2953
      %v3002 = vmax.f32 %v2906, %v2954
      %v3003 = vmax.f32 %v2907, %v2955
      %v3004 = vmax.f32 %v2908, %v2956
      %v3005 = vmax.f32 %v2909, %v2957
      %v3006 = vmax.f32 %v2910, %v2958
      %v3007 = vmax.f32 %v2911, %v2959
      %v3008 = vmax.f32 %v2912, %v2960
      %v3009 = vmax.f32 %v2913, %v2961
      %v3010 = vmax.f32 %v2914, %v2962
      %v3011 = vmax.f32 %v2915, %v2963
      %v3012 = vmax.f32 %v2916, %v2964
      %v3061 = vrot.slane %v2965, 1
      %v3062 = vrot.slane %v2966, 1
      %v3063 = vsel %vm1632, %v3061, %v3062
      %v3064 = vrot.slane %v2967, 1
      %v3065 = vsel %vm1632, %v3062, %v3064
      %v3066 = vrot.slane %v2968, 1
      %v3067 = vrot.slane %v2969, 1
      %v3068 = vsel %vm1632, %v3066, %v3067
      %v3069 = vrot.slane %v2970, 1
      %v3070 = vsel %vm1632, %v3067, %v3069
      %v3071 = vrot.slane %v2971, 1
      %v3072 = vrot.slane %v2972, 1
      %v3073 = vsel %vm1632, %v3071, %v3072
      %v3074 = vrot.slane %v2973, 1
      %v3075 = vsel %vm1632, %v3072, %v3074
      %v3076 = vrot.slane %v2974, 1
      %v3077 = vrot.slane %v2975, 1
      %v3078 = vsel %vm1632, %v3076, %v3077
      %v3079 = vrot.slane %v2976, 1
      %v3080 = vsel %vm1632, %v3077, %v3079
      %v3081 = vrot.slane %v2977, 1
      %v3082 = vrot.slane %v2978, 1
      %v3083 = vsel %vm1632, %v3081, %v3082
      %v3084 = vrot.slane %v2979, 1
      %v3085 = vsel %vm1632, %v3082, %v3084
      %v3086 = vrot.slane %v2980, 1
      %v3087 = vrot.slane %v2981, 1
      %v3088 = vsel %vm1632, %v3086, %v3087
      %v3089 = vrot.slane %v2982, 1
      %v3090 = vsel %vm1632, %v3087, %v3089
      %v3091 = vrot.slane %v2983, 1
      %v3092 = vrot.slane %v2984, 1
      %v3093 = vsel %vm1632, %v3091, %v3092
      %v3094 = vrot.slane %v2985, 1
      %v3095 = vsel %vm1632, %v3092, %v3094
      %v3096 = vrot.slane %v2986, 1
      %v3097 = vrot.slane %v2987, 1
      %v3098 = vsel %vm1632, %v3096, %v3097
      %v3099 = vrot.slane %v2988, 1
      %v3100 = vsel %vm1632, %v3097, %v3099
      %v3101 = vrot.slane %v2989, 1
      %v3102 = vrot.slane %v2990, 1
      %v3103 = vsel %vm1632, %v3101, %v3102
      %v3104 = vrot.slane %v2991, 1
      %v3105 = vsel %vm1632, %v3102, %v3104
      %v3106 = vrot.slane %v2992, 1
      %v3107 = vrot.slane %v2993, 1
      %v3108 = vsel %vm1632, %v3106, %v3107
      %v3109 = vrot.slane %v2994, 1
      %v3110 = vsel %vm1632, %v3107, %v3109
      %v3111 = vrot.slane %v2995, 1
      %v3112 = vrot.slane %v2996, 1
      %v3113 = vsel %vm1632, %v3111, %v3112
      %v3114 = vrot.slane %v2997, 1
      %v3115 = vsel %vm1632, %v3112, %v3114
      %v3116 = vrot.slane %v2998, 1
      %v3117 = vrot.slane %v2999, 1
      %v3118 = vsel %vm1632, %v3116, %v3117
      %v3119 = vrot.slane %v3000, 1
      %v3120 = vsel %vm1632, %v3117, %v3119
      %v3121 = vrot.slane %v3001, 1
      %v3122 = vrot.slane %v3002, 1
      %v3123 = vsel %vm1632, %v3121, %v3122
      %v3124 = vrot.slane %v3003, 1
      %v3125 = vsel %vm1632, %v3122, %v3124
      %v3126 = vrot.slane %v3004, 1
      %v3127 = vrot.slane %v3005, 1
      %v3128 = vsel %vm1632, %v3126, %v3127
      %v3129 = vrot.slane %v3006, 1
      %v3130 = vsel %vm1632, %v3127, %v3129
      %v3131 = vrot.slane %v3007, 1
      %v3132 = vrot.slane %v3008, 1
      %v3133 = vsel %vm1632, %v3131, %v3132
      %v3134 = vrot.slane %v3009, 1
      %v3135 = vsel %vm1632, %v3132, %v3134
      %v3136 = vrot.slane %v3010, 1
      %v3137 = vrot.slane %v3011, 1
      %v3138 = vsel %vm1632, %v3136, %v3137
      %v3139 = vrot.slane %v3012, 1
      %v3140 = vsel %vm1632, %v3137, %v3139
      %v3173 = vmax.f32 %v2965, %v3063
      %v3174 = vmax.f32 %v2966, %v3065
      %v3175 = vmax.f32 %v2968, %v3068
      %v3176 = vmax.f32 %v2969, %v3070
      %v3177 = vmax.f32 %v2971, %v3073
      %v3178 = vmax.f32 %v2972, %v3075
      %v3179 = vmax.f32 %v2974, %v3078
      %v3180 = vmax.f32 %v2975, %v3080
      %v3181 = vmax.f32 %v2977, %v3083
      %v3182 = vmax.f32 %v2978, %v3085
      %v3183 = vmax.f32 %v2980, %v3088
      %v3184 = vmax.f32 %v2981, %v3090
      %v3185 = vmax.f32 %v2983, %v3093
      %v3186 = vmax.f32 %v2984, %v3095
      %v3187 = vmax.f32 %v2986, %v3098
      %v3188 = vmax.f32 %v2987, %v3100
      %v3189 = vmax.f32 %v2989, %v3103
      %v3190 = vmax.f32 %v2990, %v3105
      %v3191 = vmax.f32 %v2992, %v3108
      %v3192 = vmax.f32 %v2993, %v3110
      %v3193 = vmax.f32 %v2995, %v3113
      %v3194 = vmax.f32 %v2996, %v3115
      %v3195 = vmax.f32 %v2998, %v3118
      %v3196 = vmax.f32 %v2999, %v3120
      %v3197 = vmax.f32 %v3001, %v3123
      %v3198 = vmax.f32 %v3002, %v3125
      %v3199 = vmax.f32 %v3004, %v3128
      %v3200 = vmax.f32 %v3005, %v3130
      %v3201 = vmax.f32 %v3007, %v3133
      %v3202 = vmax.f32 %v3008, %v3135
      %v3203 = vmax.f32 %v3010, %v3138
      %v3204 = vmax.f32 %v3011, %v3140
      %v3205 = vrot.slane %v2965, 2
      %v3206 = vrot.slane %v2966, 2
      %v3207 = vsel %vm1777, %v3205, %v3206
      %v3208 = vrot.slane %v2967, 2
      %v3209 = vsel %vm1777, %v3206, %v3208
      %v3210 = vrot.slane %v2968, 2
      %v3211 = vrot.slane %v2969, 2
      %v3212 = vsel %vm1777, %v3210, %v3211
      %v3213 = vrot.slane %v2970, 2
      %v3214 = vsel %vm1777, %v3211, %v3213
      %v3215 = vrot.slane %v2971, 2
      %v3216 = vrot.slane %v2972, 2
      %v3217 = vsel %vm1777, %v3215, %v3216
      %v3218 = vrot.slane %v2973, 2
      %v3219 = vsel %vm1777, %v3216, %v3218
      %v3220 = vrot.slane %v2974, 2
      %v3221 = vrot.slane %v2975, 2
      %v3222 = vsel %vm1777, %v3220, %v3221
      %v3223 = vrot.slane %v2976, 2
      %v3224 = vsel %vm1777, %v3221, %v3223
      %v3225 = vrot.slane %v2977, 2
      %v3226 = vrot.slane %v2978, 2
      %v3227 = vsel %vm1777, %v3225, %v3226
      %v3228 = vrot.slane %v2979, 2
      %v3229 = vsel %vm1777, %v3226, %v3228
      %v3230 = vrot.slane %v2980, 2
      %v3231 = vrot.slane %v2981, 2
      %v3232 = vsel %vm1777, %v3230, %v3231
      %v3233 = vrot.slane %v2982, 2
      %v3234 = vsel %vm1777, %v3231, %v3233
      %v3235 = vrot.slane %v2983, 2
      %v3236 = vrot.slane %v2984, 2
      %v3237 = vsel %vm1777, %v3235, %v3236
      %v3238 = vrot.slane %v2985, 2
      %v3239 = vsel %vm1777, %v3236, %v3238
      %v3240 = vrot.slane %v2986, 2
      %v3241 = vrot.slane %v2987, 2
      %v3242 = vsel %vm1777, %v3240, %v3241
      %v3243 = vrot.slane %v2988, 2
      %v3244 = vsel %vm1777, %v3241, %v3243
      %v3245 = vrot.slane %v2989, 2
      %v3246 = vrot.slane %v2990, 2
      %v3247 = vsel %vm1777, %v3245, %v3246
      %v3248 = vrot.slane %v2991, 2
      %v3249 = vsel %vm1777, %v3246, %v3248
      %v3250 = vrot.slane %v2992, 2
      %v3251 = vrot.slane %v2993, 2
      %v3252 = vsel %vm1777, %v3250, %v3251
      %v3253 = vrot.slane %v2994, 2
      %v3254 = vsel %vm1777, %v3251, %v3253
      %v3255 = vrot.slane %v2995, 2
      %v3256 = vrot.slane %v2996, 2
      %v3257 = vsel %vm1777, %v3255, %v3256
      %v3258 = vrot.slane %v2997, 2
      %v3259 = vsel %vm1777, %v3256, %v3258
      %v3260 = vrot.slane %v2998, 2
      %v3261 = vrot.slane %v2999, 2
      %v3262 = vsel %vm1777, %v3260, %v3261
      %v3263 = vrot.slane %v3000, 2
      %v3264 = vsel %vm1777, %v3261, %v3263
      %v3265 = vrot.slane %v3001, 2
      %v3266 = vrot.slane %v3002, 2
      %v3267 = vsel %vm1777, %v3265, %v3266
      %v3268 = vrot.slane %v3003, 2
      %v3269 = vsel %vm1777, %v3266, %v3268
      %v3270 = vrot.slane %v3004, 2
      %v3271 = vrot.slane %v3005, 2
      %v3272 = vsel %vm1777, %v3270, %v3271
      %v3273 = vrot.slane %v3006, 2
      %v3274 = vsel %vm1777, %v3271, %v3273
      %v3275 = vrot.slane %v3007, 2
      %v3276 = vrot.slane %v3008, 2
      %v3277 = vsel %vm1777, %v3275, %v3276
      %v3278 = vrot.slane %v3009, 2
      %v3279 = vsel %vm1777, %v3276, %v3278
      %v3280 = vrot.slane %v3010, 2
      %v3281 = vrot.slane %v3011, 2
      %v3282 = vsel %vm1777, %v3280, %v3281
      %v3283 = vrot.slane %v3012, 2
      %v3284 = vsel %vm1777, %v3281, %v3283
      %v3317 = vmax.f32 %v3173, %v3207
      %v3318 = vmax.f32 %v3174, %v3209
      %v3319 = vmax.f32 %v3175, %v3212
      %v3320 = vmax.f32 %v3176, %v3214
      %v3321 = vmax.f32 %v3177, %v3217
      %v3322 = vmax.f32 %v3178, %v3219
      %v3323 = vmax.f32 %v3179, %v3222
      %v3324 = vmax.f32 %v3180, %v3224
      %v3325 = vmax.f32 %v3181, %v3227
      %v3326 = vmax.f32 %v3182, %v3229
      %v3327 = vmax.f32 %v3183, %v3232
      %v3328 = vmax.f32 %v3184, %v3234
      %v3329 = vmax.f32 %v3185, %v3237
      %v3330 = vmax.f32 %v3186, %v3239
      %v3331 = vmax.f32 %v3187, %v3242
      %v3332 = vmax.f32 %v3188, %v3244
      %v3333 = vmax.f32 %v3189, %v3247
      %v3334 = vmax.f32 %v3190, %v3249
      %v3335 = vmax.f32 %v3191, %v3252
      %v3336 = vmax.f32 %v3192, %v3254
      %v3337 = vmax.f32 %v3193, %v3257
      %v3338 = vmax.f32 %v3194, %v3259
      %v3339 = vmax.f32 %v3195, %v3262
      %v3340 = vmax.f32 %v3196, %v3264
      %v3341 = vmax.f32 %v3197, %v3267
      %v3342 = vmax.f32 %v3198, %v3269
      %v3343 = vmax.f32 %v3199, %v3272
      %v3344 = vmax.f32 %v3200, %v3274
      %v3345 = vmax.f32 %v3201, %v3277
      %v3346 = vmax.f32 %v3202, %v3279
      %v3347 = vmax.f32 %v3203, %v3282
      %v3348 = vmax.f32 %v3204, %v3284
      %v3349 = vrot.slane %v2965, 3
      %v3350 = vrot.slane %v2966, 3
      %v3351 = vsel %vm1922, %v3349, %v3350
      %v3352 = vrot.slane %v2967, 3
      %v3353 = vsel %vm1922, %v3350, %v3352
      %v3354 = vrot.slane %v2968, 3
      %v3355 = vrot.slane %v2969, 3
      %v3356 = vsel %vm1922, %v3354, %v3355
      %v3357 = vrot.slane %v2970, 3
      %v3358 = vsel %vm1922, %v3355, %v3357
      %v3359 = vrot.slane %v2971, 3
      %v3360 = vrot.slane %v2972, 3
      %v3361 = vsel %vm1922, %v3359, %v3360
      %v3362 = vrot.slane %v2973, 3
      %v3363 = vsel %vm1922, %v3360, %v3362
      %v3364 = vrot.slane %v2974, 3
      %v3365 = vrot.slane %v2975, 3
      %v3366 = vsel %vm1922, %v3364, %v3365
      %v3367 = vrot.slane %v2976, 3
      %v3368 = vsel %vm1922, %v3365, %v3367
      %v3369 = vrot.slane %v2977, 3
      %v3370 = vrot.slane %v2978, 3
      %v3371 = vsel %vm1922, %v3369, %v3370
      %v3372 = vrot.slane %v2979, 3
      %v3373 = vsel %vm1922, %v3370, %v3372
      %v3374 = vrot.slane %v2980, 3
      %v3375 = vrot.slane %v2981, 3
      %v3376 = vsel %vm1922, %v3374, %v3375
      %v3377 = vrot.slane %v2982, 3
      %v3378 = vsel %vm1922, %v3375, %v3377
      %v3379 = vrot.slane %v2983, 3
      %v3380 = vrot.slane %v2984, 3
      %v3381 = vsel %vm1922, %v3379, %v3380
      %v3382 = vrot.slane %v2985, 3
      %v3383 = vsel %vm1922, %v3380, %v3382
      %v3384 = vrot.slane %v2986, 3
      %v3385 = vrot.slane %v2987, 3
      %v3386 = vsel %vm1922, %v3384, %v3385
      %v3387 = vrot.slane %v2988, 3
      %v3388 = vsel %vm1922, %v3385, %v3387
      %v3389 = vrot.slane %v2989, 3
      %v3390 = vrot.slane %v2990, 3
      %v3391 = vsel %vm1922, %v3389, %v3390
      %v3392 = vrot.slane %v2991, 3
      %v3393 = vsel %vm1922, %v3390, %v3392
      %v3394 = vrot.slane %v2992, 3
      %v3395 = vrot.slane %v2993, 3
      %v3396 = vsel %vm1922, %v3394, %v3395
      %v3397 = vrot.slane %v2994, 3
      %v3398 = vsel %vm1922, %v3395, %v3397
      %v3399 = vrot.slane %v2995, 3
      %v3400 = vrot.slane %v2996, 3
      %v3401 = vsel %vm1922, %v3399, %v3400
      %v3402 = vrot.slane %v2997, 3
      %v3403 = vsel %vm1922, %v3400, %v3402
      %v3404 = vrot.slane %v2998, 3
      %v3405 = vrot.slane %v2999, 3
      %v3406 = vsel %vm1922, %v3404, %v3405
      %v3407 = vrot.slane %v3000, 3
      %v3408 = vsel %vm1922, %v3405, %v3407
      %v3409 = vrot.slane %v3001, 3
      %v3410 = vrot.slane %v3002, 3
      %v3411 = vsel %vm1922, %v3409, %v3410
      %v3412 = vrot.slane %v3003, 3
      %v3413 = vsel %vm1922, %v3410, %v3412
      %v3414 = vrot.slane %v3004, 3
      %v3415 = vrot.slane %v3005, 3
      %v3416 = vsel %vm1922, %v3414, %v3415
      %v3417 = vrot.slane %v3006, 3
      %v3418 = vsel %vm1922, %v3415, %v3417
      %v3419 = vrot.slane %v3007, 3
      %v3420 = vrot.slane %v3008, 3
      %v3421 = vsel %vm1922, %v3419, %v3420
      %v3422 = vrot.slane %v3009, 3
      %v3423 = vsel %vm1922, %v3420, %v3422
      %v3424 = vrot.slane %v3010, 3
      %v3425 = vrot.slane %v3011, 3
      %v3426 = vsel %vm1922, %v3424, %v3425
      %v3427 = vrot.slane %v3012, 3
      %v3428 = vsel %vm1922, %v3425, %v3427
      %v3461 = vmax.f32 %v3317, %v3351
      %v3462 = vmax.f32 %v3318, %v3353
      %v3463 = vmax.f32 %v3319, %v3356
      %v3464 = vmax.f32 %v3320, %v3358
      %v3465 = vmax.f32 %v3321, %v3361
      %v3466 = vmax.f32 %v3322, %v3363
      %v3467 = vmax.f32 %v3323, %v3366
      %v3468 = vmax.f32 %v3324, %v3368
      %v3469 = vmax.f32 %v3325, %v3371
      %v3470 = vmax.f32 %v3326, %v3373
      %v3471 = vmax.f32 %v3327, %v3376
      %v3472 = vmax.f32 %v3328, %v3378
      %v3473 = vmax.f32 %v3329, %v3381
      %v3474 = vmax.f32 %v3330, %v3383
      %v3475 = vmax.f32 %v3331, %v3386
      %v3476 = vmax.f32 %v3332, %v3388
      %v3477 = vmax.f32 %v3333, %v3391
      %v3478 = vmax.f32 %v3334, %v3393
      %v3479 = vmax.f32 %v3335, %v3396
      %v3480 = vmax.f32 %v3336, %v3398
      %v3481 = vmax.f32 %v3337, %v3401
      %v3482 = vmax.f32 %v3338, %v3403
      %v3483 = vmax.f32 %v3339, %v3406
      %v3484 = vmax.f32 %v3340, %v3408
      %v3485 = vmax.f32 %v3341, %v3411
      %v3486 = vmax.f32 %v3342, %v3413
      %v3487 = vmax.f32 %v3343, %v3416
      %v3488 = vmax.f32 %v3344, %v3418
      %v3489 = vmax.f32 %v3345, %v3421
      %v3490 = vmax.f32 %v3346, %v3423
      %v3491 = vmax.f32 %v3347, %v3426
      %v3492 = vmax.f32 %v3348, %v3428
      %v3493 = vrot.slane %v2965, 4
      %v3494 = vrot.slane %v2966, 4
      %v3495 = vsel %vm362, %v3493, %v3494
      %v3496 = vrot.slane %v2967, 4
      %v3497 = vsel %vm362, %v3494, %v3496
      %v3498 = vrot.slane %v2968, 4
      %v3499 = vrot.slane %v2969, 4
      %v3500 = vsel %vm362, %v3498, %v3499
      %v3501 = vrot.slane %v2970, 4
      %v3502 = vsel %vm362, %v3499, %v3501
      %v3503 = vrot.slane %v2971, 4
      %v3504 = vrot.slane %v2972, 4
      %v3505 = vsel %vm362, %v3503, %v3504
      %v3506 = vrot.slane %v2973, 4
      %v3507 = vsel %vm362, %v3504, %v3506
      %v3508 = vrot.slane %v2974, 4
      %v3509 = vrot.slane %v2975, 4
      %v3510 = vsel %vm362, %v3508, %v3509
      %v3511 = vrot.slane %v2976, 4
      %v3512 = vsel %vm362, %v3509, %v3511
      %v3513 = vrot.slane %v2977, 4
      %v3514 = vrot.slane %v2978, 4
      %v3515 = vsel %vm362, %v3513, %v3514
      %v3516 = vrot.slane %v2979, 4
      %v3517 = vsel %vm362, %v3514, %v3516
      %v3518 = vrot.slane %v2980, 4
      %v3519 = vrot.slane %v2981, 4
      %v3520 = vsel %vm362, %v3518, %v3519
      %v3521 = vrot.slane %v2982, 4
      %v3522 = vsel %vm362, %v3519, %v3521
      %v3523 = vrot.slane %v2983, 4
      %v3524 = vrot.slane %v2984, 4
      %v3525 = vsel %vm362, %v3523, %v3524
      %v3526 = vrot.slane %v2985, 4
      %v3527 = vsel %vm362, %v3524, %v3526
      %v3528 = vrot.slane %v2986, 4
      %v3529 = vrot.slane %v2987, 4
      %v3530 = vsel %vm362, %v3528, %v3529
      %v3531 = vrot.slane %v2988, 4
      %v3532 = vsel %vm362, %v3529, %v3531
      %v3533 = vrot.slane %v2989, 4
      %v3534 = vrot.slane %v2990, 4
      %v3535 = vsel %vm362, %v3533, %v3534
      %v3536 = vrot.slane %v2991, 4
      %v3537 = vsel %vm362, %v3534, %v3536
      %v3538 = vrot.slane %v2992, 4
      %v3539 = vrot.slane %v2993, 4
      %v3540 = vsel %vm362, %v3538, %v3539
      %v3541 = vrot.slane %v2994, 4
      %v3542 = vsel %vm362, %v3539, %v3541
      %v3543 = vrot.slane %v2995, 4
      %v3544 = vrot.slane %v2996, 4
      %v3545 = vsel %vm362, %v3543, %v3544
      %v3546 = vrot.slane %v2997, 4
      %v3547 = vsel %vm362, %v3544, %v3546
      %v3548 = vrot.slane %v2998, 4
      %v3549 = vrot.slane %v2999, 4
      %v3550 = vsel %vm362, %v3548, %v3549
      %v3551 = vrot.slane %v3000, 4
      %v3552 = vsel %vm362, %v3549, %v3551
      %v3553 = vrot.slane %v3001, 4
      %v3554 = vrot.slane %v3002, 4
      %v3555 = vsel %vm362, %v3553, %v3554
      %v3556 = vrot.slane %v3003, 4
      %v3557 = vsel %vm362, %v3554, %v3556
      %v3558 = vrot.slane %v3004, 4
      %v3559 = vrot.slane %v3005, 4
      %v3560 = vsel %vm362, %v3558, %v3559
      %v3561 = vrot.slane %v3006, 4
      %v3562 = vsel %vm362, %v3559, %v3561
      %v3563 = vrot.slane %v3007, 4
      %v3564 = vrot.slane %v3008, 4
      %v3565 = vsel %vm362, %v3563, %v3564
      %v3566 = vrot.slane %v3009, 4
      %v3567 = vsel %vm362, %v3564, %v3566
      %v3568 = vrot.slane %v3010, 4
      %v3569 = vrot.slane %v3011, 4
      %v3570 = vsel %vm362, %v3568, %v3569
      %v3571 = vrot.slane %v3012, 4
      %v3572 = vsel %vm362, %v3569, %v3571
      %v3605 = vmax.f32 %v3461, %v3495
      %v3606 = vmax.f32 %v3462, %v3497
      %v3607 = vmax.f32 %v3463, %v3500
      %v3608 = vmax.f32 %v3464, %v3502
      %v3609 = vmax.f32 %v3465, %v3505
      %v3610 = vmax.f32 %v3466, %v3507
      %v3611 = vmax.f32 %v3467, %v3510
      %v3612 = vmax.f32 %v3468, %v3512
      %v3613 = vmax.f32 %v3469, %v3515
      %v3614 = vmax.f32 %v3470, %v3517
      %v3615 = vmax.f32 %v3471, %v3520
      %v3616 = vmax.f32 %v3472, %v3522
      %v3617 = vmax.f32 %v3473, %v3525
      %v3618 = vmax.f32 %v3474, %v3527
      %v3619 = vmax.f32 %v3475, %v3530
      %v3620 = vmax.f32 %v3476, %v3532
      %v3621 = vmax.f32 %v3477, %v3535
      %v3622 = vmax.f32 %v3478, %v3537
      %v3623 = vmax.f32 %v3479, %v3540
      %v3624 = vmax.f32 %v3480, %v3542
      %v3625 = vmax.f32 %v3481, %v3545
      %v3626 = vmax.f32 %v3482, %v3547
      %v3627 = vmax.f32 %v3483, %v3550
      %v3628 = vmax.f32 %v3484, %v3552
      %v3629 = vmax.f32 %v3485, %v3555
      %v3630 = vmax.f32 %v3486, %v3557
      %v3631 = vmax.f32 %v3487, %v3560
      %v3632 = vmax.f32 %v3488, %v3562
      %v3633 = vmax.f32 %v3489, %v3565
      %v3634 = vmax.f32 %v3490, %v3567
      %v3635 = vmax.f32 %v3491, %v3570
      %v3636 = vmax.f32 %v3492, %v3572
      %3637 = vst [vmem:[%s1116 + $0x2] sm:$0xff] %v3605
      %3638 = vst [vmem:[%s1116 + $0xa] sm:$0xff] %v3606
      %3639 = vst [vmem:[%s1116 + $0x1a] sm:$0xff] %v3607
      %3640 = vst [vmem:[%s1116 + $0x22] sm:$0xff] %v3608
      %3641 = vst [vmem:[%s1116 + $0x32] sm:$0xff] %v3609
      %3642 = vst [vmem:[%s1116 + $0x3a] sm:$0xff] %v3610
      %3643 = vst [vmem:[%s1116 + $0x4a] sm:$0xff] %v3611
      %3644 = vst [vmem:[%s1116 + $0x52] sm:$0xff] %v3612
      %3645 = vst [vmem:[%s1116 + $0x62] sm:$0xff] %v3613
      %3646 = vst [vmem:[%s1116 + $0x6a] sm:$0xff] %v3614
      %3647 = vst [vmem:[%s1116 + $0x7a] sm:$0xff] %v3615
      %3648 = vst [vmem:[%s1116 + $0x82] sm:$0xff] %v3616
      %3649 = vst [vmem:[%s1116 + $0x92] sm:$0xff] %v3617
      %3650 = vst [vmem:[%s1116 + $0x9a] sm:$0xff] %v3618
      %3651 = vst [vmem:[%s1116 + $0xaa] sm:$0xff] %v3619
      %3652 = vst [vmem:[%s1116 + $0xb2] sm:$0xff] %v3620
      %3653 = vst [vmem:[%s1116 + $0xc2] sm:$0xff] %v3621
      %3654 = vst [vmem:[%s1116 + $0xca] sm:$0xff] %v3622
      %3655 = vst [vmem:[%s1116 + $0xda] sm:$0xff] %v3623
      %3656 = vst [vmem:[%s1116 + $0xe2] sm:$0xff] %v3624
      %3657 = vst [vmem:[%s1116 + $0xf2] sm:$0xff] %v3625
      %3658 = vst [vmem:[%s1116 + $0xfa] sm:$0xff] %v3626
      %3659 = vst [vmem:[%s1116 + $0x10a] sm:$0xff] %v3627
      %3660 = vst [vmem:[%s1116 + $0x112] sm:$0xff] %v3628
      %3661 = vst [vmem:[%s1116 + $0x122] sm:$0xff] %v3629
      %3662 = vst [vmem:[%s1116 + $0x12a] sm:$0xff] %v3630
      %3663 = vst [vmem:[%s1116 + $0x13a] sm:$0xff] %v3631
      %3664 = vst [vmem:[%s1116 + $0x142] sm:$0xff] %v3632
      %3665 = vst [vmem:[%s1116 + $0x152] sm:$0xff] %v3633
      %3666 = vst [vmem:[%s1116 + $0x15a] sm:$0xff] %v3634
      %3667 = vst [vmem:[%s1116 + $0x16a] sm:$0xff] %v3635
      %3668 = vst [vmem:[%s1116 + $0x172] sm:$0xff] %v3636
      %v3669 = vld [vmem:[#allocation3] sm:$0xff]
      %v3670 = vld [vmem:[#allocation3 + $0x8] sm:$0xff]
      %v3671 = vld [vmem:[#allocation3 + $0x10] sm:$0xff]
      %v3672 = vld [vmem:[#allocation3 + $0x18] sm:$0xff]
      %v3673 = vld [vmem:[#allocation3 + $0x20] sm:$0xff]
      %v3674 = vld [vmem:[#allocation3 + $0x28] sm:$0xff]
      %v3675 = vld [vmem:[#allocation3 + $0x30] sm:$0xff]
      %v3676 = vld [vmem:[#allocation3 + $0x38] sm:$0xff]
      %v3677 = vld [vmem:[#allocation3 + $0x40] sm:$0xff]
      %v3678 = vld [vmem:[#allocation3 + $0x48] sm:$0xff]
      %v3679 = vld [vmem:[#allocation3 + $0x50] sm:$0xff]
      %v3680 = vld [vmem:[#allocation3 + $0x58] sm:$0xff]
      %v3681 = vld [vmem:[#allocation3 + $0x60] sm:$0xff]
      %v3682 = vld [vmem:[#allocation3 + $0x68] sm:$0xff]
      %v3683 = vld [vmem:[#allocation3 + $0x70] sm:$0xff]
      %v3684 = vld [vmem:[#allocation3 + $0x78] sm:$0xff]
      %v3685 = vld [vmem:[#allocation3 + $0x80] sm:$0xff]
      %v3686 = vld [vmem:[#allocation3 + $0x88] sm:$0xff]
      %v3687 = vld [vmem:[#allocation3 + $0x90] sm:$0xff]
      %v3688 = vld [vmem:[#allocation3 + $0x98] sm:$0xff]
      %v3689 = vld [vmem:[#allocation3 + $0xa0] sm:$0xff]
      %v3690 = vld [vmem:[#allocation3 + $0xa8] sm:$0xff]
      %v3691 = vld [vmem:[#allocation3 + $0xb0] sm:$0xff]
      %v3692 = vld [vmem:[#allocation3 + $0xb8] sm:$0xff]
      %v3693 = vld [vmem:[#allocation3 + $0xc0] sm:$0xff]
      %v3694 = vld [vmem:[#allocation3 + $0xc8] sm:$0xff]
      %v3695 = vld [vmem:[#allocation3 + $0xd0] sm:$0xff]
      %v3696 = vld [vmem:[#allocation3 + $0xd8] sm:$0xff]
      %v3697 = vld [vmem:[#allocation3 + $0xe0] sm:$0xff]
      %v3698 = vld [vmem:[#allocation3 + $0xe8] sm:$0xff]
      %v3699 = vld [vmem:[#allocation3 + $0xf0] sm:$0xff]
      %v3700 = vld [vmem:[#allocation3 + $0xf8] sm:$0xff]
      %s3701 = scalar_lea.vmem %s3, 256
      %v3702 = vld [vmem:[%s3701] sm:$0xff]
      %v3703 = vld [vmem:[%s3701 + $0x8] sm:$0xff]
      %v3704 = vld [vmem:[%s3701 + $0x10] sm:$0xff]
      %v3705 = vld [vmem:[%s3701 + $0x18] sm:$0xff]
      %v3706 = vld [vmem:[%s3701 + $0x20] sm:$0xff]
      %v3707 = vld [vmem:[%s3701 + $0x28] sm:$0xff]
      %v3708 = vld [vmem:[%s3701 + $0x30] sm:$0xff]
      %v3709 = vld [vmem:[%s3701 + $0x38] sm:$0xff]
      %v3710 = vld [vmem:[%s3701 + $0x40] sm:$0xff]
      %v3711 = vld [vmem:[%s3701 + $0x48] sm:$0xff]
      %v3712 = vld [vmem:[%s3701 + $0x50] sm:$0xff]
      %v3713 = vld [vmem:[%s3701 + $0x58] sm:$0xff]
      %v3714 = vld [vmem:[%s3701 + $0x60] sm:$0xff]
      %v3715 = vld [vmem:[%s3701 + $0x68] sm:$0xff]
      %v3716 = vld [vmem:[%s3701 + $0x70] sm:$0xff]
      %v3717 = vld [vmem:[%s3701 + $0x78] sm:$0xff]
      %3718 = vmatprep.subr.mxu0 0.0
      %3719 = vmatpush1.msra.mxu0 %v3702
      %3720 = vmatprep.subr.mxu0 0.0
      %3721 = vmatpush1.msra.mxu0 %v3703
      %3722 = vmatprep.subr.mxu0 0.0
      %3723 = vmatpush1.msra.mxu0 %v3704
      %3724 = vmatprep.subr.mxu0 0.0
      %3725 = vmatpush1.msra.mxu0 %v3705
      %3726 = vmatprep.subr.mxu0 0.0
      %3727 = vmatpush1.msra.mxu0 %v3706
      %3728 = vmatprep.subr.mxu0 0.0
      %3729 = vmatpush1.msra.mxu0 %v3707
      %3730 = vmatprep.subr.mxu0 0.0
      %3731 = vmatpush1.msra.mxu0 %v3708
      %3732 = vmatprep.subr.mxu0 0.0
      %3733 = vmatpush1.msra.mxu0 %v3709
      %3734 = vmatprep.subr.mxu0 0.0
      %3735 = vmatpush1.msra.mxu0 %v3710
      %3736 = vmatprep.subr.mxu0 0.0
      %3737 = vmatpush1.msra.mxu0 %v3711
      %3738 = vmatprep.subr.mxu0 0.0
      %3739 = vmatpush1.msra.mxu0 %v3712
      %3740 = vmatprep.subr.mxu0 0.0
      %3741 = vmatpush1.msra.mxu0 %v3713
      %3742 = vmatprep.subr.mxu0 0.0
      %3743 = vmatpush1.msra.mxu0 %v3714
      %3744 = vmatprep.subr.mxu0 0.0
      %3745 = vmatpush1.msra.mxu0 %v3715
      %3746 = vmatprep.subr.mxu0 0.0
      %3747 = vmatpush1.msra.mxu0 %v3716
      %3748 = vmatprep.subr.mxu0 0.0
      %3749 = vmatpush1.msra.mxu0 %v3717
      %3750 = vmatprep.subr.mxu0 0.0
      %3751 = vmatpush1.msra.mxu0 0.0
      %3752 = vmatprep.subr.mxu0 0.0
      %3753 = vmatpush1.msra.mxu0 0.0
      %3754 = vmatprep.subr.mxu0 0.0
      %3755 = vmatpush1.msra.mxu0 0.0
      %3756 = vmatprep.subr.mxu0 0.0
      %3757 = vmatpush1.msra.mxu0 0.0
      %3758 = vmatprep.subr.mxu0 0.0
      %3759 = vmatpush1.msra.mxu0 0.0
      %3760 = vmatprep.subr.mxu0 0.0
      %3761 = vmatpush1.msra.mxu0 0.0
      %3762 = vmatprep.subr.mxu0 0.0
      %3763 = vmatpush1.msra.mxu0 0.0
      %3764 = vmatprep.subr.mxu0 0.0
      %3765 = vmatpush1.msra.mxu0 0.0
      %3766 = vmatprep.subr.mxu0 0.0
      %3767 = vmatpush1.msra.mxu0 0.0
      %3768 = vmatprep.subr.mxu0 0.0
      %3769 = vmatpush1.msra.mxu0 0.0
      %3770 = vmatprep.subr.mxu0 0.0
      %3771 = vmatpush1.msra.mxu0 0.0
      %3772 = vmatprep.subr.mxu0 0.0
      %3773 = vmatpush1.msra.mxu0 0.0
      %3774 = vmatprep.subr.mxu0 0.0
      %3775 = vmatpush1.msra.mxu0 0.0
      %3776 = vmatprep.subr.mxu0 0.0
      %3777 = vmatpush1.msra.mxu0 0.0
      %3778 = vmatprep.subr.mxu0 0.0
      %3779 = vmatpush1.msra.mxu0 0.0
      %3780 = vmatprep.subr.mxu0 0.0
      %3781 = vmatpush1.msra.mxu0 0.0
      %3782 = vmatprep.mubr.f32.mxu0 0.0
      %3783 = vmatmul.mubr.f32.gmra.mrb[0].mxu0 %v3605
      %v3784 = vpop.f32.mrb[0].mxu0
      %v3785 = vadd.f32 0.0, %v3784
      %v3786 = vpop.f32.mrb[0].mxu0
      %3787 = vmatprep.mubr.f32.mxu0 0.0
      %3788 = vmatmul.mubr.f32.gmra.mrb[0].mxu0 %v3606
      %v3789 = vpop.f32.mrb[0].mxu0
      %v3790 = vadd.f32 0.0, %v3789
      %v3791 = vpop.f32.mrb[0].mxu0
      %3792 = vmatprep.mubr.f32.mxu0 0.0
      %3793 = vmatmul.mubr.f32.gmra.mrb[0].mxu0 %v3607
      %v3794 = vpop.f32.mrb[0].mxu0
      %v3795 = vadd.f32 0.0, %v3794
      %v3796 = vpop.f32.mrb[0].mxu0
      %3797 = vmatprep.mubr.f32.mxu0 0.0
      %3798 = vmatmul.mubr.f32.gmra.mrb[0].mxu0 %v3608
      %v3799 = vpop.f32.mrb[0].mxu0
      %v3800 = vadd.f32 0.0, %v3799
      %v3801 = vpop.f32.mrb[0].mxu0
      %3802 = vmatprep.mubr.f32.mxu0 0.0
      %3803 = vmatmul.mubr.f32.gmra.mrb[0].mxu0 %v3609
      %v3804 = vpop.f32.mrb[0].mxu0
      %v3805 = vadd.f32 0.0, %v3804
      %v3806 = vpop.f32.mrb[0].mxu0
      %3807 = vmatprep.mubr.f32.mxu0 0.0
      %3808 = vmatmul.mubr.f32.gmra.mrb[0].mxu0 %v3610
      %v3809 = vpop.f32.mrb[0].mxu0
      %v3810 = vadd.f32 0.0, %v3809
      %v3811 = vpop.f32.mrb[0].mxu0
      %3812 = vmatprep.mubr.f32.mxu0 0.0
      %3813 = vmatmul.mubr.f32.gmra.mrb[0].mxu0 %v3611
      %v3814 = vpop.f32.mrb[0].mxu0
      %v3815 = vadd.f32 0.0, %v3814
      %v3816 = vpop.f32.mrb[0].mxu0
      %3817 = vmatprep.mubr.f32.mxu0 0.0
      %3818 = vmatmul.mubr.f32.gmra.mrb[0].mxu0 %v3612
      %v3819 = vpop.f32.mrb[0].mxu0
      %v3820 = vadd.f32 0.0, %v3819
      %v3821 = vpop.f32.mrb[0].mxu0
      %3822 = vmatprep.mubr.f32.mxu0 0.0
      %3823 = vmatmul.mubr.f32.gmra.mrb[0].mxu0 %v3613
      %v3824 = vpop.f32.mrb[0].mxu0
      %v3825 = vadd.f32 0.0, %v3824
      %v3826 = vpop.f32.mrb[0].mxu0
      %3827 = vmatprep.mubr.f32.mxu0 0.0
      %3828 = vmatmul.mubr.f32.gmra.mrb[0].mxu0 %v3614
      %v3829 = vpop.f32.mrb[0].mxu0
      %v3830 = vadd.f32 0.0, %v3829
      %v3831 = vpop.f32.mrb[0].mxu0
      %3832 = vmatprep.mubr.f32.mxu0 0.0
      %3833 = vmatmul.mubr.f32.gmra.mrb[0].mxu0 %v3615
      %v3834 = vpop.f32.mrb[0].mxu0
      %v3835 = vadd.f32 0.0, %v3834
      %v3836 = vpop.f32.mrb[0].mxu0
      %3837 = vmatprep.mubr.f32.mxu0 0.0
      %3838 = vmatmul.mubr.f32.gmra.mrb[0].mxu0 %v3616
      %v3839 = vpop.f32.mrb[0].mxu0
      %v3840 = vadd.f32 0.0, %v3839
      %v3841 = vpop.f32.mrb[0].mxu0
      %3842 = vmatprep.mubr.f32.mxu0 0.0
      %3843 = vmatmul.mubr.f32.gmra.mrb[0].mxu0 %v3617
      %v3844 = vpop.f32.mrb[0].mxu0
      %v3845 = vadd.f32 0.0, %v3844
      %v3846 = vpop.f32.mrb[0].mxu0
      %3847 = vmatprep.mubr.f32.mxu0 0.0
      %3848 = vmatmul.mubr.f32.gmra.mrb[0].mxu0 %v3618
      %v3849 = vpop.f32.mrb[0].mxu0
      %v3850 = vadd.f32 0.0, %v3849
      %v3851 = vpop.f32.mrb[0].mxu0
      %3852 = vmatprep.mubr.f32.mxu0 0.0
      %3853 = vmatmul.mubr.f32.gmra.mrb[0].mxu0 %v3619
      %v3854 = vpop.f32.mrb[0].mxu0
      %v3855 = vadd.f32 0.0, %v3854
      %v3856 = vpop.f32.mrb[0].mxu0
      %3857 = vmatprep.mubr.f32.mxu0 0.0
      %3858 = vmatmul.mubr.f32.gmra.mrb[0].mxu0 %v3620
      %v3859 = vpop.f32.mrb[0].mxu0
      %v3860 = vadd.f32 0.0, %v3859
      %v3861 = vpop.f32.mrb[0].mxu0
      %3862 = vmatprep.mubr.f32.mxu0 0.0
      %3863 = vmatmul.mubr.f32.gmra.mrb[0].mxu0 %v3621
      %v3864 = vpop.f32.mrb[0].mxu0
      %v3865 = vadd.f32 0.0, %v3864
      %v3866 = vpop.f32.mrb[0].mxu0
      %3867 = vmatprep.mubr.f32.mxu0 0.0
      %3868 = vmatmul.mubr.f32.gmra.mrb[0].mxu0 %v3622
      %v3869 = vpop.f32.mrb[0].mxu0
      %v3870 = vadd.f32 0.0, %v3869
      %v3871 = vpop.f32.mrb[0].mxu0
      %3872 = vmatprep.mubr.f32.mxu0 0.0
      %3873 = vmatmul.mubr.f32.gmra.mrb[0].mxu0 %v3623
      %v3874 = vpop.f32.mrb[0].mxu0
      %v3875 = vadd.f32 0.0, %v3874
      %v3876 = vpop.f32.mrb[0].mxu0
      %3877 = vmatprep.mubr.f32.mxu0 0.0
      %3878 = vmatmul.mubr.f32.gmra.mrb[0].mxu0 %v3624
      %v3879 = vpop.f32.mrb[0].mxu0
      %v3880 = vadd.f32 0.0, %v3879
      %v3881 = vpop.f32.mrb[0].mxu0
      %3882 = vmatprep.mubr.f32.mxu0 0.0
      %3883 = vmatmul.mubr.f32.gmra.mrb[0].mxu0 %v3625
      %v3884 = vpop.f32.mrb[0].mxu0
      %v3885 = vadd.f32 0.0, %v3884
      %v3886 = vpop.f32.mrb[0].mxu0
      %3887 = vmatprep.mubr.f32.mxu0 0.0
      %3888 = vmatmul.mubr.f32.gmra.mrb[0].mxu0 %v3626
      %v3889 = vpop.f32.mrb[0].mxu0
      %v3890 = vadd.f32 0.0, %v3889
      %v3891 = vpop.f32.mrb[0].mxu0
      %3892 = vmatprep.mubr.f32.mxu0 0.0
      %3893 = vmatmul.mubr.f32.gmra.mrb[0].mxu0 %v3627
      %v3894 = vpop.f32.mrb[0].mxu0
      %v3895 = vadd.f32 0.0, %v3894
      %v3896 = vpop.f32.mrb[0].mxu0
      %3897 = vmatprep.mubr.f32.mxu0 0.0
      %3898 = vmatmul.mubr.f32.gmra.mrb[0].mxu0 %v3628
      %v3899 = vpop.f32.mrb[0].mxu0
      %v3900 = vadd.f32 0.0, %v3899
      %v3901 = vpop.f32.mrb[0].mxu0
      %3902 = vmatprep.mubr.f32.mxu0 0.0
      %3903 = vmatmul.mubr.f32.gmra.mrb[0].mxu0 %v3629
      %v3904 = vpop.f32.mrb[0].mxu0
      %v3905 = vadd.f32 0.0, %v3904
      %v3906 = vpop.f32.mrb[0].mxu0
      %3907 = vmatprep.mubr.f32.mxu0 0.0
      %3908 = vmatmul.mubr.f32.gmra.mrb[0].mxu0 %v3630
      %v3909 = vpop.f32.mrb[0].mxu0
      %v3910 = vadd.f32 0.0, %v3909
      %v3911 = vpop.f32.mrb[0].mxu0
      %3912 = vmatprep.mubr.f32.mxu0 0.0
      %3913 = vmatmul.mubr.f32.gmra.mrb[0].mxu0 %v3631
      %v3914 = vpop.f32.mrb[0].mxu0
      %v3915 = vadd.f32 0.0, %v3914
      %v3916 = vpop.f32.mrb[0].mxu0
      %3917 = vmatprep.mubr.f32.mxu0 0.0
      %3918 = vmatmul.mubr.f32.gmra.mrb[0].mxu0 %v3632
      %v3919 = vpop.f32.mrb[0].mxu0
      %v3920 = vadd.f32 0.0, %v3919
      %v3921 = vpop.f32.mrb[0].mxu0
      %3922 = vmatprep.mubr.f32.mxu0 0.0
      %3923 = vmatmul.mubr.f32.gmra.mrb[0].mxu0 %v3633
      %v3924 = vpop.f32.mrb[0].mxu0
      %v3925 = vadd.f32 0.0, %v3924
      %v3926 = vpop.f32.mrb[0].mxu0
      %3927 = vmatprep.mubr.f32.mxu0 0.0
      %3928 = vmatmul.mubr.f32.gmra.mrb[0].mxu0 %v3634
      %v3929 = vpop.f32.mrb[0].mxu0
      %v3930 = vadd.f32 0.0, %v3929
      %v3931 = vpop.f32.mrb[0].mxu0
      %3932 = vmatprep.mubr.f32.mxu0 0.0
      %3933 = vmatmul.mubr.f32.gmra.mrb[0].mxu0 %v3635
      %v3934 = vpop.f32.mrb[0].mxu0
      %v3935 = vadd.f32 0.0, %v3934
      %v3936 = vpop.f32.mrb[0].mxu0
      %3937 = vmatprep.mubr.f32.mxu0 0.0
      %3938 = vmatmul.mubr.f32.gmra.mrb[0].mxu0 %v3636
      %v3939 = vpop.f32.mrb[0].mxu0
      %v3940 = vadd.f32 0.0, %v3939
      %v3941 = vpop.f32.mrb[0].mxu0
      %3942 = vdwg.mxu0
      %v3943 = vadd.f32 %v3669, %v3785
      %v3944 = vadd.f32 %v3670, %v3790
      %v3945 = vadd.f32 %v3671, %v3795
      %v3946 = vadd.f32 %v3672, %v3800
      %v3947 = vadd.f32 %v3673, %v3805
      %v3948 = vadd.f32 %v3674, %v3810
      %v3949 = vadd.f32 %v3675, %v3815
      %v3950 = vadd.f32 %v3676, %v3820
      %v3951 = vadd.f32 %v3677, %v3825
      %v3952 = vadd.f32 %v3678, %v3830
      %v3953 = vadd.f32 %v3679, %v3835
      %v3954 = vadd.f32 %v3680, %v3840
      %v3955 = vadd.f32 %v3681, %v3845
      %v3956 = vadd.f32 %v3682, %v3850
      %v3957 = vadd.f32 %v3683, %v3855
      %v3958 = vadd.f32 %v3684, %v3860
      %v3959 = vadd.f32 %v3685, %v3865
      %v3960 = vadd.f32 %v3686, %v3870
      %v3961 = vadd.f32 %v3687, %v3875
      %v3962 = vadd.f32 %v3688, %v3880
      %v3963 = vadd.f32 %v3689, %v3885
      %v3964 = vadd.f32 %v3690, %v3890
      %v3965 = vadd.f32 %v3691, %v3895
      %v3966 = vadd.f32 %v3692, %v3900
      %v3967 = vadd.f32 %v3693, %v3905
      %v3968 = vadd.f32 %v3694, %v3910
      %v3969 = vadd.f32 %v3695, %v3915
      %v3970 = vadd.f32 %v3696, %v3920
      %v3971 = vadd.f32 %v3697, %v3925
      %v3972 = vadd.f32 %v3698, %v3930
      %v3973 = vadd.f32 %v3699, %v3935
      %v3974 = vadd.f32 %v3700, %v3940
      %3975 = vst [vmem:[#allocation3] sm:$0xff] %v3943
      %3976 = vst [vmem:[#allocation3 + $0x8] sm:$0xff] %v3944
      %3977 = vst [vmem:[#allocation3 + $0x10] sm:$0xff] %v3945
      %3978 = vst [vmem:[#allocation3 + $0x18] sm:$0xff] %v3946
      %3979 = vst [vmem:[#allocation3 + $0x20] sm:$0xff] %v3947
      %3980 = vst [vmem:[#allocation3 + $0x28] sm:$0xff] %v3948
      %3981 = vst [vmem:[#allocation3 + $0x30] sm:$0xff] %v3949
      %3982 = vst [vmem:[#allocation3 + $0x38] sm:$0xff] %v3950
      %3983 = vst [vmem:[#allocation3 + $0x40] sm:$0xff] %v3951
      %3984 = vst [vmem:[#allocation3 + $0x48] sm:$0xff] %v3952
      %3985 = vst [vmem:[#allocation3 + $0x50] sm:$0xff] %v3953
      %3986 = vst [vmem:[#allocation3 + $0x58] sm:$0xff] %v3954
      %3987 = vst [vmem:[#allocation3 + $0x60] sm:$0xff] %v3955
      %3988 = vst [vmem:[#allocation3 + $0x68] sm:$0xff] %v3956
      %3989 = vst [vmem:[#allocation3 + $0x70] sm:$0xff] %v3957
      %3990 = vst [vmem:[#allocation3 + $0x78] sm:$0xff] %v3958
      %3991 = vst [vmem:[#allocation3 + $0x80] sm:$0xff] %v3959
      %3992 = vst [vmem:[#allocation3 + $0x88] sm:$0xff] %v3960
      %3993 = vst [vmem:[#allocation3 + $0x90] sm:$0xff] %v3961
      %3994 = vst [vmem:[#allocation3 + $0x98] sm:$0xff] %v3962
      %3995 = vst [vmem:[#allocation3 + $0xa0] sm:$0xff] %v3963
      %3996 = vst [vmem:[#allocation3 + $0xa8] sm:$0xff] %v3964
      %3997 = vst [vmem:[#allocation3 + $0xb0] sm:$0xff] %v3965
      %3998 = vst [vmem:[#allocation3 + $0xb8] sm:$0xff] %v3966
      %3999 = vst [vmem:[#allocation3 + $0xc0] sm:$0xff] %v3967
      %4000 = vst [vmem:[#allocation3 + $0xc8] sm:$0xff] %v3968
      %4001 = vst [vmem:[#allocation3 + $0xd0] sm:$0xff] %v3969
      %4002 = vst [vmem:[#allocation3 + $0xd8] sm:$0xff] %v3970
      %4003 = vst [vmem:[#allocation3 + $0xe0] sm:$0xff] %v3971
      %4004 = vst [vmem:[#allocation3 + $0xe8] sm:$0xff] %v3972
      %4005 = vst [vmem:[#allocation3 + $0xf0] sm:$0xff] %v3973
      %4006 = vst [vmem:[#allocation3 + $0xf8] sm:$0xff] %v3974
      %v4007 = vld [vmem:[#allocation2] sm:$0xff]
      %v4008 = vld [vmem:[#allocation2 + $0x8] sm:$0xff]
      %v4009 = vld [vmem:[#allocation2 + $0x10] sm:$0xff]
      %v4010 = vld [vmem:[#allocation2 + $0x18] sm:$0xff]
      %v4011 = vld [vmem:[#allocation2 + $0x20] sm:$0xff]
      %v4012 = vld [vmem:[#allocation2 + $0x28] sm:$0xff]
      %v4013 = vld [vmem:[#allocation2 + $0x30] sm:$0xff]
      %v4014 = vld [vmem:[#allocation2 + $0x38] sm:$0xff]
      %v4015 = vld [vmem:[#allocation2 + $0x40] sm:$0xff]
      %v4016 = vld [vmem:[#allocation2 + $0x48] sm:$0xff]
      %v4017 = vld [vmem:[#allocation2 + $0x50] sm:$0xff]
      %v4018 = vld [vmem:[#allocation2 + $0x58] sm:$0xff]
      %v4019 = vld [vmem:[#allocation2 + $0x60] sm:$0xff]
      %v4020 = vld [vmem:[#allocation2 + $0x68] sm:$0xff]
      %v4021 = vld [vmem:[#allocation2 + $0x70] sm:$0xff]
      %v4022 = vld [vmem:[#allocation2 + $0x78] sm:$0xff]
      %v4023 = vld [vmem:[#allocation2 + $0x80] sm:$0xff]
      %v4024 = vld [vmem:[#allocation2 + $0x88] sm:$0xff]
      %v4025 = vld [vmem:[#allocation2 + $0x90] sm:$0xff]
      %v4026 = vld [vmem:[#allocation2 + $0x98] sm:$0xff]
      %v4027 = vld [vmem:[#allocation2 + $0xa0] sm:$0xff]
      %v4028 = vld [vmem:[#allocation2 + $0xa8] sm:$0xff]
      %v4029 = vld [vmem:[#allocation2 + $0xb0] sm:$0xff]
      %v4030 = vld [vmem:[#allocation2 + $0xb8] sm:$0xff]
      %v4031 = vld [vmem:[#allocation2 + $0xc0] sm:$0xff]
      %v4032 = vld [vmem:[#allocation2 + $0xc8] sm:$0xff]
      %v4033 = vld [vmem:[#allocation2 + $0xd0] sm:$0xff]
      %v4034 = vld [vmem:[#allocation2 + $0xd8] sm:$0xff]
      %v4035 = vld [vmem:[#allocation2 + $0xe0] sm:$0xff]
      %v4036 = vld [vmem:[#allocation2 + $0xe8] sm:$0xff]
      %v4037 = vld [vmem:[#allocation2 + $0xf0] sm:$0xff]
      %v4038 = vld [vmem:[#allocation2 + $0xf8] sm:$0xff]
      %v4039 = vld [vmem:[#allocation2 + $0x100] sm:$0xff]
      %v4040 = vld [vmem:[#allocation2 + $0x108] sm:$0xff]
      %v4041 = vld [vmem:[#allocation2 + $0x110] sm:$0xff]
      %v4042 = vld [vmem:[#allocation2 + $0x118] sm:$0xff]
      %v4043 = vld [vmem:[#allocation2 + $0x120] sm:$0xff]
      %v4044 = vld [vmem:[#allocation2 + $0x128] sm:$0xff]
      %v4045 = vld [vmem:[#allocation2 + $0x130] sm:$0xff]
      %v4046 = vld [vmem:[#allocation2 + $0x138] sm:$0xff]
      %v4047 = vld [vmem:[#allocation2 + $0x140] sm:$0xff]
      %v4048 = vld [vmem:[#allocation2 + $0x148] sm:$0xff]
      %v4049 = vld [vmem:[#allocation2 + $0x150] sm:$0xff]
      %v4050 = vld [vmem:[#allocation2 + $0x158] sm:$0xff]
      %v4051 = vld [vmem:[#allocation2 + $0x160] sm:$0xff]
      %v4052 = vld [vmem:[#allocation2 + $0x168] sm:$0xff]
      %v4053 = vld [vmem:[#allocation2 + $0x170] sm:$0xff]
      %v4054 = vld [vmem:[#allocation2 + $0x178] sm:$0xff]
      %v4055 = vld [vmem:[%s1197] sm:$0xff]
      %v4056 = vld [vmem:[%s1197 + $0x8] sm:$0xff]
      %v4057 = vld [vmem:[%s1197 + $0x10] sm:$0xff]
      %v4058 = vld [vmem:[%s1197 + $0x18] sm:$0xff]
      %v4059 = vld [vmem:[%s1197 + $0x20] sm:$0xff]
      %v4060 = vld [vmem:[%s1197 + $0x28] sm:$0xff]
      %v4061 = vld [vmem:[%s1197 + $0x30] sm:$0xff]
      %v4062 = vld [vmem:[%s1197 + $0x38] sm:$0xff]
      %v4063 = vld [vmem:[%s1197 + $0x40] sm:$0xff]
      %v4064 = vld [vmem:[%s1197 + $0x48] sm:$0xff]
      %v4065 = vld [vmem:[%s1197 + $0x50] sm:$0xff]
      %v4066 = vld [vmem:[%s1197 + $0x58] sm:$0xff]
      %v4067 = vld [vmem:[%s1197 + $0x60] sm:$0xff]
      %v4068 = vld [vmem:[%s1197 + $0x68] sm:$0xff]
      %v4069 = vld [vmem:[%s1197 + $0x70] sm:$0xff]
      %v4070 = vld [vmem:[%s1197 + $0x78] sm:$0xff]
      %v4071 = vld [vmem:[%s1197 + $0x80] sm:$0xff]
      %v4072 = vld [vmem:[%s1197 + $0x88] sm:$0xff]
      %v4073 = vld [vmem:[%s1197 + $0x90] sm:$0xff]
      %v4074 = vld [vmem:[%s1197 + $0x98] sm:$0xff]
      %v4075 = vld [vmem:[%s1197 + $0xa0] sm:$0xff]
      %v4076 = vld [vmem:[%s1197 + $0xa8] sm:$0xff]
      %v4077 = vld [vmem:[%s1197 + $0xb0] sm:$0xff]
      %v4078 = vld [vmem:[%s1197 + $0xb8] sm:$0xff]
      %v4079 = vld [vmem:[%s1197 + $0xc0] sm:$0xff]
      %v4080 = vld [vmem:[%s1197 + $0xc8] sm:$0xff]
      %v4081 = vld [vmem:[%s1197 + $0xd0] sm:$0xff]
      %v4082 = vld [vmem:[%s1197 + $0xd8] sm:$0xff]
      %v4083 = vld [vmem:[%s1197 + $0xe0] sm:$0xff]
      %v4084 = vld [vmem:[%s1197 + $0xe8] sm:$0xff]
      %v4085 = vld [vmem:[%s1197 + $0xf0] sm:$0xff]
      %v4086 = vld [vmem:[%s1197 + $0xf8] sm:$0xff]
      %v4087 = vld [vmem:[%s1197 + $0x100] sm:$0xff]
      %v4088 = vld [vmem:[%s1197 + $0x108] sm:$0xff]
      %v4089 = vld [vmem:[%s1197 + $0x110] sm:$0xff]
      %v4090 = vld [vmem:[%s1197 + $0x118] sm:$0xff]
      %v4091 = vld [vmem:[%s1197 + $0x120] sm:$0xff]
      %v4092 = vld [vmem:[%s1197 + $0x128] sm:$0xff]
      %v4093 = vld [vmem:[%s1197 + $0x130] sm:$0xff]
      %v4094 = vld [vmem:[%s1197 + $0x138] sm:$0xff]
      %v4095 = vld [vmem:[%s1197 + $0x140] sm:$0xff]
      %v4096 = vld [vmem:[%s1197 + $0x148] sm:$0xff]
      %v4097 = vld [vmem:[%s1197 + $0x150] sm:$0xff]
      %v4098 = vld [vmem:[%s1197 + $0x158] sm:$0xff]
      %v4099 = vld [vmem:[%s1197 + $0x160] sm:$0xff]
      %v4100 = vld [vmem:[%s1197 + $0x168] sm:$0xff]
      %v4101 = vld [vmem:[%s1197 + $0x170] sm:$0xff]
      %v4102 = vld [vmem:[%s1197 + $0x178] sm:$0xff]
      %v4103 = vmax.f32 %v4007, %v4055
      %v4104 = vmax.f32 %v4008, %v4056
      %v4105 = vmax.f32 %v4009, %v4057
      %v4106 = vmax.f32 %v4010, %v4058
      %v4107 = vmax.f32 %v4011, %v4059
      %v4108 = vmax.f32 %v4012, %v4060
      %v4109 = vmax.f32 %v4013, %v4061
      %v4110 = vmax.f32 %v4014, %v4062
      %v4111 = vmax.f32 %v4015, %v4063
      %v4112 = vmax.f32 %v4016, %v4064
      %v4113 = vmax.f32 %v4017, %v4065
      %v4114 = vmax.f32 %v4018, %v4066
      %v4115 = vmax.f32 %v4019, %v4067
      %v4116 = vmax.f32 %v4020, %v4068
      %v4117 = vmax.f32 %v4021, %v4069
      %v4118 = vmax.f32 %v4022, %v4070
      %v4119 = vmax.f32 %v4023, %v4071
      %v4120 = vmax.f32 %v4024, %v4072
      %v4121 = vmax.f32 %v4025, %v4073
      %v4122 = vmax.f32 %v4026, %v4074
      %v4123 = vmax.f32 %v4027, %v4075
      %v4124 = vmax.f32 %v4028, %v4076
      %v4125 = vmax.f32 %v4029, %v4077
      %v4126 = vmax.f32 %v4030, %v4078
      %v4127 = vmax.f32 %v4031, %v4079
      %v4128 = vmax.f32 %v4032, %v4080
      %v4129 = vmax.f32 %v4033, %v4081
      %v4130 = vmax.f32 %v4034, %v4082
      %v4131 = vmax.f32 %v4035, %v4083
      %v4132 = vmax.f32 %v4036, %v4084
      %v4133 = vmax.f32 %v4037, %v4085
      %v4134 = vmax.f32 %v4038, %v4086
      %v4135 = vmax.f32 %v4039, %v4087
      %v4136 = vmax.f32 %v4040, %v4088
      %v4137 = vmax.f32 %v4041, %v4089
      %v4138 = vmax.f32 %v4042, %v4090
      %v4139 = vmax.f32 %v4043, %v4091
      %v4140 = vmax.f32 %v4044, %v4092
      %v4141 = vmax.f32 %v4045, %v4093
      %v4142 = vmax.f32 %v4046, %v4094
      %v4143 = vmax.f32 %v4047, %v4095
      %v4144 = vmax.f32 %v4048, %v4096
      %v4145 = vmax.f32 %v4049, %v4097
      %v4146 = vmax.f32 %v4050, %v4098
      %v4147 = vmax.f32 %v4051, %v4099
      %v4148 = vmax.f32 %v4052, %v4100
      %v4149 = vmax.f32 %v4053, %v4101
      %v4150 = vmax.f32 %v4054, %v4102
      %v4151 = vld [vmem:[%s1116] sm:$0xff]
      %v4152 = vld [vmem:[%s1116 + $0x8] sm:$0xff]
      %v4153 = vld [vmem:[%s1116 + $0x10] sm:$0xff]
      %v4154 = vld [vmem:[%s1116 + $0x18] sm:$0xff]
      %v4155 = vld [vmem:[%s1116 + $0x20] sm:$0xff]
      %v4156 = vld [vmem:[%s1116 + $0x28] sm:$0xff]
      %v4157 = vld [vmem:[%s1116 + $0x30] sm:$0xff]
      %v4158 = vld [vmem:[%s1116 + $0x38] sm:$0xff]
      %v4159 = vld [vmem:[%s1116 + $0x40] sm:$0xff]
      %v4160 = vld [vmem:[%s1116 + $0x48] sm:$0xff]
      %v4161 = vld [vmem:[%s1116 + $0x50] sm:$0xff]
      %v4162 = vld [vmem:[%s1116 + $0x58] sm:$0xff]
      %v4163 = vld [vmem:[%s1116 + $0x60] sm:$0xff]
      %v4164 = vld [vmem:[%s1116 + $0x68] sm:$0xff]
      %v4165 = vld [vmem:[%s1116 + $0x70] sm:$0xff]
      %v4166 = vld [vmem:[%s1116 + $0x78] sm:$0xff]
      %v4167 = vld [vmem:[%s1116 + $0x80] sm:$0xff]
      %v4168 = vld [vmem:[%s1116 + $0x88] sm:$0xff]
      %v4169 = vld [vmem:[%s1116 + $0x90] sm:$0xff]
      %v4170 = vld [vmem:[%s1116 + $0x98] sm:$0xff]
      %v4171 = vld [vmem:[%s1116 + $0xa0] sm:$0xff]
      %v4172 = vld [vmem:[%s1116 + $0xa8] sm:$0xff]
      %v4173 = vld [vmem:[%s1116 + $0xb0] sm:$0xff]
      %v4174 = vld [vmem:[%s1116 + $0xb8] sm:$0xff]
      %v4175 = vld [vmem:[%s1116 + $0xc0] sm:$0xff]
      %v4176 = vld [vmem:[%s1116 + $0xc8] sm:$0xff]
      %v4177 = vld [vmem:[%s1116 + $0xd0] sm:$0xff]
      %v4178 = vld [vmem:[%s1116 + $0xd8] sm:$0xff]
      %v4179 = vld [vmem:[%s1116 + $0xe0] sm:$0xff]
      %v4180 = vld [vmem:[%s1116 + $0xe8] sm:$0xff]
      %v4181 = vld [vmem:[%s1116 + $0xf0] sm:$0xff]
      %v4182 = vld [vmem:[%s1116 + $0xf8] sm:$0xff]
      %v4183 = vld [vmem:[%s1116 + $0x100] sm:$0xff]
      %v4184 = vld [vmem:[%s1116 + $0x108] sm:$0xff]
      %v4185 = vld [vmem:[%s1116 + $0x110] sm:$0xff]
      %v4186 = vld [vmem:[%s1116 + $0x118] sm:$0xff]
      %v4187 = vld [vmem:[%s1116 + $0x120] sm:$0xff]
      %v4188 = vld [vmem:[%s1116 + $0x128] sm:$0xff]
      %v4189 = vld [vmem:[%s1116 + $0x130] sm:$0xff]
      %v4190 = vld [vmem:[%s1116 + $0x138] sm:$0xff]
      %v4191 = vld [vmem:[%s1116 + $0x140] sm:$0xff]
      %v4192 = vld [vmem:[%s1116 + $0x148] sm:$0xff]
      %v4193 = vld [vmem:[%s1116 + $0x150] sm:$0xff]
      %v4194 = vld [vmem:[%s1116 + $0x158] sm:$0xff]
      %v4195 = vld [vmem:[%s1116 + $0x160] sm:$0xff]
      %v4196 = vld [vmem:[%s1116 + $0x168] sm:$0xff]
      %v4197 = vld [vmem:[%s1116 + $0x170] sm:$0xff]
      %v4198 = vld [vmem:[%s1116 + $0x178] sm:$0xff]
      %v4199 = vmax.f32 %v4103, %v4151
      %v4200 = vmax.f32 %v4104, %v4152
      %v4201 = vmax.f32 %v4105, %v4153
      %v4202 = vmax.f32 %v4106, %v4154
      %v4203 = vmax.f32 %v4107, %v4155
      %v4204 = vmax.f32 %v4108, %v4156
      %v4205 = vmax.f32 %v4109, %v4157
      %v4206 = vmax.f32 %v4110, %v4158
      %v4207 = vmax.f32 %v4111, %v4159
      %v4208 = vmax.f32 %v4112, %v4160
      %v4209 = vmax.f32 %v4113, %v4161
      %v4210 = vmax.f32 %v4114, %v4162
      %v4211 = vmax.f32 %v4115, %v4163
      %v4212 = vmax.f32 %v4116, %v4164
      %v4213 = vmax.f32 %v4117, %v4165
      %v4214 = vmax.f32 %v4118, %v4166
      %v4215 = vmax.f32 %v4119, %v4167
      %v4216 = vmax.f32 %v4120, %v4168
      %v4217 = vmax.f32 %v4121, %v4169
      %v4218 = vmax.f32 %v4122, %v4170
      %v4219 = vmax.f32 %v4123, %v4171
      %v4220 = vmax.f32 %v4124, %v4172
      %v4221 = vmax.f32 %v4125, %v4173
      %v4222 = vmax.f32 %v4126, %v4174
      %v4223 = vmax.f32 %v4127, %v4175
      %v4224 = vmax.f32 %v4128, %v4176
      %v4225 = vmax.f32 %v4129, %v4177
      %v4226 = vmax.f32 %v4130, %v4178
      %v4227 = vmax.f32 %v4131, %v4179
      %v4228 = vmax.f32 %v4132, %v4180
      %v4229 = vmax.f32 %v4133, %v4181
      %v4230 = vmax.f32 %v4134, %v4182
      %v4231 = vmax.f32 %v4135, %v4183
      %v4232 = vmax.f32 %v4136, %v4184
      %v4233 = vmax.f32 %v4137, %v4185
      %v4234 = vmax.f32 %v4138, %v4186
      %v4235 = vmax.f32 %v4139, %v4187
      %v4236 = vmax.f32 %v4140, %v4188
      %v4237 = vmax.f32 %v4141, %v4189
      %v4238 = vmax.f32 %v4142, %v4190
      %v4239 = vmax.f32 %v4143, %v4191
      %v4240 = vmax.f32 %v4144, %v4192
      %v4241 = vmax.f32 %v4145, %v4193
      %v4242 = vmax.f32 %v4146, %v4194
      %v4243 = vmax.f32 %v4147, %v4195
      %v4244 = vmax.f32 %v4148, %v4196
      %v4245 = vmax.f32 %v4149, %v4197
      %v4246 = vmax.f32 %v4150, %v4198
      %v4247 = vld [vmem:[%s1390] sm:$0xff]
      %v4248 = vld [vmem:[%s1390 + $0x8] sm:$0xff]
      %v4249 = vld [vmem:[%s1390 + $0x10] sm:$0xff]
      %v4250 = vld [vmem:[%s1390 + $0x18] sm:$0xff]
      %v4251 = vld [vmem:[%s1390 + $0x20] sm:$0xff]
      %v4252 = vld [vmem:[%s1390 + $0x28] sm:$0xff]
      %v4253 = vld [vmem:[%s1390 + $0x30] sm:$0xff]
      %v4254 = vld [vmem:[%s1390 + $0x38] sm:$0xff]
      %v4255 = vld [vmem:[%s1390 + $0x40] sm:$0xff]
      %v4256 = vld [vmem:[%s1390 + $0x48] sm:$0xff]
      %v4257 = vld [vmem:[%s1390 + $0x50] sm:$0xff]
      %v4258 = vld [vmem:[%s1390 + $0x58] sm:$0xff]
      %v4259 = vld [vmem:[%s1390 + $0x60] sm:$0xff]
      %v4260 = vld [vmem:[%s1390 + $0x68] sm:$0xff]
      %v4261 = vld [vmem:[%s1390 + $0x70] sm:$0xff]
      %v4262 = vld [vmem:[%s1390 + $0x78] sm:$0xff]
      %v4263 = vld [vmem:[%s1390 + $0x80] sm:$0xff]
      %v4264 = vld [vmem:[%s1390 + $0x88] sm:$0xff]
      %v4265 = vld [vmem:[%s1390 + $0x90] sm:$0xff]
      %v4266 = vld [vmem:[%s1390 + $0x98] sm:$0xff]
      %v4267 = vld [vmem:[%s1390 + $0xa0] sm:$0xff]
      %v4268 = vld [vmem:[%s1390 + $0xa8] sm:$0xff]
      %v4269 = vld [vmem:[%s1390 + $0xb0] sm:$0xff]
      %v4270 = vld [vmem:[%s1390 + $0xb8] sm:$0xff]
      %v4271 = vld [vmem:[%s1390 + $0xc0] sm:$0xff]
      %v4272 = vld [vmem:[%s1390 + $0xc8] sm:$0xff]
      %v4273 = vld [vmem:[%s1390 + $0xd0] sm:$0xff]
      %v4274 = vld [vmem:[%s1390 + $0xd8] sm:$0xff]
      %v4275 = vld [vmem:[%s1390 + $0xe0] sm:$0xff]
      %v4276 = vld [vmem:[%s1390 + $0xe8] sm:$0xff]
      %v4277 = vld [vmem:[%s1390 + $0xf0] sm:$0xff]
      %v4278 = vld [vmem:[%s1390 + $0xf8] sm:$0xff]
      %v4279 = vld [vmem:[%s1390 + $0x100] sm:$0xff]
      %v4280 = vld [vmem:[%s1390 + $0x108] sm:$0xff]
      %v4281 = vld [vmem:[%s1390 + $0x110] sm:$0xff]
      %v4282 = vld [vmem:[%s1390 + $0x118] sm:$0xff]
      %v4283 = vld [vmem:[%s1390 + $0x120] sm:$0xff]
      %v4284 = vld [vmem:[%s1390 + $0x128] sm:$0xff]
      %v4285 = vld [vmem:[%s1390 + $0x130] sm:$0xff]
      %v4286 = vld [vmem:[%s1390 + $0x138] sm:$0xff]
      %v4287 = vld [vmem:[%s1390 + $0x140] sm:$0xff]
      %v4288 = vld [vmem:[%s1390 + $0x148] sm:$0xff]
      %v4289 = vld [vmem:[%s1390 + $0x150] sm:$0xff]
      %v4290 = vld [vmem:[%s1390 + $0x158] sm:$0xff]
      %v4291 = vld [vmem:[%s1390 + $0x160] sm:$0xff]
      %v4292 = vld [vmem:[%s1390 + $0x168] sm:$0xff]
      %v4293 = vld [vmem:[%s1390 + $0x170] sm:$0xff]
      %v4294 = vld [vmem:[%s1390 + $0x178] sm:$0xff]
      %v4295 = vmax.f32 %v4199, %v4247
      %v4296 = vmax.f32 %v4200, %v4248
      %v4297 = vmax.f32 %v4201, %v4249
      %v4298 = vmax.f32 %v4202, %v4250
      %v4299 = vmax.f32 %v4203, %v4251
      %v4300 = vmax.f32 %v4204, %v4252
      %v4301 = vmax.f32 %v4205, %v4253
      %v4302 = vmax.f32 %v4206, %v4254
      %v4303 = vmax.f32 %v4207, %v4255
      %v4304 = vmax.f32 %v4208, %v4256
      %v4305 = vmax.f32 %v4209, %v4257
      %v4306 = vmax.f32 %v4210, %v4258
      %v4307 = vmax.f32 %v4211, %v4259
      %v4308 = vmax.f32 %v4212, %v4260
      %v4309 = vmax.f32 %v4213, %v4261
      %v4310 = vmax.f32 %v4214, %v4262
      %v4311 = vmax.f32 %v4215, %v4263
      %v4312 = vmax.f32 %v4216, %v4264
      %v4313 = vmax.f32 %v4217, %v4265
      %v4314 = vmax.f32 %v4218, %v4266
      %v4315 = vmax.f32 %v4219, %v4267
      %v4316 = vmax.f32 %v4220, %v4268
      %v4317 = vmax.f32 %v4221, %v4269
      %v4318 = vmax.f32 %v4222, %v4270
      %v4319 = vmax.f32 %v4223, %v4271
      %v4320 = vmax.f32 %v4224, %v4272
      %v4321 = vmax.f32 %v4225, %v4273
      %v4322 = vmax.f32 %v4226, %v4274
      %v4323 = vmax.f32 %v4227, %v4275
      %v4324 = vmax.f32 %v4228, %v4276
      %v4325 = vmax.f32 %v4229, %v4277
      %v4326 = vmax.f32 %v4230, %v4278
      %v4327 = vmax.f32 %v4231, %v4279
      %v4328 = vmax.f32 %v4232, %v4280
      %v4329 = vmax.f32 %v4233, %v4281
      %v4330 = vmax.f32 %v4234, %v4282
      %v4331 = vmax.f32 %v4235, %v4283
      %v4332 = vmax.f32 %v4236, %v4284
      %v4333 = vmax.f32 %v4237, %v4285
      %v4334 = vmax.f32 %v4238, %v4286
      %v4335 = vmax.f32 %v4239, %v4287
      %v4336 = vmax.f32 %v4240, %v4288
      %v4337 = vmax.f32 %v4241, %v4289
      %v4338 = vmax.f32 %v4242, %v4290
      %v4339 = vmax.f32 %v4243, %v4291
      %v4340 = vmax.f32 %v4244, %v4292
      %v4341 = vmax.f32 %v4245, %v4293
      %v4342 = vmax.f32 %v4246, %v4294
      %v4343 = vld [vmem:[%s1487] sm:$0xff]
      %v4344 = vld [vmem:[%s1487 + $0x8] sm:$0xff]
      %v4345 = vld [vmem:[%s1487 + $0x10] sm:$0xff]
      %v4346 = vld [vmem:[%s1487 + $0x18] sm:$0xff]
      %v4347 = vld [vmem:[%s1487 + $0x20] sm:$0xff]
      %v4348 = vld [vmem:[%s1487 + $0x28] sm:$0xff]
      %v4349 = vld [vmem:[%s1487 + $0x30] sm:$0xff]
      %v4350 = vld [vmem:[%s1487 + $0x38] sm:$0xff]
      %v4351 = vld [vmem:[%s1487 + $0x40] sm:$0xff]
      %v4352 = vld [vmem:[%s1487 + $0x48] sm:$0xff]
      %v4353 = vld [vmem:[%s1487 + $0x50] sm:$0xff]
      %v4354 = vld [vmem:[%s1487 + $0x58] sm:$0xff]
      %v4355 = vld [vmem:[%s1487 + $0x60] sm:$0xff]
      %v4356 = vld [vmem:[%s1487 + $0x68] sm:$0xff]
      %v4357 = vld [vmem:[%s1487 + $0x70] sm:$0xff]
      %v4358 = vld [vmem:[%s1487 + $0x78] sm:$0xff]
      %v4359 = vld [vmem:[%s1487 + $0x80] sm:$0xff]
      %v4360 = vld [vmem:[%s1487 + $0x88] sm:$0xff]
      %v4361 = vld [vmem:[%s1487 + $0x90] sm:$0xff]
      %v4362 = vld [vmem:[%s1487 + $0x98] sm:$0xff]
      %v4363 = vld [vmem:[%s1487 + $0xa0] sm:$0xff]
      %v4364 = vld [vmem:[%s1487 + $0xa8] sm:$0xff]
      %v4365 = vld [vmem:[%s1487 + $0xb0] sm:$0xff]
      %v4366 = vld [vmem:[%s1487 + $0xb8] sm:$0xff]
      %v4367 = vld [vmem:[%s1487 + $0xc0] sm:$0xff]
      %v4368 = vld [vmem:[%s1487 + $0xc8] sm:$0xff]
      %v4369 = vld [vmem:[%s1487 + $0xd0] sm:$0xff]
      %v4370 = vld [vmem:[%s1487 + $0xd8] sm:$0xff]
      %v4371 = vld [vmem:[%s1487 + $0xe0] sm:$0xff]
      %v4372 = vld [vmem:[%s1487 + $0xe8] sm:$0xff]
      %v4373 = vld [vmem:[%s1487 + $0xf0] sm:$0xff]
      %v4374 = vld [vmem:[%s1487 + $0xf8] sm:$0xff]
      %v4375 = vld [vmem:[%s1487 + $0x100] sm:$0xff]
      %v4376 = vld [vmem:[%s1487 + $0x108] sm:$0xff]
      %v4377 = vld [vmem:[%s1487 + $0x110] sm:$0xff]
      %v4378 = vld [vmem:[%s1487 + $0x118] sm:$0xff]
      %v4379 = vld [vmem:[%s1487 + $0x120] sm:$0xff]
      %v4380 = vld [vmem:[%s1487 + $0x128] sm:$0xff]
      %v4381 = vld [vmem:[%s1487 + $0x130] sm:$0xff]
      %v4382 = vld [vmem:[%s1487 + $0x138] sm:$0xff]
      %v4383 = vld [vmem:[%s1487 + $0x140] sm:$0xff]
      %v4384 = vld [vmem:[%s1487 + $0x148] sm:$0xff]
      %v4385 = vld [vmem:[%s1487 + $0x150] sm:$0xff]
      %v4386 = vld [vmem:[%s1487 + $0x158] sm:$0xff]
      %v4387 = vld [vmem:[%s1487 + $0x160] sm:$0xff]
      %v4388 = vld [vmem:[%s1487 + $0x168] sm:$0xff]
      %v4389 = vld [vmem:[%s1487 + $0x170] sm:$0xff]
      %v4390 = vld [vmem:[%s1487 + $0x178] sm:$0xff]
      %v4391 = vmax.f32 %v4295, %v4343
      %v4392 = vmax.f32 %v4296, %v4344
      %v4393 = vmax.f32 %v4297, %v4345
      %v4394 = vmax.f32 %v4298, %v4346
      %v4395 = vmax.f32 %v4299, %v4347
      %v4396 = vmax.f32 %v4300, %v4348
      %v4397 = vmax.f32 %v4301, %v4349
      %v4398 = vmax.f32 %v4302, %v4350
      %v4399 = vmax.f32 %v4303, %v4351
      %v4400 = vmax.f32 %v4304, %v4352
      %v4401 = vmax.f32 %v4305, %v4353
      %v4402 = vmax.f32 %v4306, %v4354
      %v4403 = vmax.f32 %v4307, %v4355
      %v4404 = vmax.f32 %v4308, %v4356
      %v4405 = vmax.f32 %v4309, %v4357
      %v4406 = vmax.f32 %v4310, %v4358
      %v4407 = vmax.f32 %v4311, %v4359
      %v4408 = vmax.f32 %v4312, %v4360
      %v4409 = vmax.f32 %v4313, %v4361
      %v4410 = vmax.f32 %v4314, %v4362
      %v4411 = vmax.f32 %v4315, %v4363
      %v4412 = vmax.f32 %v4316, %v4364
      %v4413 = vmax.f32 %v4317, %v4365
      %v4414 = vmax.f32 %v4318, %v4366
      %v4415 = vmax.f32 %v4319, %v4367
      %v4416 = vmax.f32 %v4320, %v4368
      %v4417 = vmax.f32 %v4321, %v4369
      %v4418 = vmax.f32 %v4322, %v4370
      %v4419 = vmax.f32 %v4323, %v4371
      %v4420 = vmax.f32 %v4324, %v4372
      %v4421 = vmax.f32 %v4325, %v4373
      %v4422 = vmax.f32 %v4326, %v4374
      %v4423 = vmax.f32 %v4327, %v4375
      %v4424 = vmax.f32 %v4328, %v4376
      %v4425 = vmax.f32 %v4329, %v4377
      %v4426 = vmax.f32 %v4330, %v4378
      %v4427 = vmax.f32 %v4331, %v4379
      %v4428 = vmax.f32 %v4332, %v4380
      %v4429 = vmax.f32 %v4333, %v4381
      %v4430 = vmax.f32 %v4334, %v4382
      %v4431 = vmax.f32 %v4335, %v4383
      %v4432 = vmax.f32 %v4336, %v4384
      %v4433 = vmax.f32 %v4337, %v4385
      %v4434 = vmax.f32 %v4338, %v4386
      %v4435 = vmax.f32 %v4339, %v4387
      %v4436 = vmax.f32 %v4340, %v4388
      %v4437 = vmax.f32 %v4341, %v4389
      %v4438 = vmax.f32 %v4342, %v4390
      %v4487 = vrot.slane %v4391, 1
      %v4488 = vrot.slane %v4392, 1
      %v4489 = vsel %vm1632, %v4487, %v4488
      %v4490 = vrot.slane %v4393, 1
      %v4491 = vsel %vm1632, %v4488, %v4490
      %v4492 = vrot.slane %v4394, 1
      %v4493 = vrot.slane %v4395, 1
      %v4494 = vsel %vm1632, %v4492, %v4493
      %v4495 = vrot.slane %v4396, 1
      %v4496 = vsel %vm1632, %v4493, %v4495
      %v4497 = vrot.slane %v4397, 1
      %v4498 = vrot.slane %v4398, 1
      %v4499 = vsel %vm1632, %v4497, %v4498
      %v4500 = vrot.slane %v4399, 1
      %v4501 = vsel %vm1632, %v4498, %v4500
      %v4502 = vrot.slane %v4400, 1
      %v4503 = vrot.slane %v4401, 1
      %v4504 = vsel %vm1632, %v4502, %v4503
      %v4505 = vrot.slane %v4402, 1
      %v4506 = vsel %vm1632, %v4503, %v4505
      %v4507 = vrot.slane %v4403, 1
      %v4508 = vrot.slane %v4404, 1
      %v4509 = vsel %vm1632, %v4507, %v4508
      %v4510 = vrot.slane %v4405, 1
      %v4511 = vsel %vm1632, %v4508, %v4510
      %v4512 = vrot.slane %v4406, 1
      %v4513 = vrot.slane %v4407, 1
      %v4514 = vsel %vm1632, %v4512, %v4513
      %v4515 = vrot.slane %v4408, 1
      %v4516 = vsel %vm1632, %v4513, %v4515
      %v4517 = vrot.slane %v4409, 1
      %v4518 = vrot.slane %v4410, 1
      %v4519 = vsel %vm1632, %v4517, %v4518
      %v4520 = vrot.slane %v4411, 1
      %v4521 = vsel %vm1632, %v4518, %v4520
      %v4522 = vrot.slane %v4412, 1
      %v4523 = vrot.slane %v4413, 1
      %v4524 = vsel %vm1632, %v4522, %v4523
      %v4525 = vrot.slane %v4414, 1
      %v4526 = vsel %vm1632, %v4523, %v4525
      %v4527 = vrot.slane %v4415, 1
      %v4528 = vrot.slane %v4416, 1
      %v4529 = vsel %vm1632, %v4527, %v4528
      %v4530 = vrot.slane %v4417, 1
      %v4531 = vsel %vm1632, %v4528, %v4530
      %v4532 = vrot.slane %v4418, 1
      %v4533 = vrot.slane %v4419, 1
      %v4534 = vsel %vm1632, %v4532, %v4533
      %v4535 = vrot.slane %v4420, 1
      %v4536 = vsel %vm1632, %v4533, %v4535
      %v4537 = vrot.slane %v4421, 1
      %v4538 = vrot.slane %v4422, 1
      %v4539 = vsel %vm1632, %v4537, %v4538
      %v4540 = vrot.slane %v4423, 1
      %v4541 = vsel %vm1632, %v4538, %v4540
      %v4542 = vrot.slane %v4424, 1
      %v4543 = vrot.slane %v4425, 1
      %v4544 = vsel %vm1632, %v4542, %v4543
      %v4545 = vrot.slane %v4426, 1
      %v4546 = vsel %vm1632, %v4543, %v4545
      %v4547 = vrot.slane %v4427, 1
      %v4548 = vrot.slane %v4428, 1
      %v4549 = vsel %vm1632, %v4547, %v4548
      %v4550 = vrot.slane %v4429, 1
      %v4551 = vsel %vm1632, %v4548, %v4550
      %v4552 = vrot.slane %v4430, 1
      %v4553 = vrot.slane %v4431, 1
      %v4554 = vsel %vm1632, %v4552, %v4553
      %v4555 = vrot.slane %v4432, 1
      %v4556 = vsel %vm1632, %v4553, %v4555
      %v4557 = vrot.slane %v4433, 1
      %v4558 = vrot.slane %v4434, 1
      %v4559 = vsel %vm1632, %v4557, %v4558
      %v4560 = vrot.slane %v4435, 1
      %v4561 = vsel %vm1632, %v4558, %v4560
      %v4562 = vrot.slane %v4436, 1
      %v4563 = vrot.slane %v4437, 1
      %v4564 = vsel %vm1632, %v4562, %v4563
      %v4565 = vrot.slane %v4438, 1
      %v4566 = vsel %vm1632, %v4563, %v4565
      %v4599 = vmax.f32 %v4391, %v4489
      %v4600 = vmax.f32 %v4392, %v4491
      %v4601 = vmax.f32 %v4394, %v4494
      %v4602 = vmax.f32 %v4395, %v4496
      %v4603 = vmax.f32 %v4397, %v4499
      %v4604 = vmax.f32 %v4398, %v4501
      %v4605 = vmax.f32 %v4400, %v4504
      %v4606 = vmax.f32 %v4401, %v4506
      %v4607 = vmax.f32 %v4403, %v4509
      %v4608 = vmax.f32 %v4404, %v4511
      %v4609 = vmax.f32 %v4406, %v4514
      %v4610 = vmax.f32 %v4407, %v4516
      %v4611 = vmax.f32 %v4409, %v4519
      %v4612 = vmax.f32 %v4410, %v4521
      %v4613 = vmax.f32 %v4412, %v4524
      %v4614 = vmax.f32 %v4413, %v4526
      %v4615 = vmax.f32 %v4415, %v4529
      %v4616 = vmax.f32 %v4416, %v4531
      %v4617 = vmax.f32 %v4418, %v4534
      %v4618 = vmax.f32 %v4419, %v4536
      %v4619 = vmax.f32 %v4421, %v4539
      %v4620 = vmax.f32 %v4422, %v4541
      %v4621 = vmax.f32 %v4424, %v4544
      %v4622 = vmax.f32 %v4425, %v4546
      %v4623 = vmax.f32 %v4427, %v4549
      %v4624 = vmax.f32 %v4428, %v4551
      %v4625 = vmax.f32 %v4430, %v4554
      %v4626 = vmax.f32 %v4431, %v4556
      %v4627 = vmax.f32 %v4433, %v4559
      %v4628 = vmax.f32 %v4434, %v4561
      %v4629 = vmax.f32 %v4436, %v4564
      %v4630 = vmax.f32 %v4437, %v4566
      %v4631 = vrot.slane %v4391, 2
      %v4632 = vrot.slane %v4392, 2
      %v4633 = vsel %vm1777, %v4631, %v4632
      %v4634 = vrot.slane %v4393, 2
      %v4635 = vsel %vm1777, %v4632, %v4634
      %v4636 = vrot.slane %v4394, 2
      %v4637 = vrot.slane %v4395, 2
      %v4638 = vsel %vm1777, %v4636, %v4637
      %v4639 = vrot.slane %v4396, 2
      %v4640 = vsel %vm1777, %v4637, %v4639
      %v4641 = vrot.slane %v4397, 2
      %v4642 = vrot.slane %v4398, 2
      %v4643 = vsel %vm1777, %v4641, %v4642
      %v4644 = vrot.slane %v4399, 2
      %v4645 = vsel %vm1777, %v4642, %v4644
      %v4646 = vrot.slane %v4400, 2
      %v4647 = vrot.slane %v4401, 2
      %v4648 = vsel %vm1777, %v4646, %v4647
      %v4649 = vrot.slane %v4402, 2
      %v4650 = vsel %vm1777, %v4647, %v4649
      %v4651 = vrot.slane %v4403, 2
      %v4652 = vrot.slane %v4404, 2
      %v4653 = vsel %vm1777, %v4651, %v4652
      %v4654 = vrot.slane %v4405, 2
      %v4655 = vsel %vm1777, %v4652, %v4654
      %v4656 = vrot.slane %v4406, 2
      %v4657 = vrot.slane %v4407, 2
      %v4658 = vsel %vm1777, %v4656, %v4657
      %v4659 = vrot.slane %v4408, 2
      %v4660 = vsel %vm1777, %v4657, %v4659
      %v4661 = vrot.slane %v4409, 2
      %v4662 = vrot.slane %v4410, 2
      %v4663 = vsel %vm1777, %v4661, %v4662
      %v4664 = vrot.slane %v4411, 2
      %v4665 = vsel %vm1777, %v4662, %v4664
      %v4666 = vrot.slane %v4412, 2
      %v4667 = vrot.slane %v4413, 2
      %v4668 = vsel %vm1777, %v4666, %v4667
      %v4669 = vrot.slane %v4414, 2
      %v4670 = vsel %vm1777, %v4667, %v4669
      %v4671 = vrot.slane %v4415, 2
      %v4672 = vrot.slane %v4416, 2
      %v4673 = vsel %vm1777, %v4671, %v4672
      %v4674 = vrot.slane %v4417, 2
      %v4675 = vsel %vm1777, %v4672, %v4674
      %v4676 = vrot.slane %v4418, 2
      %v4677 = vrot.slane %v4419, 2
      %v4678 = vsel %vm1777, %v4676, %v4677
      %v4679 = vrot.slane %v4420, 2
      %v4680 = vsel %vm1777, %v4677, %v4679
      %v4681 = vrot.slane %v4421, 2
      %v4682 = vrot.slane %v4422, 2
      %v4683 = vsel %vm1777, %v4681, %v4682
      %v4684 = vrot.slane %v4423, 2
      %v4685 = vsel %vm1777, %v4682, %v4684
      %v4686 = vrot.slane %v4424, 2
      %v4687 = vrot.slane %v4425, 2
      %v4688 = vsel %vm1777, %v4686, %v4687
      %v4689 = vrot.slane %v4426, 2
      %v4690 = vsel %vm1777, %v4687, %v4689
      %v4691 = vrot.slane %v4427, 2
      %v4692 = vrot.slane %v4428, 2
      %v4693 = vsel %vm1777, %v4691, %v4692
      %v4694 = vrot.slane %v4429, 2
      %v4695 = vsel %vm1777, %v4692, %v4694
      %v4696 = vrot.slane %v4430, 2
      %v4697 = vrot.slane %v4431, 2
      %v4698 = vsel %vm1777, %v4696, %v4697
      %v4699 = vrot.slane %v4432, 2
      %v4700 = vsel %vm1777, %v4697, %v4699
      %v4701 = vrot.slane %v4433, 2
      %v4702 = vrot.slane %v4434, 2
      %v4703 = vsel %vm1777, %v4701, %v4702
      %v4704 = vrot.slane %v4435, 2
      %v4705 = vsel %vm1777, %v4702, %v4704
      %v4706 = vrot.slane %v4436, 2
      %v4707 = vrot.slane %v4437, 2
      %v4708 = vsel %vm1777, %v4706, %v4707
      %v4709 = vrot.slane %v4438, 2
      %v4710 = vsel %vm1777, %v4707, %v4709
      %v4743 = vmax.f32 %v4599, %v4633
      %v4744 = vmax.f32 %v4600, %v4635
      %v4745 = vmax.f32 %v4601, %v4638
      %v4746 = vmax.f32 %v4602, %v4640
      %v4747 = vmax.f32 %v4603, %v4643
      %v4748 = vmax.f32 %v4604, %v4645
      %v4749 = vmax.f32 %v4605, %v4648
      %v4750 = vmax.f32 %v4606, %v4650
      %v4751 = vmax.f32 %v4607, %v4653
      %v4752 = vmax.f32 %v4608, %v4655
      %v4753 = vmax.f32 %v4609, %v4658
      %v4754 = vmax.f32 %v4610, %v4660
      %v4755 = vmax.f32 %v4611, %v4663
      %v4756 = vmax.f32 %v4612, %v4665
      %v4757 = vmax.f32 %v4613, %v4668
      %v4758 = vmax.f32 %v4614, %v4670
      %v4759 = vmax.f32 %v4615, %v4673
      %v4760 = vmax.f32 %v4616, %v4675
      %v4761 = vmax.f32 %v4617, %v4678
      %v4762 = vmax.f32 %v4618, %v4680
      %v4763 = vmax.f32 %v4619, %v4683
      %v4764 = vmax.f32 %v4620, %v4685
      %v4765 = vmax.f32 %v4621, %v4688
      %v4766 = vmax.f32 %v4622, %v4690
      %v4767 = vmax.f32 %v4623, %v4693
      %v4768 = vmax.f32 %v4624, %v4695
      %v4769 = vmax.f32 %v4625, %v4698
      %v4770 = vmax.f32 %v4626, %v4700
      %v4771 = vmax.f32 %v4627, %v4703
      %v4772 = vmax.f32 %v4628, %v4705
      %v4773 = vmax.f32 %v4629, %v4708
      %v4774 = vmax.f32 %v4630, %v4710
      %v4775 = vrot.slane %v4391, 3
      %v4776 = vrot.slane %v4392, 3
      %v4777 = vsel %vm1922, %v4775, %v4776
      %v4778 = vrot.slane %v4393, 3
      %v4779 = vsel %vm1922, %v4776, %v4778
      %v4780 = vrot.slane %v4394, 3
      %v4781 = vrot.slane %v4395, 3
      %v4782 = vsel %vm1922, %v4780, %v4781
      %v4783 = vrot.slane %v4396, 3
      %v4784 = vsel %vm1922, %v4781, %v4783
      %v4785 = vrot.slane %v4397, 3
      %v4786 = vrot.slane %v4398, 3
      %v4787 = vsel %vm1922, %v4785, %v4786
      %v4788 = vrot.slane %v4399, 3
      %v4789 = vsel %vm1922, %v4786, %v4788
      %v4790 = vrot.slane %v4400, 3
      %v4791 = vrot.slane %v4401, 3
      %v4792 = vsel %vm1922, %v4790, %v4791
      %v4793 = vrot.slane %v4402, 3
      %v4794 = vsel %vm1922, %v4791, %v4793
      %v4795 = vrot.slane %v4403, 3
      %v4796 = vrot.slane %v4404, 3
      %v4797 = vsel %vm1922, %v4795, %v4796
      %v4798 = vrot.slane %v4405, 3
      %v4799 = vsel %vm1922, %v4796, %v4798
      %v4800 = vrot.slane %v4406, 3
      %v4801 = vrot.slane %v4407, 3
      %v4802 = vsel %vm1922, %v4800, %v4801
      %v4803 = vrot.slane %v4408, 3
      %v4804 = vsel %vm1922, %v4801, %v4803
      %v4805 = vrot.slane %v4409, 3
      %v4806 = vrot.slane %v4410, 3
      %v4807 = vsel %vm1922, %v4805, %v4806
      %v4808 = vrot.slane %v4411, 3
      %v4809 = vsel %vm1922, %v4806, %v4808
      %v4810 = vrot.slane %v4412, 3
      %v4811 = vrot.slane %v4413, 3
      %v4812 = vsel %vm1922, %v4810, %v4811
      %v4813 = vrot.slane %v4414, 3
      %v4814 = vsel %vm1922, %v4811, %v4813
      %v4815 = vrot.slane %v4415, 3
      %v4816 = vrot.slane %v4416, 3
      %v4817 = vsel %vm1922, %v4815, %v4816
      %v4818 = vrot.slane %v4417, 3
      %v4819 = vsel %vm1922, %v4816, %v4818
      %v4820 = vrot.slane %v4418, 3
      %v4821 = vrot.slane %v4419, 3
      %v4822 = vsel %vm1922, %v4820, %v4821
      %v4823 = vrot.slane %v4420, 3
      %v4824 = vsel %vm1922, %v4821, %v4823
      %v4825 = vrot.slane %v4421, 3
      %v4826 = vrot.slane %v4422, 3
      %v4827 = vsel %vm1922, %v4825, %v4826
      %v4828 = vrot.slane %v4423, 3
      %v4829 = vsel %vm1922, %v4826, %v4828
      %v4830 = vrot.slane %v4424, 3
      %v4831 = vrot.slane %v4425, 3
      %v4832 = vsel %vm1922, %v4830, %v4831
      %v4833 = vrot.slane %v4426, 3
      %v4834 = vsel %vm1922, %v4831, %v4833
      %v4835 = vrot.slane %v4427, 3
      %v4836 = vrot.slane %v4428, 3
      %v4837 = vsel %vm1922, %v4835, %v4836
      %v4838 = vrot.slane %v4429, 3
      %v4839 = vsel %vm1922, %v4836, %v4838
      %v4840 = vrot.slane %v4430, 3
      %v4841 = vrot.slane %v4431, 3
      %v4842 = vsel %vm1922, %v4840, %v4841
      %v4843 = vrot.slane %v4432, 3
      %v4844 = vsel %vm1922, %v4841, %v4843
      %v4845 = vrot.slane %v4433, 3
      %v4846 = vrot.slane %v4434, 3
      %v4847 = vsel %vm1922, %v4845, %v4846
      %v4848 = vrot.slane %v4435, 3
      %v4849 = vsel %vm1922, %v4846, %v4848
      %v4850 = vrot.slane %v4436, 3
      %v4851 = vrot.slane %v4437, 3
      %v4852 = vsel %vm1922, %v4850, %v4851
      %v4853 = vrot.slane %v4438, 3
      %v4854 = vsel %vm1922, %v4851, %v4853
      %v4887 = vmax.f32 %v4743, %v4777
      %v4888 = vmax.f32 %v4744, %v4779
      %v4889 = vmax.f32 %v4745, %v4782
      %v4890 = vmax.f32 %v4746, %v4784
      %v4891 = vmax.f32 %v4747, %v4787
      %v4892 = vmax.f32 %v4748, %v4789
      %v4893 = vmax.f32 %v4749, %v4792
      %v4894 = vmax.f32 %v4750, %v4794
      %v4895 = vmax.f32 %v4751, %v4797
      %v4896 = vmax.f32 %v4752, %v4799
      %v4897 = vmax.f32 %v4753, %v4802
      %v4898 = vmax.f32 %v4754, %v4804
      %v4899 = vmax.f32 %v4755, %v4807
      %v4900 = vmax.f32 %v4756, %v4809
      %v4901 = vmax.f32 %v4757, %v4812
      %v4902 = vmax.f32 %v4758, %v4814
      %v4903 = vmax.f32 %v4759, %v4817
      %v4904 = vmax.f32 %v4760, %v4819
      %v4905 = vmax.f32 %v4761, %v4822
      %v4906 = vmax.f32 %v4762, %v4824
      %v4907 = vmax.f32 %v4763, %v4827
      %v4908 = vmax.f32 %v4764, %v4829
      %v4909 = vmax.f32 %v4765, %v4832
      %v4910 = vmax.f32 %v4766, %v4834
      %v4911 = vmax.f32 %v4767, %v4837
      %v4912 = vmax.f32 %v4768, %v4839
      %v4913 = vmax.f32 %v4769, %v4842
      %v4914 = vmax.f32 %v4770, %v4844
      %v4915 = vmax.f32 %v4771, %v4847
      %v4916 = vmax.f32 %v4772, %v4849
      %v4917 = vmax.f32 %v4773, %v4852
      %v4918 = vmax.f32 %v4774, %v4854
      %v4919 = vrot.slane %v4391, 4
      %v4920 = vrot.slane %v4392, 4
      %v4921 = vsel %vm362, %v4919, %v4920
      %v4922 = vrot.slane %v4393, 4
      %v4923 = vsel %vm362, %v4920, %v4922
      %v4924 = vrot.slane %v4394, 4
      %v4925 = vrot.slane %v4395, 4
      %v4926 = vsel %vm362, %v4924, %v4925
      %v4927 = vrot.slane %v4396, 4
      %v4928 = vsel %vm362, %v4925, %v4927
      %v4929 = vrot.slane %v4397, 4
      %v4930 = vrot.slane %v4398, 4
      %v4931 = vsel %vm362, %v4929, %v4930
      %v4932 = vrot.slane %v4399, 4
      %v4933 = vsel %vm362, %v4930, %v4932
      %v4934 = vrot.slane %v4400, 4
      %v4935 = vrot.slane %v4401, 4
      %v4936 = vsel %vm362, %v4934, %v4935
      %v4937 = vrot.slane %v4402, 4
      %v4938 = vsel %vm362, %v4935, %v4937
      %v4939 = vrot.slane %v4403, 4
      %v4940 = vrot.slane %v4404, 4
      %v4941 = vsel %vm362, %v4939, %v4940
      %v4942 = vrot.slane %v4405, 4
      %v4943 = vsel %vm362, %v4940, %v4942
      %v4944 = vrot.slane %v4406, 4
      %v4945 = vrot.slane %v4407, 4
      %v4946 = vsel %vm362, %v4944, %v4945
      %v4947 = vrot.slane %v4408, 4
      %v4948 = vsel %vm362, %v4945, %v4947
      %v4949 = vrot.slane %v4409, 4
      %v4950 = vrot.slane %v4410, 4
      %v4951 = vsel %vm362, %v4949, %v4950
      %v4952 = vrot.slane %v4411, 4
      %v4953 = vsel %vm362, %v4950, %v4952
      %v4954 = vrot.slane %v4412, 4
      %v4955 = vrot.slane %v4413, 4
      %v4956 = vsel %vm362, %v4954, %v4955
      %v4957 = vrot.slane %v4414, 4
      %v4958 = vsel %vm362, %v4955, %v4957
      %v4959 = vrot.slane %v4415, 4
      %v4960 = vrot.slane %v4416, 4
      %v4961 = vsel %vm362, %v4959, %v4960
      %v4962 = vrot.slane %v4417, 4
      %v4963 = vsel %vm362, %v4960, %v4962
      %v4964 = vrot.slane %v4418, 4
      %v4965 = vrot.slane %v4419, 4
      %v4966 = vsel %vm362, %v4964, %v4965
      %v4967 = vrot.slane %v4420, 4
      %v4968 = vsel %vm362, %v4965, %v4967
      %v4969 = vrot.slane %v4421, 4
      %v4970 = vrot.slane %v4422, 4
      %v4971 = vsel %vm362, %v4969, %v4970
      %v4972 = vrot.slane %v4423, 4
      %v4973 = vsel %vm362, %v4970, %v4972
      %v4974 = vrot.slane %v4424, 4
      %v4975 = vrot.slane %v4425, 4
      %v4976 = vsel %vm362, %v4974, %v4975
      %v4977 = vrot.slane %v4426, 4
      %v4978 = vsel %vm362, %v4975, %v4977
      %v4979 = vrot.slane %v4427, 4
      %v4980 = vrot.slane %v4428, 4
      %v4981 = vsel %vm362, %v4979, %v4980
      %v4982 = vrot.slane %v4429, 4
      %v4983 = vsel %vm362, %v4980, %v4982
      %v4984 = vrot.slane %v4430, 4
      %v4985 = vrot.slane %v4431, 4
      %v4986 = vsel %vm362, %v4984, %v4985
      %v4987 = vrot.slane %v4432, 4
      %v4988 = vsel %vm362, %v4985, %v4987
      %v4989 = vrot.slane %v4433, 4
      %v4990 = vrot.slane %v4434, 4
      %v4991 = vsel %vm362, %v4989, %v4990
      %v4992 = vrot.slane %v4435, 4
      %v4993 = vsel %vm362, %v4990, %v4992
      %v4994 = vrot.slane %v4436, 4
      %v4995 = vrot.slane %v4437, 4
      %v4996 = vsel %vm362, %v4994, %v4995
      %v4997 = vrot.slane %v4438, 4
      %v4998 = vsel %vm362, %v4995, %v4997
      %v5031 = vmax.f32 %v4887, %v4921
      %v5032 = vmax.f32 %v4888, %v4923
      %v5033 = vmax.f32 %v4889, %v4926
      %v5034 = vmax.f32 %v4890, %v4928
      %v5035 = vmax.f32 %v4891, %v4931
      %v5036 = vmax.f32 %v4892, %v4933
      %v5037 = vmax.f32 %v4893, %v4936
      %v5038 = vmax.f32 %v4894, %v4938
      %v5039 = vmax.f32 %v4895, %v4941
      %v5040 = vmax.f32 %v4896, %v4943
      %v5041 = vmax.f32 %v4897, %v4946
      %v5042 = vmax.f32 %v4898, %v4948
      %v5043 = vmax.f32 %v4899, %v4951
      %v5044 = vmax.f32 %v4900, %v4953
      %v5045 = vmax.f32 %v4901, %v4956
      %v5046 = vmax.f32 %v4902, %v4958
      %v5047 = vmax.f32 %v4903, %v4961
      %v5048 = vmax.f32 %v4904, %v4963
      %v5049 = vmax.f32 %v4905, %v4966
      %v5050 = vmax.f32 %v4906, %v4968
      %v5051 = vmax.f32 %v4907, %v4971
      %v5052 = vmax.f32 %v4908, %v4973
      %v5053 = vmax.f32 %v4909, %v4976
      %v5054 = vmax.f32 %v4910, %v4978
      %v5055 = vmax.f32 %v4911, %v4981
      %v5056 = vmax.f32 %v4912, %v4983
      %v5057 = vmax.f32 %v4913, %v4986
      %v5058 = vmax.f32 %v4914, %v4988
      %v5059 = vmax.f32 %v4915, %v4991
      %v5060 = vmax.f32 %v4916, %v4993
      %v5061 = vmax.f32 %v4917, %v4996
      %v5062 = vmax.f32 %v4918, %v4998
      %v5063 = vld [vmem:[#allocation3] sm:$0xff]
      %v5064 = vld [vmem:[#allocation3 + $0x8] sm:$0xff]
      %v5065 = vld [vmem:[#allocation3 + $0x10] sm:$0xff]
      %v5066 = vld [vmem:[#allocation3 + $0x18] sm:$0xff]
      %v5067 = vld [vmem:[#allocation3 + $0x20] sm:$0xff]
      %v5068 = vld [vmem:[#allocation3 + $0x28] sm:$0xff]
      %v5069 = vld [vmem:[#allocation3 + $0x30] sm:$0xff]
      %v5070 = vld [vmem:[#allocation3 + $0x38] sm:$0xff]
      %v5071 = vld [vmem:[#allocation3 + $0x40] sm:$0xff]
      %v5072 = vld [vmem:[#allocation3 + $0x48] sm:$0xff]
      %v5073 = vld [vmem:[#allocation3 + $0x50] sm:$0xff]
      %v5074 = vld [vmem:[#allocation3 + $0x58] sm:$0xff]
      %v5075 = vld [vmem:[#allocation3 + $0x60] sm:$0xff]
      %v5076 = vld [vmem:[#allocation3 + $0x68] sm:$0xff]
      %v5077 = vld [vmem:[#allocation3 + $0x70] sm:$0xff]
      %v5078 = vld [vmem:[#allocation3 + $0x78] sm:$0xff]
      %v5079 = vld [vmem:[#allocation3 + $0x80] sm:$0xff]
      %v5080 = vld [vmem:[#allocation3 + $0x88] sm:$0xff]
      %v5081 = vld [vmem:[#allocation3 + $0x90] sm:$0xff]
      %v5082 = vld [vmem:[#allocation3 + $0x98] sm:$0xff]
      %v5083 = vld [vmem:[#allocation3 + $0xa0] sm:$0xff]
      %v5084 = vld [vmem:[#allocation3 + $0xa8] sm:$0xff]
      %v5085 = vld [vmem:[#allocation3 + $0xb0] sm:$0xff]
      %v5086 = vld [vmem:[#allocation3 + $0xb8] sm:$0xff]
      %v5087 = vld [vmem:[#allocation3 + $0xc0] sm:$0xff]
      %v5088 = vld [vmem:[#allocation3 + $0xc8] sm:$0xff]
      %v5089 = vld [vmem:[#allocation3 + $0xd0] sm:$0xff]
      %v5090 = vld [vmem:[#allocation3 + $0xd8] sm:$0xff]
      %v5091 = vld [vmem:[#allocation3 + $0xe0] sm:$0xff]
      %v5092 = vld [vmem:[#allocation3 + $0xe8] sm:$0xff]
      %v5093 = vld [vmem:[#allocation3 + $0xf0] sm:$0xff]
      %v5094 = vld [vmem:[#allocation3 + $0xf8] sm:$0xff]
      %s5095 = scalar_lea.vmem %s3, 384
      %v5096 = vld [vmem:[%s5095] sm:$0xff]
      %v5097 = vld [vmem:[%s5095 + $0x8] sm:$0xff]
      %v5098 = vld [vmem:[%s5095 + $0x10] sm:$0xff]
      %v5099 = vld [vmem:[%s5095 + $0x18] sm:$0xff]
      %v5100 = vld [vmem:[%s5095 + $0x20] sm:$0xff]
      %v5101 = vld [vmem:[%s5095 + $0x28] sm:$0xff]
      %v5102 = vld [vmem:[%s5095 + $0x30] sm:$0xff]
      %v5103 = vld [vmem:[%s5095 + $0x38] sm:$0xff]
      %v5104 = vld [vmem:[%s5095 + $0x40] sm:$0xff]
      %v5105 = vld [vmem:[%s5095 + $0x48] sm:$0xff]
      %v5106 = vld [vmem:[%s5095 + $0x50] sm:$0xff]
      %v5107 = vld [vmem:[%s5095 + $0x58] sm:$0xff]
      %v5108 = vld [vmem:[%s5095 + $0x60] sm:$0xff]
      %v5109 = vld [vmem:[%s5095 + $0x68] sm:$0xff]
      %v5110 = vld [vmem:[%s5095 + $0x70] sm:$0xff]
      %v5111 = vld [vmem:[%s5095 + $0x78] sm:$0xff]
      %5112 = vmatprep.subr.mxu0 0.0
      %5113 = vmatpush1.msra.mxu0 %v5096
      %5114 = vmatprep.subr.mxu0 0.0
      %5115 = vmatpush1.msra.mxu0 %v5097
      %5116 = vmatprep.subr.mxu0 0.0
      %5117 = vmatpush1.msra.mxu0 %v5098
      %5118 = vmatprep.subr.mxu0 0.0
      %5119 = vmatpush1.msra.mxu0 %v5099
      %5120 = vmatprep.subr.mxu0 0.0
      %5121 = vmatpush1.msra.mxu0 %v5100
      %5122 = vmatprep.subr.mxu0 0.0
      %5123 = vmatpush1.msra.mxu0 %v5101
      %5124 = vmatprep.subr.mxu0 0.0
      %5125 = vmatpush1.msra.mxu0 %v5102
      %5126 = vmatprep.subr.mxu0 0.0
      %5127 = vmatpush1.msra.mxu0 %v5103
      %5128 = vmatprep.subr.mxu0 0.0
      %5129 = vmatpush1.msra.mxu0 %v5104
      %5130 = vmatprep.subr.mxu0 0.0
      %5131 = vmatpush1.msra.mxu0 %v5105
      %5132 = vmatprep.subr.mxu0 0.0
      %5133 = vmatpush1.msra.mxu0 %v5106
      %5134 = vmatprep.subr.mxu0 0.0
      %5135 = vmatpush1.msra.mxu0 %v5107
      %5136 = vmatprep.subr.mxu0 0.0
      %5137 = vmatpush1.msra.mxu0 %v5108
      %5138 = vmatprep.subr.mxu0 0.0
      %5139 = vmatpush1.msra.mxu0 %v5109
      %5140 = vmatprep.subr.mxu0 0.0
      %5141 = vmatpush1.msra.mxu0 %v5110
      %5142 = vmatprep.subr.mxu0 0.0
      %5143 = vmatpush1.msra.mxu0 %v5111
      %5144 = vmatprep.subr.mxu0 0.0
      %5145 = vmatpush1.msra.mxu0 0.0
      %5146 = vmatprep.subr.mxu0 0.0
      %5147 = vmatpush1.msra.mxu0 0.0
      %5148 = vmatprep.subr.mxu0 0.0
      %5149 = vmatpush1.msra.mxu0 0.0
      %5150 = vmatprep.subr.mxu0 0.0
      %5151 = vmatpush1.msra.mxu0 0.0
      %5152 = vmatprep.subr.mxu0 0.0
      %5153 = vmatpush1.msra.mxu0 0.0
      %5154 = vmatprep.subr.mxu0 0.0
      %5155 = vmatpush1.msra.mxu0 0.0
      %5156 = vmatprep.subr.mxu0 0.0
      %5157 = vmatpush1.msra.mxu0 0.0
      %5158 = vmatprep.subr.mxu0 0.0
      %5159 = vmatpush1.msra.mxu0 0.0
      %5160 = vmatprep.subr.mxu0 0.0
      %5161 = vmatpush1.msra.mxu0 0.0
      %5162 = vmatprep.subr.mxu0 0.0
      %5163 = vmatpush1.msra.mxu0 0.0
      %5164 = vmatprep.subr.mxu0 0.0
      %5165 = vmatpush1.msra.mxu0 0.0
      %5166 = vmatprep.subr.mxu0 0.0
      %5167 = vmatpush1.msra.mxu0 0.0
      %5168 = vmatprep.subr.mxu0 0.0
      %5169 = vmatpush1.msra.mxu0 0.0
      %5170 = vmatprep.subr.mxu0 0.0
      %5171 = vmatpush1.msra.mxu0 0.0
      %5172 = vmatprep.subr.mxu0 0.0
      %5173 = vmatpush1.msra.mxu0 0.0
      %5174 = vmatprep.subr.mxu0 0.0
      %5175 = vmatpush1.msra.mxu0 0.0
      %5176 = vmatprep.mubr.f32.mxu0 0.0
      %5177 = vmatmul.mubr.f32.gmra.mrb[0].mxu0 %v5031
      %v5178 = vpop.f32.mrb[0].mxu0
      %v5179 = vadd.f32 0.0, %v5178
      %v5180 = vpop.f32.mrb[0].mxu0
      %5181 = vmatprep.mubr.f32.mxu0 0.0
      %5182 = vmatmul.mubr.f32.gmra.mrb[0].mxu0 %v5032
      %v5183 = vpop.f32.mrb[0].mxu0
      %v5184 = vadd.f32 0.0, %v5183
      %v5185 = vpop.f32.mrb[0].mxu0
      %5186 = vmatprep.mubr.f32.mxu0 0.0
      %5187 = vmatmul.mubr.f32.gmra.mrb[0].mxu0 %v5033
      %v5188 = vpop.f32.mrb[0].mxu0
      %v5189 = vadd.f32 0.0, %v5188
      %v5190 = vpop.f32.mrb[0].mxu0
      %5191 = vmatprep.mubr.f32.mxu0 0.0
      %5192 = vmatmul.mubr.f32.gmra.mrb[0].mxu0 %v5034
      %v5193 = vpop.f32.mrb[0].mxu0
      %v5194 = vadd.f32 0.0, %v5193
      %v5195 = vpop.f32.mrb[0].mxu0
      %5196 = vmatprep.mubr.f32.mxu0 0.0
      %5197 = vmatmul.mubr.f32.gmra.mrb[0].mxu0 %v5035
      %v5198 = vpop.f32.mrb[0].mxu0
      %v5199 = vadd.f32 0.0, %v5198
      %v5200 = vpop.f32.mrb[0].mxu0
      %5201 = vmatprep.mubr.f32.mxu0 0.0
      %5202 = vmatmul.mubr.f32.gmra.mrb[0].mxu0 %v5036
      %v5203 = vpop.f32.mrb[0].mxu0
      %v5204 = vadd.f32 0.0, %v5203
      %v5205 = vpop.f32.mrb[0].mxu0
      %5206 = vmatprep.mubr.f32.mxu0 0.0
      %5207 = vmatmul.mubr.f32.gmra.mrb[0].mxu0 %v5037
      %v5208 = vpop.f32.mrb[0].mxu0
      %v5209 = vadd.f32 0.0, %v5208
      %v5210 = vpop.f32.mrb[0].mxu0
      %5211 = vmatprep.mubr.f32.mxu0 0.0
      %5212 = vmatmul.mubr.f32.gmra.mrb[0].mxu0 %v5038
      %v5213 = vpop.f32.mrb[0].mxu0
      %v5214 = vadd.f32 0.0, %v5213
      %v5215 = vpop.f32.mrb[0].mxu0
      %5216 = vmatprep.mubr.f32.mxu0 0.0
      %5217 = vmatmul.mubr.f32.gmra.mrb[0].mxu0 %v5039
      %v5218 = vpop.f32.mrb[0].mxu0
      %v5219 = vadd.f32 0.0, %v5218
      %v5220 = vpop.f32.mrb[0].mxu0
      %5221 = vmatprep.mubr.f32.mxu0 0.0
      %5222 = vmatmul.mubr.f32.gmra.mrb[0].mxu0 %v5040
      %v5223 = vpop.f32.mrb[0].mxu0
      %v5224 = vadd.f32 0.0, %v5223
      %v5225 = vpop.f32.mrb[0].mxu0
      %5226 = vmatprep.mubr.f32.mxu0 0.0
      %5227 = vmatmul.mubr.f32.gmra.mrb[0].mxu0 %v5041
      %v5228 = vpop.f32.mrb[0].mxu0
      %v5229 = vadd.f32 0.0, %v5228
      %v5230 = vpop.f32.mrb[0].mxu0
      %5231 = vmatprep.mubr.f32.mxu0 0.0
      %5232 = vmatmul.mubr.f32.gmra.mrb[0].mxu0 %v5042
      %v5233 = vpop.f32.mrb[0].mxu0
      %v5234 = vadd.f32 0.0, %v5233
      %v5235 = vpop.f32.mrb[0].mxu0
      %5236 = vmatprep.mubr.f32.mxu0 0.0
      %5237 = vmatmul.mubr.f32.gmra.mrb[0].mxu0 %v5043
      %v5238 = vpop.f32.mrb[0].mxu0
      %v5239 = vadd.f32 0.0, %v5238
      %v5240 = vpop.f32.mrb[0].mxu0
      %5241 = vmatprep.mubr.f32.mxu0 0.0
      %5242 = vmatmul.mubr.f32.gmra.mrb[0].mxu0 %v5044
      %v5243 = vpop.f32.mrb[0].mxu0
      %v5244 = vadd.f32 0.0, %v5243
      %v5245 = vpop.f32.mrb[0].mxu0
      %5246 = vmatprep.mubr.f32.mxu0 0.0
      %5247 = vmatmul.mubr.f32.gmra.mrb[0].mxu0 %v5045
      %v5248 = vpop.f32.mrb[0].mxu0
      %v5249 = vadd.f32 0.0, %v5248
      %v5250 = vpop.f32.mrb[0].mxu0
      %5251 = vmatprep.mubr.f32.mxu0 0.0
      %5252 = vmatmul.mubr.f32.gmra.mrb[0].mxu0 %v5046
      %v5253 = vpop.f32.mrb[0].mxu0
      %v5254 = vadd.f32 0.0, %v5253
      %v5255 = vpop.f32.mrb[0].mxu0
      %5256 = vmatprep.mubr.f32.mxu0 0.0
      %5257 = vmatmul.mubr.f32.gmra.mrb[0].mxu0 %v5047
      %v5258 = vpop.f32.mrb[0].mxu0
      %v5259 = vadd.f32 0.0, %v5258
      %v5260 = vpop.f32.mrb[0].mxu0
      %5261 = vmatprep.mubr.f32.mxu0 0.0
      %5262 = vmatmul.mubr.f32.gmra.mrb[0].mxu0 %v5048
      %v5263 = vpop.f32.mrb[0].mxu0
      %v5264 = vadd.f32 0.0, %v5263
      %v5265 = vpop.f32.mrb[0].mxu0
      %5266 = vmatprep.mubr.f32.mxu0 0.0
      %5267 = vmatmul.mubr.f32.gmra.mrb[0].mxu0 %v5049
      %v5268 = vpop.f32.mrb[0].mxu0
      %v5269 = vadd.f32 0.0, %v5268
      %v5270 = vpop.f32.mrb[0].mxu0
      %5271 = vmatprep.mubr.f32.mxu0 0.0
      %5272 = vmatmul.mubr.f32.gmra.mrb[0].mxu0 %v5050
      %v5273 = vpop.f32.mrb[0].mxu0
      %v5274 = vadd.f32 0.0, %v5273
      %v5275 = vpop.f32.mrb[0].mxu0
      %5276 = vmatprep.mubr.f32.mxu0 0.0
      %5277 = vmatmul.mubr.f32.gmra.mrb[0].mxu0 %v5051
      %v5278 = vpop.f32.mrb[0].mxu0
      %v5279 = vadd.f32 0.0, %v5278
      %v5280 = vpop.f32.mrb[0].mxu0
      %5281 = vmatprep.mubr.f32.mxu0 0.0
      %5282 = vmatmul.mubr.f32.gmra.mrb[0].mxu0 %v5052
      %v5283 = vpop.f32.mrb[0].mxu0
      %v5284 = vadd.f32 0.0, %v5283
      %v5285 = vpop.f32.mrb[0].mxu0
      %5286 = vmatprep.mubr.f32.mxu0 0.0
      %5287 = vmatmul.mubr.f32.gmra.mrb[0].mxu0 %v5053
      %v5288 = vpop.f32.mrb[0].mxu0
      %v5289 = vadd.f32 0.0, %v5288
      %v5290 = vpop.f32.mrb[0].mxu0
      %5291 = vmatprep.mubr.f32.mxu0 0.0
      %5292 = vmatmul.mubr.f32.gmra.mrb[0].mxu0 %v5054
      %v5293 = vpop.f32.mrb[0].mxu0
      %v5294 = vadd.f32 0.0, %v5293
      %v5295 = vpop.f32.mrb[0].mxu0
      %5296 = vmatprep.mubr.f32.mxu0 0.0
      %5297 = vmatmul.mubr.f32.gmra.mrb[0].mxu0 %v5055
      %v5298 = vpop.f32.mrb[0].mxu0
      %v5299 = vadd.f32 0.0, %v5298
      %v5300 = vpop.f32.mrb[0].mxu0
      %5301 = vmatprep.mubr.f32.mxu0 0.0
      %5302 = vmatmul.mubr.f32.gmra.mrb[0].mxu0 %v5056
      %v5303 = vpop.f32.mrb[0].mxu0
      %v5304 = vadd.f32 0.0, %v5303
      %v5305 = vpop.f32.mrb[0].mxu0
      %5306 = vmatprep.mubr.f32.mxu0 0.0
      %5307 = vmatmul.mubr.f32.gmra.mrb[0].mxu0 %v5057
      %v5308 = vpop.f32.mrb[0].mxu0
      %v5309 = vadd.f32 0.0, %v5308
      %v5310 = vpop.f32.mrb[0].mxu0
      %5311 = vmatprep.mubr.f32.mxu0 0.0
      %5312 = vmatmul.mubr.f32.gmra.mrb[0].mxu0 %v5058
      %v5313 = vpop.f32.mrb[0].mxu0
      %v5314 = vadd.f32 0.0, %v5313
      %v5315 = vpop.f32.mrb[0].mxu0
      %5316 = vmatprep.mubr.f32.mxu0 0.0
      %5317 = vmatmul.mubr.f32.gmra.mrb[0].mxu0 %v5059
      %v5318 = vpop.f32.mrb[0].mxu0
      %v5319 = vadd.f32 0.0, %v5318
      %v5320 = vpop.f32.mrb[0].mxu0
      %5321 = vmatprep.mubr.f32.mxu0 0.0
      %5322 = vmatmul.mubr.f32.gmra.mrb[0].mxu0 %v5060
      %v5323 = vpop.f32.mrb[0].mxu0
      %v5324 = vadd.f32 0.0, %v5323
      %v5325 = vpop.f32.mrb[0].mxu0
      %5326 = vmatprep.mubr.f32.mxu0 0.0
      %5327 = vmatmul.mubr.f32.gmra.mrb[0].mxu0 %v5061
      %v5328 = vpop.f32.mrb[0].mxu0
      %v5329 = vadd.f32 0.0, %v5328
      %v5330 = vpop.f32.mrb[0].mxu0
      %5331 = vmatprep.mubr.f32.mxu0 0.0
      %5332 = vmatmul.mubr.f32.gmra.mrb[0].mxu0 %v5062
      %v5333 = vpop.f32.mrb[0].mxu0
      %v5334 = vadd.f32 0.0, %v5333
      %v5335 = vpop.f32.mrb[0].mxu0
      %5336 = vdwg.mxu0
      %v5337 = vadd.f32 %v5063, %v5179
      %v5338 = vadd.f32 %v5064, %v5184
      %v5339 = vadd.f32 %v5065, %v5189
      %v5340 = vadd.f32 %v5066, %v5194
      %v5341 = vadd.f32 %v5067, %v5199
      %v5342 = vadd.f32 %v5068, %v5204
      %v5343 = vadd.f32 %v5069, %v5209
      %v5344 = vadd.f32 %v5070, %v5214
      %v5345 = vadd.f32 %v5071, %v5219
      %v5346 = vadd.f32 %v5072, %v5224
      %v5347 = vadd.f32 %v5073, %v5229
      %v5348 = vadd.f32 %v5074, %v5234
      %v5349 = vadd.f32 %v5075, %v5239
      %v5350 = vadd.f32 %v5076, %v5244
      %v5351 = vadd.f32 %v5077, %v5249
      %v5352 = vadd.f32 %v5078, %v5254
      %v5353 = vadd.f32 %v5079, %v5259
      %v5354 = vadd.f32 %v5080, %v5264
      %v5355 = vadd.f32 %v5081, %v5269
      %v5356 = vadd.f32 %v5082, %v5274
      %v5357 = vadd.f32 %v5083, %v5279
      %v5358 = vadd.f32 %v5084, %v5284
      %v5359 = vadd.f32 %v5085, %v5289
      %v5360 = vadd.f32 %v5086, %v5294
      %v5361 = vadd.f32 %v5087, %v5299
      %v5362 = vadd.f32 %v5088, %v5304
      %v5363 = vadd.f32 %v5089, %v5309
      %v5364 = vadd.f32 %v5090, %v5314
      %v5365 = vadd.f32 %v5091, %v5319
      %v5366 = vadd.f32 %v5092, %v5324
      %v5367 = vadd.f32 %v5093, %v5329
      %v5368 = vadd.f32 %v5094, %v5334
      %5369 = vst [vmem:[#allocation3] sm:$0xff] %v5337
      %5370 = vst [vmem:[#allocation3 + $0x8] sm:$0xff] %v5338
      %5371 = vst [vmem:[#allocation3 + $0x10] sm:$0xff] %v5339
      %5372 = vst [vmem:[#allocation3 + $0x18] sm:$0xff] %v5340
      %5373 = vst [vmem:[#allocation3 + $0x20] sm:$0xff] %v5341
      %5374 = vst [vmem:[#allocation3 + $0x28] sm:$0xff] %v5342
      %5375 = vst [vmem:[#allocation3 + $0x30] sm:$0xff] %v5343
      %5376 = vst [vmem:[#allocation3 + $0x38] sm:$0xff] %v5344
      %5377 = vst [vmem:[#allocation3 + $0x40] sm:$0xff] %v5345
      %5378 = vst [vmem:[#allocation3 + $0x48] sm:$0xff] %v5346
      %5379 = vst [vmem:[#allocation3 + $0x50] sm:$0xff] %v5347
      %5380 = vst [vmem:[#allocation3 + $0x58] sm:$0xff] %v5348
      %5381 = vst [vmem:[#allocation3 + $0x60] sm:$0xff] %v5349
      %5382 = vst [vmem:[#allocation3 + $0x68] sm:$0xff] %v5350
      %5383 = vst [vmem:[#allocation3 + $0x70] sm:$0xff] %v5351
      %5384 = vst [vmem:[#allocation3 + $0x78] sm:$0xff] %v5352
      %5385 = vst [vmem:[#allocation3 + $0x80] sm:$0xff] %v5353
      %5386 = vst [vmem:[#allocation3 + $0x88] sm:$0xff] %v5354
      %5387 = vst [vmem:[#allocation3 + $0x90] sm:$0xff] %v5355
      %5388 = vst [vmem:[#allocation3 + $0x98] sm:$0xff] %v5356
      %5389 = vst [vmem:[#allocation3 + $0xa0] sm:$0xff] %v5357
      %5390 = vst [vmem:[#allocation3 + $0xa8] sm:$0xff] %v5358
      %5391 = vst [vmem:[#allocation3 + $0xb0] sm:$0xff] %v5359
      %5392 = vst [vmem:[#allocation3 + $0xb8] sm:$0xff] %v5360
      %5393 = vst [vmem:[#allocation3 + $0xc0] sm:$0xff] %v5361
      %5394 = vst [vmem:[#allocation3 + $0xc8] sm:$0xff] %v5362
      %5395 = vst [vmem:[#allocation3 + $0xd0] sm:$0xff] %v5363
      %5396 = vst [vmem:[#allocation3 + $0xd8] sm:$0xff] %v5364
      %5397 = vst [vmem:[#allocation3 + $0xe0] sm:$0xff] %v5365
      %5398 = vst [vmem:[#allocation3 + $0xe8] sm:$0xff] %v5366
      %5399 = vst [vmem:[#allocation3 + $0xf0] sm:$0xff] %v5367
      %5400 = vst [vmem:[#allocation3 + $0xf8] sm:$0xff] %v5368
      %v5401 = vld [vmem:[#allocation3] sm:$0xff]
      %v5402 = vld [vmem:[#allocation3 + $0x8] sm:$0xff]
      %v5403 = vld [vmem:[#allocation3 + $0x10] sm:$0xff]
      %v5404 = vld [vmem:[#allocation3 + $0x18] sm:$0xff]
      %v5405 = vld [vmem:[#allocation3 + $0x20] sm:$0xff]
      %v5406 = vld [vmem:[#allocation3 + $0x28] sm:$0xff]
      %v5407 = vld [vmem:[#allocation3 + $0x30] sm:$0xff]
      %v5408 = vld [vmem:[#allocation3 + $0x38] sm:$0xff]
      %v5409 = vld [vmem:[#allocation3 + $0x40] sm:$0xff]
      %v5410 = vld [vmem:[#allocation3 + $0x48] sm:$0xff]
      %v5411 = vld [vmem:[#allocation3 + $0x50] sm:$0xff]
      %v5412 = vld [vmem:[#allocation3 + $0x58] sm:$0xff]
      %v5413 = vld [vmem:[#allocation3 + $0x60] sm:$0xff]
      %v5414 = vld [vmem:[#allocation3 + $0x68] sm:$0xff]
      %v5415 = vld [vmem:[#allocation3 + $0x70] sm:$0xff]
      %v5416 = vld [vmem:[#allocation3 + $0x78] sm:$0xff]
      %v5417 = vld [vmem:[#allocation3 + $0x80] sm:$0xff]
      %v5418 = vld [vmem:[#allocation3 + $0x88] sm:$0xff]
      %v5419 = vld [vmem:[#allocation3 + $0x90] sm:$0xff]
      %v5420 = vld [vmem:[#allocation3 + $0x98] sm:$0xff]
      %v5421 = vld [vmem:[#allocation3 + $0xa0] sm:$0xff]
      %v5422 = vld [vmem:[#allocation3 + $0xa8] sm:$0xff]
      %v5423 = vld [vmem:[#allocation3 + $0xb0] sm:$0xff]
      %v5424 = vld [vmem:[#allocation3 + $0xb8] sm:$0xff]
      %v5425 = vld [vmem:[#allocation3 + $0xc0] sm:$0xff]
      %v5426 = vld [vmem:[#allocation3 + $0xc8] sm:$0xff]
      %v5427 = vld [vmem:[#allocation3 + $0xd0] sm:$0xff]
      %v5428 = vld [vmem:[#allocation3 + $0xd8] sm:$0xff]
      %v5429 = vld [vmem:[#allocation3 + $0xe0] sm:$0xff]
      %v5430 = vld [vmem:[#allocation3 + $0xe8] sm:$0xff]
      %v5431 = vld [vmem:[#allocation3 + $0xf0] sm:$0xff]
      %v5432 = vld [vmem:[#allocation3 + $0xf8] sm:$0xff]
      %v5433 = vld [vmem:[%s4] sm:$0x1]
      %v5435 = vlaneseq
      %v5436 = vshrl.u32 %v5435, 7
      %v5437 = vsub.s32 0, %v5436
      %v5438 = vrot.slane %v5433, %v5437
      %v5440 = vadd.f32 %v5401, %v5438
      %v5441 = vadd.f32 %v5402, %v5438
      %v5442 = vadd.f32 %v5403, %v5438
      %v5443 = vadd.f32 %v5404, %v5438
      %v5444 = vadd.f32 %v5405, %v5438
      %v5445 = vadd.f32 %v5406, %v5438
      %v5446 = vadd.f32 %v5407, %v5438
      %v5447 = vadd.f32 %v5408, %v5438
      %v5448 = vadd.f32 %v5409, %v5438
      %v5449 = vadd.f32 %v5410, %v5438
      %v5450 = vadd.f32 %v5411, %v5438
      %v5451 = vadd.f32 %v5412, %v5438
      %v5452 = vadd.f32 %v5413, %v5438
      %v5453 = vadd.f32 %v5414, %v5438
      %v5454 = vadd.f32 %v5415, %v5438
      %v5455 = vadd.f32 %v5416, %v5438
      %v5456 = vadd.f32 %v5417, %v5438
      %v5457 = vadd.f32 %v5418, %v5438
      %v5458 = vadd.f32 %v5419, %v5438
      %v5459 = vadd.f32 %v5420, %v5438
      %v5460 = vadd.f32 %v5421, %v5438
      %v5461 = vadd.f32 %v5422, %v5438
      %v5462 = vadd.f32 %v5423, %v5438
      %v5463 = vadd.f32 %v5424, %v5438
      %v5464 = vadd.f32 %v5425, %v5438
      %v5465 = vadd.f32 %v5426, %v5438
      %v5466 = vadd.f32 %v5427, %v5438
      %v5467 = vadd.f32 %v5428, %v5438
      %v5468 = vadd.f32 %v5429, %v5438
      %v5469 = vadd.f32 %v5430, %v5438
      %v5470 = vadd.f32 %v5431, %v5438
      %v5471 = vadd.f32 %v5432, %v5438
      %v5472 = vsub.f32 0.0, %v5440
      %v5473 = vsub.f32 0.0, %v5441
      %v5474 = vsub.f32 0.0, %v5442
      %v5475 = vsub.f32 0.0, %v5443
      %v5476 = vsub.f32 0.0, %v5444
      %v5477 = vsub.f32 0.0, %v5445
      %v5478 = vsub.f32 0.0, %v5446
      %v5479 = vsub.f32 0.0, %v5447
      %v5480 = vsub.f32 0.0, %v5448
      %v5481 = vsub.f32 0.0, %v5449
      %v5482 = vsub.f32 0.0, %v5450
      %v5483 = vsub.f32 0.0, %v5451
      %v5484 = vsub.f32 0.0, %v5452
      %v5485 = vsub.f32 0.0, %v5453
      %v5486 = vsub.f32 0.0, %v5454
      %v5487 = vsub.f32 0.0, %v5455
      %v5488 = vsub.f32 0.0, %v5456
      %v5489 = vsub.f32 0.0, %v5457
      %v5490 = vsub.f32 0.0, %v5458
      %v5491 = vsub.f32 0.0, %v5459
      %v5492 = vsub.f32 0.0, %v5460
      %v5493 = vsub.f32 0.0, %v5461
      %v5494 = vsub.f32 0.0, %v5462
      %v5495 = vsub.f32 0.0, %v5463
      %v5496 = vsub.f32 0.0, %v5464
      %v5497 = vsub.f32 0.0, %v5465
      %v5498 = vsub.f32 0.0, %v5466
      %v5499 = vsub.f32 0.0, %v5467
      %v5500 = vsub.f32 0.0, %v5468
      %v5501 = vsub.f32 0.0, %v5469
      %v5502 = vsub.f32 0.0, %v5470
      %v5503 = vsub.f32 0.0, %v5471
      %v5504 = vmul.f32 %v5472, 1.442695
      %v5505 = vpow.pop %v5504
      %v5506 = vmul.f32 %v5473, 1.442695
      %v5507 = vpow.pop %v5506
      %v5508 = vmul.f32 %v5474, 1.442695
      %v5509 = vpow.pop %v5508
      %v5510 = vmul.f32 %v5475, 1.442695
      %v5511 = vpow.pop %v5510
      %v5512 = vmul.f32 %v5476, 1.442695
      %v5513 = vpow.pop %v5512
      %v5514 = vmul.f32 %v5477, 1.442695
      %v5515 = vpow.pop %v5514
      %v5516 = vmul.f32 %v5478, 1.442695
      %v5517 = vpow.pop %v5516
      %v5518 = vmul.f32 %v5479, 1.442695
      %v5519 = vpow.pop %v5518
      %v5520 = vmul.f32 %v5480, 1.442695
      %v5521 = vpow.pop %v5520
      %v5522 = vmul.f32 %v5481, 1.442695
      %v5523 = vpow.pop %v5522
      %v5524 = vmul.f32 %v5482, 1.442695
      %v5525 = vpow.pop %v5524
      %v5526 = vmul.f32 %v5483, 1.442695
      %v5527 = vpow.pop %v5526
      %v5528 = vmul.f32 %v5484, 1.442695
      %v5529 = vpow.pop %v5528
      %v5530 = vmul.f32 %v5485, 1.442695
      %v5531 = vpow.pop %v5530
      %v5532 = vmul.f32 %v5486, 1.442695
      %v5533 = vpow.pop %v5532
      %v5534 = vmul.f32 %v5487, 1.442695
      %v5535 = vpow.pop %v5534
      %v5536 = vmul.f32 %v5488, 1.442695
      %v5537 = vpow.pop %v5536
      %v5538 = vmul.f32 %v5489, 1.442695
      %v5539 = vpow.pop %v5538
      %v5540 = vmul.f32 %v5490, 1.442695
      %v5541 = vpow.pop %v5540
      %v5542 = vmul.f32 %v5491, 1.442695
      %v5543 = vpow.pop %v5542
      %v5544 = vmul.f32 %v5492, 1.442695
      %v5545 = vpow.pop %v5544
      %v5546 = vmul.f32 %v5493, 1.442695
      %v5547 = vpow.pop %v5546
      %v5548 = vmul.f32 %v5494, 1.442695
      %v5549 = vpow.pop %v5548
      %v5550 = vmul.f32 %v5495, 1.442695
      %v5551 = vpow.pop %v5550
      %v5552 = vmul.f32 %v5496, 1.442695
      %v5553 = vpow.pop %v5552
      %v5554 = vmul.f32 %v5497, 1.442695
      %v5555 = vpow.pop %v5554
      %v5556 = vmul.f32 %v5498, 1.442695
      %v5557 = vpow.pop %v5556
      %v5558 = vmul.f32 %v5499, 1.442695
      %v5559 = vpow.pop %v5558
      %v5560 = vmul.f32 %v5500, 1.442695
      %v5561 = vpow.pop %v5560
      %v5562 = vmul.f32 %v5501, 1.442695
      %v5563 = vpow.pop %v5562
      %v5564 = vmul.f32 %v5502, 1.442695
      %v5565 = vpow.pop %v5564
      %v5566 = vmul.f32 %v5503, 1.442695
      %v5567 = vpow.pop %v5566
      %v5568 = vadd.f32 %v5505, 1.0
      %v5569 = vadd.f32 %v5507, 1.0
      %v5570 = vadd.f32 %v5509, 1.0
      %v5571 = vadd.f32 %v5511, 1.0
      %v5572 = vadd.f32 %v5513, 1.0
      %v5573 = vadd.f32 %v5515, 1.0
      %v5574 = vadd.f32 %v5517, 1.0
      %v5575 = vadd.f32 %v5519, 1.0
      %v5576 = vadd.f32 %v5521, 1.0
      %v5577 = vadd.f32 %v5523, 1.0
      %v5578 = vadd.f32 %v5525, 1.0
      %v5579 = vadd.f32 %v5527, 1.0
      %v5580 = vadd.f32 %v5529, 1.0
      %v5581 = vadd.f32 %v5531, 1.0
      %v5582 = vadd.f32 %v5533, 1.0
      %v5583 = vadd.f32 %v5535, 1.0
      %v5584 = vadd.f32 %v5537, 1.0
      %v5585 = vadd.f32 %v5539, 1.0
      %v5586 = vadd.f32 %v5541, 1.0
      %v5587 = vadd.f32 %v5543, 1.0
      %v5588 = vadd.f32 %v5545, 1.0
      %v5589 = vadd.f32 %v5547, 1.0
      %v5590 = vadd.f32 %v5549, 1.0
      %v5591 = vadd.f32 %v5551, 1.0
      %v5592 = vadd.f32 %v5553, 1.0
      %v5593 = vadd.f32 %v5555, 1.0
      %v5594 = vadd.f32 %v5557, 1.0
      %v5595 = vadd.f32 %v5559, 1.0
      %v5596 = vadd.f32 %v5561, 1.0
      %v5597 = vadd.f32 %v5563, 1.0
      %v5598 = vadd.f32 %v5565, 1.0
      %v5599 = vadd.f32 %v5567, 1.0
      %v5600 = vrcp.pop %v5568
      %v5601 = vrcp.pop %v5569
      %v5602 = vrcp.pop %v5570
      %v5603 = vrcp.pop %v5571
      %v5604 = vrcp.pop %v5572
      %v5605 = vrcp.pop %v5573
      %v5606 = vrcp.pop %v5574
      %v5607 = vrcp.pop %v5575
      %v5608 = vrcp.pop %v5576
      %v5609 = vrcp.pop %v5577
      %v5610 = vrcp.pop %v5578
      %v5611 = vrcp.pop %v5579
      %v5612 = vrcp.pop %v5580
      %v5613 = vrcp.pop %v5581
      %v5614 = vrcp.pop %v5582
      %v5615 = vrcp.pop %v5583
      %v5616 = vrcp.pop %v5584
      %v5617 = vrcp.pop %v5585
      %v5618 = vrcp.pop %v5586
      %v5619 = vrcp.pop %v5587
      %v5620 = vrcp.pop %v5588
      %v5621 = vrcp.pop %v5589
      %v5622 = vrcp.pop %v5590
      %v5623 = vrcp.pop %v5591
      %v5624 = vrcp.pop %v5592
      %v5625 = vrcp.pop %v5593
      %v5626 = vrcp.pop %v5594
      %v5627 = vrcp.pop %v5595
      %v5628 = vrcp.pop %v5596
      %v5629 = vrcp.pop %v5597
      %v5630 = vrcp.pop %v5598
      %v5631 = vrcp.pop %v5599
      %v5632 = vmul.f32 %v5440, %v5600
      %v5633 = vmul.f32 %v5441, %v5601
      %v5634 = vmul.f32 %v5442, %v5602
      %v5635 = vmul.f32 %v5443, %v5603
      %v5636 = vmul.f32 %v5444, %v5604
      %v5637 = vmul.f32 %v5445, %v5605
      %v5638 = vmul.f32 %v5446, %v5606
      %v5639 = vmul.f32 %v5447, %v5607
      %v5640 = vmul.f32 %v5448, %v5608
      %v5641 = vmul.f32 %v5449, %v5609
      %v5642 = vmul.f32 %v5450, %v5610
      %v5643 = vmul.f32 %v5451, %v5611
      %v5644 = vmul.f32 %v5452, %v5612
      %v5645 = vmul.f32 %v5453, %v5613
      %v5646 = vmul.f32 %v5454, %v5614
      %v5647 = vmul.f32 %v5455, %v5615
      %v5648 = vmul.f32 %v5456, %v5616
      %v5649 = vmul.f32 %v5457, %v5617
      %v5650 = vmul.f32 %v5458, %v5618
      %v5651 = vmul.f32 %v5459, %v5619
      %v5652 = vmul.f32 %v5460, %v5620
      %v5653 = vmul.f32 %v5461, %v5621
      %v5654 = vmul.f32 %v5462, %v5622
      %v5655 = vmul.f32 %v5463, %v5623
      %v5656 = vmul.f32 %v5464, %v5624
      %v5657 = vmul.f32 %v5465, %v5625
      %v5658 = vmul.f32 %v5466, %v5626
      %v5659 = vmul.f32 %v5467, %v5627
      %v5660 = vmul.f32 %v5468, %v5628
      %v5661 = vmul.f32 %v5469, %v5629
      %v5662 = vmul.f32 %v5470, %v5630
      %v5663 = vmul.f32 %v5471, %v5631
      %5664 = vst [vmem:[%s224] sm:$0xff] %v5632
      %5665 = vst [vmem:[%s224 + $0x8] sm:$0xff] %v5633
      %5666 = vst [vmem:[%s224 + $0x10] sm:$0xff] %v5634
      %5667 = vst [vmem:[%s224 + $0x18] sm:$0xff] %v5635
      %5668 = vst [vmem:[%s224 + $0x20] sm:$0xff] %v5636
      %5669 = vst [vmem:[%s224 + $0x28] sm:$0xff] %v5637
      %5670 = vst [vmem:[%s224 + $0x30] sm:$0xff] %v5638
      %5671 = vst [vmem:[%s224 + $0x38] sm:$0xff] %v5639
      %5672 = vst [vmem:[%s224 + $0x40] sm:$0xff] %v5640
      %5673 = vst [vmem:[%s224 + $0x48] sm:$0xff] %v5641
      %5674 = vst [vmem:[%s224 + $0x50] sm:$0xff] %v5642
      %5675 = vst [vmem:[%s224 + $0x58] sm:$0xff] %v5643
      %5676 = vst [vmem:[%s224 + $0x60] sm:$0xff] %v5644
      %5677 = vst [vmem:[%s224 + $0x68] sm:$0xff] %v5645
      %5678 = vst [vmem:[%s224 + $0x70] sm:$0xff] %v5646
      %5679 = vst [vmem:[%s224 + $0x78] sm:$0xff] %v5647
      %5680 = vst [vmem:[%s224 + $0x80] sm:$0xff] %v5648
      %5681 = vst [vmem:[%s224 + $0x88] sm:$0xff] %v5649
      %5682 = vst [vmem:[%s224 + $0x90] sm:$0xff] %v5650
      %5683 = vst [vmem:[%s224 + $0x98] sm:$0xff] %v5651
      %5684 = vst [vmem:[%s224 + $0xa0] sm:$0xff] %v5652
      %5685 = vst [vmem:[%s224 + $0xa8] sm:$0xff] %v5653
      %5686 = vst [vmem:[%s224 + $0xb0] sm:$0xff] %v5654
      %5687 = vst [vmem:[%s224 + $0xb8] sm:$0xff] %v5655
      %5688 = vst [vmem:[%s224 + $0xc0] sm:$0xff] %v5656
      %5689 = vst [vmem:[%s224 + $0xc8] sm:$0xff] %v5657
      %5690 = vst [vmem:[%s224 + $0xd0] sm:$0xff] %v5658
      %5691 = vst [vmem:[%s224 + $0xd8] sm:$0xff] %v5659
      %5692 = vst [vmem:[%s224 + $0xe0] sm:$0xff] %v5660
      %5693 = vst [vmem:[%s224 + $0xe8] sm:$0xff] %v5661
      %5694 = vst [vmem:[%s224 + $0xf0] sm:$0xff] %v5662
      %5695 = vst [vmem:[%s224 + $0xf8] sm:$0xff] %v5663
      %p5696 = scmp.lt.s32.totalorder %s16, 1
      %s5697 = scalar_select %p5696, %s16, 1
      %s5698 = smul.addr %s5697, 32
      %s5699 = smul.addr %s5698, 8
      %s5700 = scalar_lea.vmem %s5, %s5699
      // Predicated region
      $region41: #{qbwspp_forward.1} parent=39 // pred_check
        %p5701 = pneg %p144
      $region42: #{qbwspp_forward.1} parent=39 // pred_check_branch
        %5703 = sbr.rel (%p5701) target = $region44
      $region43: #{qbwspp_forward.1} parent=39 // pred_region
        _
      $region44: #{qbwspp_forward.1} parent=39 // pred_fallthru
        _
    $region40: #{qbwspp_forward.1} parent=5 // pred_fallthru
      _
    %p5704 = scmp.le.s32.totalorder 2, %s11
    // Predicated region
    $region45: #{qbwspp_forward.1} parent=5 // pred_check
      %p5705 = pneg %p5704
    $region46: #{qbwspp_forward.1} parent=5 // pred_check_branch
      %5707 = sbr.rel (%p5705) target = $region48
    $region47: #{qbwspp_forward.1} parent=5 // pred_region
      %s5708 = ssub.s32 %s11, 2
      // Predicated region
      $region49: #{qbwspp_forward.1} parent=47 // pred_check
        %p5709 = pneg %p150
      $region50: #{qbwspp_forward.1} parent=47 // pred_check_branch
        %5711 = sbr.rel (%p5709) target = $region52
      $region51: #{qbwspp_forward.1} parent=47 // pred_region
        %p5712 = scmp.lt.s32.totalorder %s17, 1
        %s5713 = scalar_select %p5712, %s17, 1
        %s5714 = smul.addr %s5713, 32
        %s5715 = smul.addr %s5714, 8
        %s5716 = scalar_lea.vmem %s5, %s5715
      $region52: #{qbwspp_forward.1} parent=47 // pred_fallthru
        _
    $region48: #{qbwspp_forward.1} parent=5 // pred_fallthru
      _
  $region6: #{qbwspp_forward.1} parent=0 // loop_footer
    %s15 = sadd.s32 1, %s11
  $region7: #{qbwspp_forward.1} parent=0 // loop_footer_branch
    %10 = sbr.rel target = $region3
  $region8: #{qbwspp_forward.1} parent=0 // loop_exit
    _

</llo_original>
